<compile_context>
chip_gen: v5e
topology: v5e:2x2
jax: 0.10.0
libtpu: 0.0.40
codegen_flags: <defaults>
</compile_context>

<pallas_src>
import functools

import numpy as np
import jax
import jax.numpy as jnp
from jax.experimental import pallas as pl
from jax.experimental.pallas import tpu as pltpu

# ---------------- wrapper constants (from MOSSFORMER_SE.__init__) ----------------
COMPRESS_FACTOR = 0.3
CF_INV = float(0.5 / COMPRESS_FACTOR) - 0.5          # compress_factor_inv
CF_SQRT = float(COMPRESS_FACTOR * 0.5)               # compress_factor_sqrt
INV_INT16 = float(1.0 / 32768.0)
PRELU_SLOPE = 0.25                                   # PyTorch PReLU default init

# ---------------- small synthetic hyper-parameters (TPU-friendly sizes) ----------------
N_FFT = 32
HOP = 16
F_BINS = N_FFT // 2 + 1          # 17
N_SAMPLES = 2032                 # 127 hop-sized chunks (~127 ms @ 16 kHz)
NCHUNK = N_SAMPLES // HOP        # 127
T_FRAMES = 1 + NCHUNK            # 128 STFT frames -> nice sublane count
D_MODEL = 128                    # encoder width (lane-dense)
FFN_HID = 256
N_LAYERS = 2
EPS_POW = 1e-12

BIAS_LANES = max(D_MODEL, FFN_HID, 3 * F_BINS)       # 256  (width of the packed bias slab)
DEC_ROW = 1 + 4 * N_LAYERS                           # row of the decoder bias in the slab
N_BIAS_ROWS = DEC_ROW + 1


# ============================ fused Pallas kernel ============================

def _fused_kernel(frames_ref, abasis_ref, encw_ref, ffn1_ref, ffn2_ref,
                  decw_ref, synb_ref, bias_ref, iola_ref,
                  out_ref, cos_scr, sin_scr):
    f32, bf16 = jnp.float32, jnp.bfloat16

    def brow(r, n):
        # one packed bias/LN row, [1, n] f32 (r is a static Python int)
        return bias_ref[r][:, :n]

    # --- 1) int16 scale + utterance RMS norm.  Every audio sample appears exactly twice
    #        in the overlapping frame matrix (50% overlap, zero pads), so
    #        sum(frames^2) == 2 * sum(audio^2). ---
    a = frames_ref[...] * INV_INT16                               # [T, N_FFT]
    ss = jnp.sum(a * a, axis=1, keepdims=True)
    ss = jnp.sum(ss, axis=0, keepdims=True)                       # [1, 1]
    mean_sq = ss * (0.5 / N_SAMPLES) + 1e-6
    nf = jnp.sqrt(mean_sq)                                        # norm_factor
    a = a * jax.lax.rsqrt(mean_sq)                                # audio / norm_factor

    # --- 2) STFT: ONE bf16 MXU push (Hann window folded into the analysis basis) ---
    spec = jnp.dot(a.astype(bf16), abasis_ref[...],
                   preferred_element_type=f32)                    # [T, 2F] = re | im
    re = spec[:, :F_BINS]
    im = spec[:, F_BINS:]

    # --- 3) compressed magnitude + phase (one shared log; f32 on VPU/EUP) ---
    power = re * re + im * im + EPS_POW
    logp = jnp.log(power)
    mag = jnp.exp(CF_SQRT * logp)                                 # power ** compress_factor_sqrt
    inv_mag = jnp.exp((CF_SQRT - 0.5) * logp)                     # power**-0.5 * mag_compress
    cosp = re * inv_mag
    sinp = im * inv_mag
    cos_scr[...] = cosp                                           # stash: not needed again until
    sin_scr[...] = sinp                                           # after the block loop

    # --- 4) dense_encoder: one [T,3F] x [3F,D] push + PReLU ---
    x_in = jnp.concatenate([mag, cosp, sinp], axis=-1).astype(bf16)   # [T, 3F]
    x = jnp.dot(x_in, encw_ref[...], preferred_element_type=f32) + brow(0, D_MODEL)
    x = jnp.where(x >= 0.0, x, PRELU_SLOPE * x)

    # --- 5) n_layers blocks (LayerNorm + GELU FFN residual) ---
    # TODO(synk): real MossFormer gated-attention blocks are external; simplified here.
    for l in range(N_LAYERS):
        r = 1 + 4 * l
        mu = jnp.mean(x, axis=-1, keepdims=True)
        xc = x - mu
        var = jnp.mean(xc * xc, axis=-1, keepdims=True)
        h = xc * jax.lax.rsqrt(var + 1e-5) * brow(r, D_MODEL) + brow(r + 1, D_MODEL)
        h = jnp.dot(h.astype(bf16), ffn1_ref[l], preferred_element_type=f32) + brow(r + 2, FFN_HID)
        h = jax.nn.gelu(h, approximate=True)
        h = jnp.dot(h.astype(bf16), ffn2_ref[l], preferred_element_type=f32) + brow(r + 3, D_MODEL)
        x = x + h

    # --- 6) decoders: ONE [T,D] x [D,3F] push; mask|real|imag via static lane slices ---
    dec = (jnp.dot(x.astype(bf16), decw_ref[...], preferred_element_type=f32)
           + brow(DEC_ROW, 3 * F_BINS))                           # [T, 3F]
    mask = dec[:, :F_BINS]
    mask = jnp.where(mask >= 0.0, mask, PRELU_SLOPE * mask)       # PReLU on mask decoder only
    c_re = dec[:, F_BINS:2 * F_BINS]
    c_im = dec[:, 2 * F_BINS:]

    # --- 7) apply mask to phase, add complex residual, de-compress ---
    cosp = cos_scr[...]
    sinp = sin_scr[...]
    f_re = mask * cosp + c_re
    f_im = mask * sinp + c_im
    fac = jnp.exp(CF_INV * jnp.log(f_re * f_re + f_im * f_im + EPS_POW))
    f_re = f_re * fac
    f_im = f_im * fac

    # --- 8) iSTFT: ONE bf16 MXU push to [T, n_fft] frames, overlap-add via XLU sublane roll ---
    spec_out = jnp.concatenate([f_re, f_im], axis=-1).astype(bf16)     # [T, 2F]
    oframes = jnp.dot(spec_out, synb_ref[...], preferred_element_type=f32)  # [T, N_FFT]
    ftl = oframes[:, :HOP]                                        # frame left halves
    ftr = oframes[:, HOP:]                                        # frame right halves
    # output chunk c = left half of frame c+1 + right half of frame c
    # (row T-1 wraps to ftl[0]; that row is the discarded pad chunk)
    wave = pltpu.roll(ftl, T_FRAMES - 1, 0) + ftr
    wave = wave * iola_ref[...]                                   # 1 / window-power OLA norm

    # --- 9) de-normalize, clamp, scale to int16 range ---
    out_ref[...] = jnp.clip(wave * nf, -1.0, 1.0) * 32767.0


# ============================ parameters ============================

def init_params(key):
    """Returns the dict of (consolidated) weight/constant inputs for the kernel."""
    keys = jax.random.split(key, 8)
    kit = iter(keys)

    def w(shape, fan_in):
        return (jax.random.normal(next(kit), shape, jnp.float32)
                / np.sqrt(fan_in)).astype(jnp.bfloat16)           # MXU operands in bf16

    # ---- STFT / iSTFT constants (periodic Hann window, onesided real DFT) ----
    n = np.arange(N_FFT)
    f = np.arange(F_BINS)
    window = 0.5 * (1.0 - np.cos(2.0 * np.pi * n / N_FFT))        # periodic Hann
    ang = 2.0 * np.pi * np.outer(n, f) / N_FFT                    # [n_fft, F]
    a_cos = window[:, None] * np.cos(ang)                         # analysis, window folded in
    a_sin = -window[:, None] * np.sin(ang)
    abasis = np.concatenate([a_cos, a_sin], axis=1)               # [n_fft, 2F]

    wgt = np.ones(F_BINS)
    wgt[1:-1] = 2.0                                               # onesided spectrum weights
    s_cos = (wgt[:, None] * np.cos(ang).T) * window[None, :] / N_FFT
    s_sin = (-wgt[:, None] * np.sin(ang).T) * window[None, :] / N_FFT
    synb = np.concatenate([s_cos, s_sin], axis=0)                 # [2F, n_fft]

    # overlap-add window-power normalization (reciprocal), per output chunk
    idx = np.arange(T_FRAMES)[:, None] * HOP + np.arange(N_FFT)[None, :]
    den = np.zeros(N_SAMPLES + N_FFT)
    np.add.at(den, idx.reshape(-1), np.tile(window * window, T_FRAMES))
    den = np.maximum(den, 1e-8).reshape(T_FRAMES + 1, HOP)
    iola = np.ones((T_FRAMES, HOP), np.float64)
    iola[:NCHUNK] = 1.0 / den[1:1 + NCHUNK]

    # packed bias / LayerNorm slab: row 0 = enc bias, per layer [gamma, beta, b1, b2],
    # last row = fused decoder bias.  One f32 input instead of ~14 tiny ones.
    bias = np.zeros((N_BIAS_ROWS, 1, BIAS_LANES), np.float32)
    for l in range(N_LAYERS):
        bias[1 + 4 * l, 0, :D_MODEL] = 1.0                        # LN gamma

    return dict(
        abasis=jnp.asarray(abasis, jnp.bfloat16),                 # [32, 34]
        encw=w((3 * F_BINS, D_MODEL), 3 * F_BINS),                # [51, 128] mag|cos|sin -> D
        ffn1=w((N_LAYERS, D_MODEL, FFN_HID), D_MODEL),            # [L, 128, 256]
        ffn2=w((N_LAYERS, FFN_HID, D_MODEL), FFN_HID),            # [L, 256, 128]
        decw=w((D_MODEL, 3 * F_BINS), D_MODEL),                   # [128, 51] mask|creal|cimag
        synb=jnp.asarray(synb, jnp.bfloat16),                     # [34, 32]
        bias=jnp.asarray(bias, jnp.float32),                      # [10, 1, 256]
        iola=jnp.asarray(iola, jnp.float32),                      # [128, 16]
    )


# ============================ forward pass ============================

def mossformer_se_forward(audio, params):
    """audio: [B, N_SAMPLES] float32 (int16-scaled waveform). Returns [B, N_SAMPLES] int16."""
    B = audio.shape[0]
    # cheap layout prep (like the original chunking): overlapping frame matrix with the
    # 'constant' (zero) center pad of n_fft//2 folded in -> frame t = [chunk_{t-1}, chunk_t]
    chunks = audio.reshape(B, NCHUNK, HOP).astype(jnp.float32)
    zrow = jnp.zeros((B, 1, HOP), jnp.float32)
    frames = jnp.concatenate(
        [jnp.concatenate([zrow, chunks], axis=1),                 # left halves  (chunk t-1)
         jnp.concatenate([chunks, zrow], axis=1)],                # right halves (chunk t)
        axis=-1)                                                  # [B, T, n_fft]

    p = params
    weight_args = (p['abasis'], p['encw'], p['ffn1'], p['ffn2'],
                   p['decw'], p['synb'], p['bias'], p['iola'])

    def const_spec(a):
        nd = a.ndim
        return pl.BlockSpec(a.shape, lambda b, _n=nd: (0,) * _n)  # VMEM-resident across grid

    out = pl.pallas_call(
        _fused_kernel,
        out_shape=jax.ShapeDtypeStruct((B, T_FRAMES, HOP), jnp.float32),
        grid_spec=pltpu.PrefetchScalarGridSpec(
            num_scalar_prefetch=0,
            grid=(B,),
            in_specs=[pl.BlockSpec((None, T_FRAMES, N_FFT), lambda b: (b, 0, 0))]
                     + [const_spec(a) for a in weight_args],
            out_specs=pl.BlockSpec((None, T_FRAMES, HOP), lambda b: (b, 0, 0)),
            scratch_shapes=[pltpu.VMEM((T_FRAMES, F_BINS), jnp.float32),   # cos-phase stash
                            pltpu.VMEM((T_FRAMES, F_BINS), jnp.float32)],  # sin-phase stash
        ),
        compiler_params=pltpu.CompilerParams(
            dimension_semantics=("parallel",)),
    )(frames, *weight_args)

    wave = out.reshape(B, T_FRAMES * HOP)[:, :N_SAMPLES]
    return wave.astype(jnp.int16)                                 # truncating cast, like .to(int16)


# ============================ main ============================

if __name__ == "__main__":
    B = 4
    root = jax.random.PRNGKey(0)
    kp, ka = jax.random.split(root)
    params = init_params(kp)

    # int16-scaled waveforms, as in the reference (audio * 1/32768 brings them into [-1,1])
    audio = jax.random.uniform(ka, (B, N_SAMPLES), jnp.float32,
                               minval=-8000.0, maxval=8000.0)

    fwd = jax.jit(functools.partial(mossformer_se_forward, params=params))
    out = jax.block_until_ready(fwd(audio))

    assert out.shape == (B, N_SAMPLES), out.shape
    assert out.dtype == jnp.int16, out.dtype
    assert bool(jnp.all(jnp.isfinite(out.astype(jnp.float32))))
    print("KERNEL_OK")
</pallas_src>

<mosaic_0001>
module attributes {stable_mosaic.version = 11 : i64} {
  func.func @_fused_kernel(%arg0: i32, %arg1: memref<1x128x32xf32, #tpu.memory_space<vmem>>, %arg2: memref<32x34xbf16, #tpu.memory_space<vmem>>, %arg3: memref<51x128xbf16, #tpu.memory_space<vmem>>, %arg4: memref<2x128x256xbf16, #tpu.memory_space<vmem>>, %arg5: memref<2x256x128xbf16, #tpu.memory_space<vmem>>, %arg6: memref<128x51xbf16, #tpu.memory_space<vmem>>, %arg7: memref<34x32xbf16, #tpu.memory_space<vmem>>, %arg8: memref<10x1x256xf32, #tpu.memory_space<vmem>>, %arg9: memref<128x16xf32, #tpu.memory_space<vmem>>, %arg10: memref<1x128x16xf32, #tpu.memory_space<vmem>>, %arg11: memref<128x17xf32, #tpu.memory_space<vmem>>, %arg12: memref<128x17xf32, #tpu.memory_space<vmem>>) attributes {dimension_semantics = [#tpu.dimension_semantics<parallel>], iteration_bounds = array<i64: 4>, scalar_prefetch = 0 : i64, scratch_operands = 2 : i64, tpu.core_type = #tpu.core_type<tc>, window_params = [{transform_indices = @transform_0, window_bounds = array<i64: 1, 128, 32>}, {pipeline_mode = #tpu.pipeline_mode<synchronous>, transform_indices = @transform_1, window_bounds = array<i64: 32, 34>}, {pipeline_mode = #tpu.pipeline_mode<synchronous>, transform_indices = @transform_2, window_bounds = array<i64: 51, 128>}, {pipeline_mode = #tpu.pipeline_mode<synchronous>, transform_indices = @transform_3, window_bounds = array<i64: 2, 128, 256>}, {pipeline_mode = #tpu.pipeline_mode<synchronous>, transform_indices = @transform_4, window_bounds = array<i64: 2, 256, 128>}, {pipeline_mode = #tpu.pipeline_mode<synchronous>, transform_indices = @transform_5, window_bounds = array<i64: 128, 51>}, {pipeline_mode = #tpu.pipeline_mode<synchronous>, transform_indices = @transform_6, window_bounds = array<i64: 34, 32>}, {pipeline_mode = #tpu.pipeline_mode<synchronous>, transform_indices = @transform_7, window_bounds = array<i64: 10, 1, 256>}, {pipeline_mode = #tpu.pipeline_mode<synchronous>, transform_indices = @transform_8, window_bounds = array<i64: 128, 16>}, {transform_indices = @transform_9, window_bounds = array<i64: 1, 128, 16>}]} {
    %c0 = arith.constant 0 : index
    %c0_0 = arith.constant 0 : index
    %c0_1 = arith.constant 0 : index
    %0 = vector.load %arg1[%c0, %c0_0, %c0_1] : memref<1x128x32xf32, #tpu.memory_space<vmem>>, vector<1x128x32xf32>
    %1 = vector.shape_cast %0 : vector<1x128x32xf32> to vector<128x32xf32>
    %cst = arith.constant 3.05175781E-5 : f32
    %2 = vector.broadcast %cst : f32 to vector<128x32xf32>
    %3 = arith.mulf %1, %2 : vector<128x32xf32>
    %4 = arith.mulf %3, %3 : vector<128x32xf32>
    %cst_2 = arith.constant dense<0.000000e+00> : vector<128xf32>
    %5 = vector.multi_reduction <add>, %4, %cst_2 [1] : vector<128x32xf32> to vector<128xf32>
    %6 = vector.shape_cast %5 : vector<128xf32> to vector<128x1xf32>
    %cst_3 = arith.constant dense<0.000000e+00> : vector<1xf32>
    %7 = vector.multi_reduction <add>, %6, %cst_3 [0] : vector<128x1xf32> to vector<1xf32>
    %8 = vector.shape_cast %7 : vector<1xf32> to vector<1x1xf32>
    %cst_4 = arith.constant 2.460630e-04 : f32
    %9 = vector.broadcast %cst_4 : f32 to vector<1x1xf32>
    %10 = arith.mulf %8, %9 : vector<1x1xf32>
    %cst_5 = arith.constant 9.99999997E-7 : f32
    %11 = vector.broadcast %cst_5 : f32 to vector<1x1xf32>
    %12 = arith.addf %10, %11 : vector<1x1xf32>
    %13 = math.sqrt %12 : vector<1x1xf32>
    %14 = math.rsqrt %12 : vector<1x1xf32>
    %15 = vector.broadcast %14 : vector<1x1xf32> to vector<128x32xf32>
    %16 = arith.mulf %3, %15 : vector<128x32xf32>
    %17 = arith.truncf %16 : vector<128x32xf32> to vector<128x32xbf16>
    %c0_6 = arith.constant 0 : index
    %c0_7 = arith.constant 0 : index
    %18 = vector.load %arg2[%c0_6, %c0_7] : memref<32x34xbf16, #tpu.memory_space<vmem>>, vector<32x34xbf16>
    %cst_8 = arith.constant dense<0.000000e+00> : vector<128x34xf32>
    %19 = tpu.matmul %17, %18, %cst_8 {dimension_numbers = #tpu.dot_dimension_numbers<[1], [0], [0], [1], [0, 0, 1, 1], [], []>} : vector<128x32xbf16>, vector<32x34xbf16>, vector<128x34xf32> -> vector<128x34xf32>
    %20 = vector.extract_strided_slice %19 {offsets = [0, 0], sizes = [128, 17], strides = [1, 1]} : vector<128x34xf32> to vector<128x17xf32>
    %21 = vector.extract_strided_slice %19 {offsets = [0, 17], sizes = [128, 17], strides = [1, 1]} : vector<128x34xf32> to vector<128x17xf32>
    %22 = arith.mulf %20, %20 : vector<128x17xf32>
    %23 = arith.mulf %21, %21 : vector<128x17xf32>
    %24 = arith.addf %22, %23 : vector<128x17xf32>
    %cst_9 = arith.constant 9.99999996E-13 : f32
    %25 = vector.broadcast %cst_9 : f32 to vector<128x17xf32>
    %26 = arith.addf %24, %25 : vector<128x17xf32>
    %27 = math.log %26 : vector<128x17xf32>
    %cst_10 = arith.constant 1.500000e-01 : f32
    %28 = vector.broadcast %cst_10 : f32 to vector<128x17xf32>
    %29 = arith.mulf %28, %27 : vector<128x17xf32>
    %30 = math.exp %29 : vector<128x17xf32>
    %cst_11 = arith.constant -3.500000e-01 : f32
    %31 = vector.broadcast %cst_11 : f32 to vector<128x17xf32>
    %32 = arith.mulf %31, %27 : vector<128x17xf32>
    %33 = math.exp %32 : vector<128x17xf32>
    %34 = arith.mulf %20, %33 : vector<128x17xf32>
    %35 = arith.mulf %21, %33 : vector<128x17xf32>
    %c0_12 = arith.constant 0 : index
    %c0_13 = arith.constant 0 : index
    %36 = vector.load %arg11[%c0_12, %c0_13] : memref<128x17xf32, #tpu.memory_space<vmem>>, vector<128x17xf32>
    tpu.vector_store %arg11[%c0_12, %c0_13], %34 {strides = array<i32>} : memref<128x17xf32, #tpu.memory_space<vmem>>, vector<128x17xf32>,
    %c0_14 = arith.constant 0 : index
    %c0_15 = arith.constant 0 : index
    %37 = vector.load %arg12[%c0_14, %c0_15] : memref<128x17xf32, #tpu.memory_space<vmem>>, vector<128x17xf32>
    tpu.vector_store %arg12[%c0_14, %c0_15], %35 {strides = array<i32>} : memref<128x17xf32, #tpu.memory_space<vmem>>, vector<128x17xf32>,
    %38 = tpu.concatenate %30, %34, %35 in 1 : vector<128x17xf32>, vector<128x17xf32>, vector<128x17xf32> -> vector<128x51xf32>
    %39 = arith.truncf %38 : vector<128x51xf32> to vector<128x51xbf16>
    %c0_16 = arith.constant 0 : index
    %c0_17 = arith.constant 0 : index
    %40 = vector.load %arg3[%c0_16, %c0_17] : memref<51x128xbf16, #tpu.memory_space<vmem>>, vector<51x128xbf16>
    %cst_18 = arith.constant dense<0.000000e+00> : vector<128x128xf32>
    %41 = tpu.matmul %39, %40, %cst_18 {dimension_numbers = #tpu.dot_dimension_numbers<[1], [0], [0], [1], [0, 0, 1, 1], [], []>} : vector<128x51xbf16>, vector<51x128xbf16>, vector<128x128xf32> -> vector<128x128xf32>
    %c0_19 = arith.constant 0 : index
    %c0_20 = arith.constant 0 : index
    %c0_21 = arith.constant 0 : index
    %42 = vector.load %arg8[%c0_19, %c0_20, %c0_21] : memref<10x1x256xf32, #tpu.memory_space<vmem>>, vector<1x1x256xf32>
    %43 = vector.shape_cast %42 : vector<1x1x256xf32> to vector<1x256xf32>
    %44 = vector.extract_strided_slice %43 {offsets = [0, 0], sizes = [1, 128], strides = [1, 1]} : vector<1x256xf32> to vector<1x128xf32>
    %45 = vector.broadcast %44 : vector<1x128xf32> to vector<128x128xf32>
    %46 = arith.addf %41, %45 : vector<128x128xf32>
    %cst_22 = arith.constant 0.000000e+00 : f32
    %47 = vector.broadcast %cst_22 : f32 to vector<128x128xf32>
    %48 = arith.cmpf oge, %46, %47 : vector<128x128xf32>
    %cst_23 = arith.constant 2.500000e-01 : f32
    %49 = vector.broadcast %cst_23 : f32 to vector<128x128xf32>
    %50 = arith.mulf %49, %46 : vector<128x128xf32>
    %51 = arith.select %48, %46, %50 : vector<128x128xi1>, vector<128x128xf32>
    %cst_24 = arith.constant dense<0.000000e+00> : vector<128xf32>
    %52 = vector.multi_reduction <add>, %51, %cst_24 [1] : vector<128x128xf32> to vector<128xf32>
    %53 = vector.shape_cast %52 : vector<128xf32> to vector<128x1xf32>
    %cst_25 = arith.constant 1.280000e+02 : f32
    %54 = vector.broadcast %cst_25 : f32 to vector<128x1xf32>
    %55 = arith.divf %53, %54 : vector<128x1xf32>
    %56 = vector.broadcast %55 : vector<128x1xf32> to vector<128x128xf32>
    %57 = arith.subf %51, %56 : vector<128x128xf32>
    %58 = arith.mulf %57, %57 : vector<128x128xf32>
    %cst_26 = arith.constant dense<0.000000e+00> : vector<128xf32>
    %59 = vector.multi_reduction <add>, %58, %cst_26 [1] : vector<128x128xf32> to vector<128xf32>
    %60 = vector.shape_cast %59 : vector<128xf32> to vector<128x1xf32>
    %cst_27 = arith.constant 1.280000e+02 : f32
    %61 = vector.broadcast %cst_27 : f32 to vector<128x1xf32>
    %62 = arith.divf %60, %61 : vector<128x1xf32>
    %cst_28 = arith.constant 9.99999974E-6 : f32
    %63 = vector.broadcast %cst_28 : f32 to vector<128x1xf32>
    %64 = arith.addf %62, %63 : vector<128x1xf32>
    %65 = math.rsqrt %64 : vector<128x1xf32>
    %66 = vector.broadcast %65 : vector<128x1xf32> to vector<128x128xf32>
    %67 = arith.mulf %57, %66 : vector<128x128xf32>
    %c1 = arith.constant 1 : index
    %c0_29 = arith.constant 0 : index
    %c0_30 = arith.constant 0 : index
    %68 = vector.load %arg8[%c1, %c0_29, %c0_30] : memref<10x1x256xf32, #tpu.memory_space<vmem>>, vector<1x1x256xf32>
    %69 = vector.shape_cast %68 : vector<1x1x256xf32> to vector<1x256xf32>
    %70 = vector.extract_strided_slice %69 {offsets = [0, 0], sizes = [1, 128], strides = [1, 1]} : vector<1x256xf32> to vector<1x128xf32>
    %71 = vector.broadcast %70 : vector<1x128xf32> to vector<128x128xf32>
    %72 = arith.mulf %67, %71 : vector<128x128xf32>
    %c2 = arith.constant 2 : index
    %c0_31 = arith.constant 0 : index
    %c0_32 = arith.constant 0 : index
    %73 = vector.load %arg8[%c2, %c0_31, %c0_32] : memref<10x1x256xf32, #tpu.memory_space<vmem>>, vector<1x1x256xf32>
    %74 = vector.shape_cast %73 : vector<1x1x256xf32> to vector<1x256xf32>
    %75 = vector.extract_strided_slice %74 {offsets = [0, 0], sizes = [1, 128], strides = [1, 1]} : vector<1x256xf32> to vector<1x128xf32>
    %76 = vector.broadcast %75 : vector<1x128xf32> to vector<128x128xf32>
    %77 = arith.addf %72, %76 : vector<128x128xf32>
    %78 = arith.truncf %77 : vector<128x128xf32> to vector<128x128xbf16>
    %c0_33 = arith.constant 0 : index
    %c0_34 = arith.constant 0 : index
    %c0_35 = arith.constant 0 : index
    %79 = vector.load %arg4[%c0_33, %c0_34, %c0_35] : memref<2x128x256xbf16, #tpu.memory_space<vmem>>, vector<1x128x256xbf16>
    %80 = vector.shape_cast %79 : vector<1x128x256xbf16> to vector<128x256xbf16>
    %cst_36 = arith.constant dense<0.000000e+00> : vector<128x256xf32>
    %81 = tpu.matmul %78, %80, %cst_36 {dimension_numbers = #tpu.dot_dimension_numbers<[1], [0], [0], [1], [0, 0, 1, 1], [], []>} : vector<128x128xbf16>, vector<128x256xbf16>, vector<128x256xf32> -> vector<128x256xf32>
    %c3 = arith.constant 3 : index
    %c0_37 = arith.constant 0 : index
    %c0_38 = arith.constant 0 : index
    %82 = vector.load %arg8[%c3, %c0_37, %c0_38] : memref<10x1x256xf32, #tpu.memory_space<vmem>>, vector<1x1x256xf32>
    %83 = vector.shape_cast %82 : vector<1x1x256xf32> to vector<1x256xf32>
    %84 = vector.broadcast %83 : vector<1x256xf32> to vector<128x256xf32>
    %85 = arith.addf %81, %84 : vector<128x256xf32>
    %86 = arith.mulf %85, %85 : vector<128x256xf32>
    %87 = arith.mulf %85, %86 : vector<128x256xf32>
    %cst_39 = arith.constant 4.471500e-02 : f32
    %88 = vector.broadcast %cst_39 : f32 to vector<128x256xf32>
    %89 = arith.mulf %88, %87 : vector<128x256xf32>
    %90 = arith.addf %85, %89 : vector<128x256xf32>
    %cst_40 = arith.constant 0.797884583 : f32
    %91 = vector.broadcast %cst_40 : f32 to vector<128x256xf32>
    %92 = arith.mulf %91, %90 : vector<128x256xf32>
    %93 = math.tanh %92 : vector<128x256xf32>
    %cst_41 = arith.constant 1.000000e+00 : f32
    %94 = vector.broadcast %cst_41 : f32 to vector<128x256xf32>
    %95 = arith.addf %94, %93 : vector<128x256xf32>
    %cst_42 = arith.constant 5.000000e-01 : f32
    %96 = vector.broadcast %cst_42 : f32 to vector<128x256xf32>
    %97 = arith.mulf %96, %95 : vector<128x256xf32>
    %98 = arith.mulf %85, %97 : vector<128x256xf32>
    %99 = arith.truncf %98 : vector<128x256xf32> to vector<128x256xbf16>
    %c0_43 = arith.constant 0 : index
    %c0_44 = arith.constant 0 : index
    %c0_45 = arith.constant 0 : index
    %100 = vector.load %arg5[%c0_43, %c0_44, %c0_45] : memref<2x256x128xbf16, #tpu.memory_space<vmem>>, vector<1x256x128xbf16>
    %101 = vector.shape_cast %100 : vector<1x256x128xbf16> to vector<256x128xbf16>
    %cst_46 = arith.constant dense<0.000000e+00> : vector<128x128xf32>
    %102 = tpu.matmul %99, %101, %cst_46 {dimension_numbers = #tpu.dot_dimension_numbers<[1], [0], [0], [1], [0, 0, 1, 1], [], []>} : vector<128x256xbf16>, vector<256x128xbf16>, vector<128x128xf32> -> vector<128x128xf32>
    %c4 = arith.constant 4 : index
    %c0_47 = arith.constant 0 : index
    %c0_48 = arith.constant 0 : index
    %103 = vector.load %arg8[%c4, %c0_47, %c0_48] : memref<10x1x256xf32, #tpu.memory_space<vmem>>, vector<1x1x256xf32>
    %104 = vector.shape_cast %103 : vector<1x1x256xf32> to vector<1x256xf32>
    %105 = vector.extract_strided_slice %104 {offsets = [0, 0], sizes = [1, 128], strides = [1, 1]} : vector<1x256xf32> to vector<1x128xf32>
    %106 = vector.broadcast %105 : vector<1x128xf32> to vector<128x128xf32>
    %107 = arith.addf %102, %106 : vector<128x128xf32>
    %108 = arith.addf %51, %107 : vector<128x128xf32>
    %cst_49 = arith.constant dense<0.000000e+00> : vector<128xf32>
    %109 = vector.multi_reduction <add>, %108, %cst_49 [1] : vector<128x128xf32> to vector<128xf32>
    %110 = vector.shape_cast %109 : vector<128xf32> to vector<128x1xf32>
    %cst_50 = arith.constant 1.280000e+02 : f32
    %111 = vector.broadcast %cst_50 : f32 to vector<128x1xf32>
    %112 = arith.divf %110, %111 : vector<128x1xf32>
    %113 = vector.broadcast %112 : vector<128x1xf32> to vector<128x128xf32>
    %114 = arith.subf %108, %113 : vector<128x128xf32>
    %115 = arith.mulf %114, %114 : vector<128x128xf32>
    %cst_51 = arith.constant dense<0.000000e+00> : vector<128xf32>
    %116 = vector.multi_reduction <add>, %115, %cst_51 [1] : vector<128x128xf32> to vector<128xf32>
    %117 = vector.shape_cast %116 : vector<128xf32> to vector<128x1xf32>
    %cst_52 = arith.constant 1.280000e+02 : f32
    %118 = vector.broadcast %cst_52 : f32 to vector<128x1xf32>
    %119 = arith.divf %117, %118 : vector<128x1xf32>
    %cst_53 = arith.constant 9.99999974E-6 : f32
    %120 = vector.broadcast %cst_53 : f32 to vector<128x1xf32>
    %121 = arith.addf %119, %120 : vector<128x1xf32>
    %122 = math.rsqrt %121 : vector<128x1xf32>
    %123 = vector.broadcast %122 : vector<128x1xf32> to vector<128x128xf32>
    %124 = arith.mulf %114, %123 : vector<128x128xf32>
    %c5 = arith.constant 5 : index
    %c0_54 = arith.constant 0 : index
    %c0_55 = arith.constant 0 : index
    %125 = vector.load %arg8[%c5, %c0_54, %c0_55] : memref<10x1x256xf32, #tpu.memory_space<vmem>>, vector<1x1x256xf32>
    %126 = vector.shape_cast %125 : vector<1x1x256xf32> to vector<1x256xf32>
    %127 = vector.extract_strided_slice %126 {offsets = [0, 0], sizes = [1, 128], strides = [1, 1]} : vector<1x256xf32> to vector<1x128xf32>
    %128 = vector.broadcast %127 : vector<1x128xf32> to vector<128x128xf32>
    %129 = arith.mulf %124, %128 : vector<128x128xf32>
    %c6 = arith.constant 6 : index
    %c0_56 = arith.constant 0 : index
    %c0_57 = arith.constant 0 : index
    %130 = vector.load %arg8[%c6, %c0_56, %c0_57] : memref<10x1x256xf32, #tpu.memory_space<vmem>>, vector<1x1x256xf32>
    %131 = vector.shape_cast %130 : vector<1x1x256xf32> to vector<1x256xf32>
    %132 = vector.extract_strided_slice %131 {offsets = [0, 0], sizes = [1, 128], strides = [1, 1]} : vector<1x256xf32> to vector<1x128xf32>
    %133 = vector.broadcast %132 : vector<1x128xf32> to vector<128x128xf32>
    %134 = arith.addf %129, %133 : vector<128x128xf32>
    %135 = arith.truncf %134 : vector<128x128xf32> to vector<128x128xbf16>
    %c1_58 = arith.constant 1 : index
    %c0_59 = arith.constant 0 : index
    %c0_60 = arith.constant 0 : index
    %136 = vector.load %arg4[%c1_58, %c0_59, %c0_60] : memref<2x128x256xbf16, #tpu.memory_space<vmem>>, vector<1x128x256xbf16>
    %137 = vector.shape_cast %136 : vector<1x128x256xbf16> to vector<128x256xbf16>
    %cst_61 = arith.constant dense<0.000000e+00> : vector<128x256xf32>
    %138 = tpu.matmul %135, %137, %cst_61 {dimension_numbers = #tpu.dot_dimension_numbers<[1], [0], [0], [1], [0, 0, 1, 1], [], []>} : vector<128x128xbf16>, vector<128x256xbf16>, vector<128x256xf32> -> vector<128x256xf32>
    %c7 = arith.constant 7 : index
    %c0_62 = arith.constant 0 : index
    %c0_63 = arith.constant 0 : index
    %139 = vector.load %arg8[%c7, %c0_62, %c0_63] : memref<10x1x256xf32, #tpu.memory_space<vmem>>, vector<1x1x256xf32>
    %140 = vector.shape_cast %139 : vector<1x1x256xf32> to vector<1x256xf32>
    %141 = vector.broadcast %140 : vector<1x256xf32> to vector<128x256xf32>
    %142 = arith.addf %138, %141 : vector<128x256xf32>
    %143 = arith.mulf %142, %142 : vector<128x256xf32>
    %144 = arith.mulf %142, %143 : vector<128x256xf32>
    %cst_64 = arith.constant 4.471500e-02 : f32
    %145 = vector.broadcast %cst_64 : f32 to vector<128x256xf32>
    %146 = arith.mulf %145, %144 : vector<128x256xf32>
    %147 = arith.addf %142, %146 : vector<128x256xf32>
    %cst_65 = arith.constant 0.797884583 : f32
    %148 = vector.broadcast %cst_65 : f32 to vector<128x256xf32>
    %149 = arith.mulf %148, %147 : vector<128x256xf32>
    %150 = math.tanh %149 : vector<128x256xf32>
    %cst_66 = arith.constant 1.000000e+00 : f32
    %151 = vector.broadcast %cst_66 : f32 to vector<128x256xf32>
    %152 = arith.addf %151, %150 : vector<128x256xf32>
    %cst_67 = arith.constant 5.000000e-01 : f32
    %153 = vector.broadcast %cst_67 : f32 to vector<128x256xf32>
    %154 = arith.mulf %153, %152 : vector<128x256xf32>
    %155 = arith.mulf %142, %154 : vector<128x256xf32>
    %156 = arith.truncf %155 : vector<128x256xf32> to vector<128x256xbf16>
    %c1_68 = arith.constant 1 : index
    %c0_69 = arith.constant 0 : index
    %c0_70 = arith.constant 0 : index
    %157 = vector.load %arg5[%c1_68, %c0_69, %c0_70] : memref<2x256x128xbf16, #tpu.memory_space<vmem>>, vector<1x256x128xbf16>
    %158 = vector.shape_cast %157 : vector<1x256x128xbf16> to vector<256x128xbf16>
    %cst_71 = arith.constant dense<0.000000e+00> : vector<128x128xf32>
    %159 = tpu.matmul %156, %158, %cst_71 {dimension_numbers = #tpu.dot_dimension_numbers<[1], [0], [0], [1], [0, 0, 1, 1], [], []>} : vector<128x256xbf16>, vector<256x128xbf16>, vector<128x128xf32> -> vector<128x128xf32>
    %c8 = arith.constant 8 : index
    %c0_72 = arith.constant 0 : index
    %c0_73 = arith.constant 0 : index
    %160 = vector.load %arg8[%c8, %c0_72, %c0_73] : memref<10x1x256xf32, #tpu.memory_space<vmem>>, vector<1x1x256xf32>
    %161 = vector.shape_cast %160 : vector<1x1x256xf32> to vector<1x256xf32>
    %162 = vector.extract_strided_slice %161 {offsets = [0, 0], sizes = [1, 128], strides = [1, 1]} : vector<1x256xf32> to vector<1x128xf32>
    %163 = vector.broadcast %162 : vector<1x128xf32> to vector<128x128xf32>
    %164 = arith.addf %159, %163 : vector<128x128xf32>
    %165 = arith.addf %108, %164 : vector<128x128xf32>
    %166 = arith.truncf %165 : vector<128x128xf32> to vector<128x128xbf16>
    %c0_74 = arith.constant 0 : index
    %c0_75 = arith.constant 0 : index
    %167 = vector.load %arg6[%c0_74, %c0_75] : memref<128x51xbf16, #tpu.memory_space<vmem>>, vector<128x51xbf16>
    %cst_76 = arith.constant dense<0.000000e+00> : vector<128x51xf32>
    %168 = tpu.matmul %166, %167, %cst_76 {dimension_numbers = #tpu.dot_dimension_numbers<[1], [0], [0], [1], [0, 0, 1, 1], [], []>} : vector<128x128xbf16>, vector<128x51xbf16>, vector<128x51xf32> -> vector<128x51xf32>
    %c9 = arith.constant 9 : index
    %c0_77 = arith.constant 0 : index
    %c0_78 = arith.constant 0 : index
    %169 = vector.load %arg8[%c9, %c0_77, %c0_78] : memref<10x1x256xf32, #tpu.memory_space<vmem>>, vector<1x1x256xf32>
    %170 = vector.shape_cast %169 : vector<1x1x256xf32> to vector<1x256xf32>
    %171 = vector.extract_strided_slice %170 {offsets = [0, 0], sizes = [1, 51], strides = [1, 1]} : vector<1x256xf32> to vector<1x51xf32>
    %172 = vector.broadcast %171 : vector<1x51xf32> to vector<128x51xf32>
    %173 = arith.addf %168, %172 : vector<128x51xf32>
    %174 = vector.extract_strided_slice %173 {offsets = [0, 0], sizes = [128, 17], strides = [1, 1]} : vector<128x51xf32> to vector<128x17xf32>
    %cst_79 = arith.constant 0.000000e+00 : f32
    %175 = vector.broadcast %cst_79 : f32 to vector<128x17xf32>
    %176 = arith.cmpf oge, %174, %175 : vector<128x17xf32>
    %cst_80 = arith.constant 2.500000e-01 : f32
    %177 = vector.broadcast %cst_80 : f32 to vector<128x17xf32>
    %178 = arith.mulf %177, %174 : vector<128x17xf32>
    %179 = arith.select %176, %174, %178 : vector<128x17xi1>, vector<128x17xf32>
    %180 = vector.extract_strided_slice %173 {offsets = [0, 17], sizes = [128, 17], strides = [1, 1]} : vector<128x51xf32> to vector<128x17xf32>
    %181 = vector.extract_strided_slice %173 {offsets = [0, 34], sizes = [128, 17], strides = [1, 1]} : vector<128x51xf32> to vector<128x17xf32>
    %c0_81 = arith.constant 0 : index
    %c0_82 = arith.constant 0 : index
    %182 = vector.load %arg11[%c0_81, %c0_82] : memref<128x17xf32, #tpu.memory_space<vmem>>, vector<128x17xf32>
    %c0_83 = arith.constant 0 : index
    %c0_84 = arith.constant 0 : index
    %183 = vector.load %arg12[%c0_83, %c0_84] : memref<128x17xf32, #tpu.memory_space<vmem>>, vector<128x17xf32>
    %184 = arith.mulf %179, %182 : vector<128x17xf32>
    %185 = arith.addf %184, %180 : vector<128x17xf32>
    %186 = arith.mulf %179, %183 : vector<128x17xf32>
    %187 = arith.addf %186, %181 : vector<128x17xf32>
    %188 = arith.mulf %185, %185 : vector<128x17xf32>
    %189 = arith.mulf %187, %187 : vector<128x17xf32>
    %190 = arith.addf %188, %189 : vector<128x17xf32>
    %cst_85 = arith.constant 9.99999996E-13 : f32
    %191 = vector.broadcast %cst_85 : f32 to vector<128x17xf32>
    %192 = arith.addf %190, %191 : vector<128x17xf32>
    %193 = math.log %192 : vector<128x17xf32>
    %cst_86 = arith.constant 1.16666663 : f32
    %194 = vector.broadcast %cst_86 : f32 to vector<128x17xf32>
    %195 = arith.mulf %194, %193 : vector<128x17xf32>
    %196 = math.exp %195 : vector<128x17xf32>
    %197 = arith.mulf %185, %196 : vector<128x17xf32>
    %198 = arith.mulf %187, %196 : vector<128x17xf32>
    %199 = tpu.concatenate %197, %198 in 1 : vector<128x17xf32>, vector<128x17xf32> -> vector<128x34xf32>
    %200 = arith.truncf %199 : vector<128x34xf32> to vector<128x34xbf16>
    %c0_87 = arith.constant 0 : index
    %c0_88 = arith.constant 0 : index
    %201 = vector.load %arg7[%c0_87, %c0_88] : memref<34x32xbf16, #tpu.memory_space<vmem>>, vector<34x32xbf16>
    %cst_89 = arith.constant dense<0.000000e+00> : vector<128x32xf32>
    %202 = tpu.matmul %200, %201, %cst_89 {dimension_numbers = #tpu.dot_dimension_numbers<[1], [0], [0], [1], [0, 0, 1, 1], [], []>} : vector<128x34xbf16>, vector<34x32xbf16>, vector<128x32xf32> -> vector<128x32xf32>
    %203 = vector.extract_strided_slice %202 {offsets = [0, 0], sizes = [128, 16], strides = [1, 1]} : vector<128x32xf32> to vector<128x16xf32>
    %204 = vector.extract_strided_slice %202 {offsets = [0, 16], sizes = [128, 16], strides = [1, 1]} : vector<128x32xf32> to vector<128x16xf32>
    %c127_i32 = arith.constant 127 : i32
    %205 = tpu.dynamic_rotate %203 by %c127_i32 dim 0 : vector<128x16xf32>, i32 -> vector<128x16xf32>
    %206 = arith.addf %205, %204 : vector<128x16xf32>
    %c0_90 = arith.constant 0 : index
    %c0_91 = arith.constant 0 : index
    %207 = vector.load %arg9[%c0_90, %c0_91] : memref<128x16xf32, #tpu.memory_space<vmem>>, vector<128x16xf32>
    %208 = arith.mulf %206, %207 : vector<128x16xf32>
    %209 = vector.broadcast %13 : vector<1x1xf32> to vector<128x16xf32>
    %210 = arith.mulf %208, %209 : vector<128x16xf32>
    %cst_92 = arith.constant -1.000000e+00 : f32
    %cst_93 = arith.constant 1.000000e+00 : f32
    %211 = vector.broadcast %cst_92 : f32 to vector<128x16xf32>
    %212 = arith.maximumf %211, %210 : vector<128x16xf32>
    %213 = vector.broadcast %cst_93 : f32 to vector<128x16xf32>
    %214 = arith.minimumf %213, %212 : vector<128x16xf32>
    %cst_94 = arith.constant 3.276700e+04 : f32
    %215 = vector.broadcast %cst_94 : f32 to vector<128x16xf32>
    %216 = arith.mulf %214, %215 : vector<128x16xf32>
    %c0_95 = arith.constant 0 : index
    %c0_96 = arith.constant 0 : index
    %c0_97 = arith.constant 0 : index
    %217 = vector.load %arg10[%c0_95, %c0_96, %c0_97] : memref<1x128x16xf32, #tpu.memory_space<vmem>>, vector<1x128x16xf32>
    %218 = vector.shape_cast %217 : vector<1x128x16xf32> to vector<128x16xf32>
    %219 = vector.shape_cast %216 : vector<128x16xf32> to vector<1x128x16xf32>
    tpu.vector_store %arg10[%c0_95, %c0_96, %c0_97], %219 {strides = array<i32>} : memref<1x128x16xf32, #tpu.memory_space<vmem>>, vector<1x128x16xf32>,
    return
  }
  func.func @transform_0(%arg0: i32) -> (i32, i32, i32) {
    %c0_i32 = arith.constant 0 : i32
    %c0_i32_0 = arith.constant 0 : i32
    %c0_i32_1 = arith.constant 0 : i32
    return %arg0, %c0_i32, %c0_i32_0 : i32, i32, i32
  }
  func.func @transform_1(%arg0: i32) -> (i32, i32) {
    %c0_i32 = arith.constant 0 : i32
    %c0_i32_0 = arith.constant 0 : i32
    %c0_i32_1 = arith.constant 0 : i32
    return %c0_i32, %c0_i32_0 : i32, i32
  }
  func.func @transform_2(%arg0: i32) -> (i32, i32) {
    %c0_i32 = arith.constant 0 : i32
    %c0_i32_0 = arith.constant 0 : i32
    %c0_i32_1 = arith.constant 0 : i32
    return %c0_i32, %c0_i32_0 : i32, i32
  }
  func.func @transform_3(%arg0: i32) -> (i32, i32, i32) {
    %c0_i32 = arith.constant 0 : i32
    %c0_i32_0 = arith.constant 0 : i32
    %c0_i32_1 = arith.constant 0 : i32
    %c0_i32_2 = arith.constant 0 : i32
    return %c0_i32, %c0_i32_0, %c0_i32_1 : i32, i32, i32
  }
  func.func @transform_4(%arg0: i32) -> (i32, i32, i32) {
    %c0_i32 = arith.constant 0 : i32
    %c0_i32_0 = arith.constant 0 : i32
    %c0_i32_1 = arith.constant 0 : i32
    %c0_i32_2 = arith.constant 0 : i32
    return %c0_i32, %c0_i32_0, %c0_i32_1 : i32, i32, i32
  }
  func.func @transform_5(%arg0: i32) -> (i32, i32) {
    %c0_i32 = arith.constant 0 : i32
    %c0_i32_0 = arith.constant 0 : i32
    %c0_i32_1 = arith.constant 0 : i32
    return %c0_i32, %c0_i32_0 : i32, i32
  }
  func.func @transform_6(%arg0: i32) -> (i32, i32) {
    %c0_i32 = arith.constant 0 : i32
    %c0_i32_0 = arith.constant 0 : i32
    %c0_i32_1 = arith.constant 0 : i32
    return %c0_i32, %c0_i32_0 : i32, i32
  }
  func.func @transform_7(%arg0: i32) -> (i32, i32, i32) {
    %c0_i32 = arith.constant 0 : i32
    %c0_i32_0 = arith.constant 0 : i32
    %c0_i32_1 = arith.constant 0 : i32
    %c0_i32_2 = arith.constant 0 : i32
    return %c0_i32, %c0_i32_0, %c0_i32_1 : i32, i32, i32
  }
  func.func @transform_8(%arg0: i32) -> (i32, i32) {
    %c0_i32 = arith.constant 0 : i32
    %c0_i32_0 = arith.constant 0 : i32
    %c0_i32_1 = arith.constant 0 : i32
    return %c0_i32, %c0_i32_0 : i32, i32
  }
  func.func @transform_9(%arg0: i32) -> (i32, i32, i32) {
    %c0_i32 = arith.constant 0 : i32
    %c0_i32_0 = arith.constant 0 : i32
    %c0_i32_1 = arith.constant 0 : i32
    return %arg0, %c0_i32, %c0_i32_0 : i32, i32, i32
  }
}

</mosaic_0001>

<llo_original>
// kernel: mossformer_se_forward.1
$region0: #{mossformer_se_forward.1}
  #allocation0 [shape = 'u32[]', space=smem, size = 0x4, offset = 0x4, fixed_abs, tag = 'smem constant byte address 0x4 - core index']
  #allocation1 [shape = 'u32[72,128]{1,0:T(1,128)}', space=vmem, size = 0x9000, scoped, tag = 'internal scratch']
  #allocation2 [shape = 'f32[128,17]{1,0:T(8,128)}', space=vmem, size = 0x10000, scoped, tag = 'scratch operand']
  #allocation3 [shape = 'f32[128,17]{1,0:T(8,128)}', space=vmem, size = 0x10000, scoped, tag = 'scratch operand']
  %s0 = inlined_call_operand.vmem [shape: f32[4,128,32], index: 0, kind: input, shape index: {}]
  %s1 = inlined_call_operand.vmem [shape: bf16[32,34], index: 1, kind: input, shape index: {}]
  %s2 = inlined_call_operand.vmem [shape: bf16[51,128], index: 2, kind: input, shape index: {}]
  %s3 = inlined_call_operand.vmem [shape: bf16[2,128,256], index: 3, kind: input, shape index: {}]
  %s4 = inlined_call_operand.vmem [shape: bf16[2,256,128], index: 4, kind: input, shape index: {}]
  %s5 = inlined_call_operand.vmem [shape: bf16[128,51], index: 5, kind: input, shape index: {}]
  %s6 = inlined_call_operand.vmem [shape: bf16[34,32], index: 6, kind: input, shape index: {}]
  %s7 = inlined_call_operand.vmem [shape: f32[10,1,256], index: 7, kind: input, shape index: {}]
  %s8 = inlined_call_operand.vmem [shape: f32[128,16], index: 8, kind: input, shape index: {}]
  %s9 = inlined_call_operand.vmem [shape: f32[4,128,16], index: 9, kind: output, shape index: {}]
  %s10 = sld [smem:[#allocation0]]
  $region69: #{mossformer_se_forward.1} parent=0
    _
  %s12 = ssub.s32 1, %s10
  %s13 = scalar_select 0, %s12, %s10
  loop: start=0, step=1, limit=6
  $region2: #{mossformer_se_forward.1} parent=0 // loop_pre_header
    _
  $region3: #{mossformer_se_forward.1} parent=0 // loop_header
    %s15 = sphi 0, %s19
    %p16 = scmp.ge.s32.totalorder %s15, 6
    %s25 = sphi 0, %s27
    %s28 = sphi 0, %s25
    %s29 = sphi 0, %s28
    %s45 = sphi 0, %s29
    %s49 = sphi 0, %s49
    %s51 = sphi 0, %s49
    %s52 = sphi 0, %s51
    %s66 = sphi 0, %s52
    %s70 = sphi 0, %s70
    %s72 = sphi 0, %s70
    %s73 = sphi 0, %s72
    %s87 = sphi 0, %s73
    %s91 = sphi 0, %s91
    %s93 = sphi 0, %s91
    %s94 = sphi 0, %s93
    %s108 = sphi 0, %s94
    %s112 = sphi 0, %s112
    %s114 = sphi 0, %s112
    %s115 = sphi 0, %s114
    %s129 = sphi 0, %s115
    %s133 = sphi 0, %s133
    %s135 = sphi 0, %s133
    %s136 = sphi 0, %s135
    %s150 = sphi 0, %s136
    %s154 = sphi 0, %s154
    %s156 = sphi 0, %s154
    %s157 = sphi 0, %s156
    %s171 = sphi 0, %s157
    %s175 = sphi 0, %s175
    %s177 = sphi 0, %s175
    %s178 = sphi 0, %s177
    %s192 = sphi 0, %s178
    %s196 = sphi 0, %s196
    %s198 = sphi 0, %s196
    %s199 = sphi 0, %s198
    %s213 = sphi 0, %s199
    %s219 = sphi 0, %s221
    %s222 = sphi 0, %s219
    %s223 = sphi 0, %s222
    %s239 = sphi 0, %s223
  $region4: #{mossformer_se_forward.1} parent=0 // loop_header_branch
    %18 = sbr.rel (%p16) target = $region8
  $region5: #{mossformer_se_forward.1} parent=0 // loop_body
    %s20 = ssub.s32 %s15, 1
    %s21 = ssub.s32 %s15, 2
    %s22 = sadd.s32 %s15, 1
    %s23 = ssub.s32 %s15, %s22
    %p24 = scmp.eq.s32.totalorder %s23, 0
    %s26 = sadd.s32 %s25, 1
    %s27 = scalar_select %p24, %s25, %s26
    %p30 = pneg %p24
    %p31 = scmp.eq.s32.totalorder %s15, 3
    %p32 = por %p30, %p31
    %p33 = scmp.ne.s32.totalorder %s25, %s28
    %p34 = scmp.eq.s32.totalorder %s15, 0
    %p35 = por %p33, %p34
    %p36 = scmp.ne.s32.totalorder %s25, %s28
    %p37 = scmp.eq.s32.totalorder %s20, 3
    %p38 = por %p36, %p37
    %p39 = scmp.ne.s32.totalorder %s28, %s29
    %p40 = scmp.eq.s32.totalorder %s20, 0
    %p41 = por %p39, %p40
    %p42 = scmp.ne.s32.totalorder %s28, %s29
    %p43 = scmp.eq.s32.totalorder %s21, 3
    %p44 = por %p42, %p43
    %p46 = scmp.ne.s32.totalorder %s29, %s45
    %p47 = scmp.eq.s32.totalorder %s21, 0
    %p48 = por %p46, %p47
    %s50 = sadd.s32 %s49, 1
    %p53 = scmp.eq.s32.totalorder %s15, 3
    %p54 = scmp.ne.s32.totalorder %s49, %s51
    %p55 = scmp.eq.s32.totalorder %s15, 0
    %p56 = por %p54, %p55
    %p57 = scmp.ne.s32.totalorder %s49, %s51
    %p58 = scmp.eq.s32.totalorder %s20, 3
    %p59 = por %p57, %p58
    %p60 = scmp.ne.s32.totalorder %s51, %s52
    %p61 = scmp.eq.s32.totalorder %s20, 0
    %p62 = por %p60, %p61
    %p63 = scmp.ne.s32.totalorder %s51, %s52
    %p64 = scmp.eq.s32.totalorder %s21, 3
    %p65 = por %p63, %p64
    %p67 = scmp.ne.s32.totalorder %s52, %s66
    %p68 = scmp.eq.s32.totalorder %s21, 0
    %p69 = por %p67, %p68
    %s71 = sadd.s32 %s70, 1
    %p74 = scmp.eq.s32.totalorder %s15, 3
    %p75 = scmp.ne.s32.totalorder %s70, %s72
    %p76 = scmp.eq.s32.totalorder %s15, 0
    %p77 = por %p75, %p76
    %p78 = scmp.ne.s32.totalorder %s70, %s72
    %p79 = scmp.eq.s32.totalorder %s20, 3
    %p80 = por %p78, %p79
    %p81 = scmp.ne.s32.totalorder %s72, %s73
    %p82 = scmp.eq.s32.totalorder %s20, 0
    %p83 = por %p81, %p82
    %p84 = scmp.ne.s32.totalorder %s72, %s73
    %p85 = scmp.eq.s32.totalorder %s21, 3
    %p86 = por %p84, %p85
    %p88 = scmp.ne.s32.totalorder %s73, %s87
    %p89 = scmp.eq.s32.totalorder %s21, 0
    %p90 = por %p88, %p89
    %s92 = sadd.s32 %s91, 1
    %p95 = scmp.eq.s32.totalorder %s15, 3
    %p96 = scmp.ne.s32.totalorder %s91, %s93
    %p97 = scmp.eq.s32.totalorder %s15, 0
    %p98 = por %p96, %p97
    %p99 = scmp.ne.s32.totalorder %s91, %s93
    %p100 = scmp.eq.s32.totalorder %s20, 3
    %p101 = por %p99, %p100
    %p102 = scmp.ne.s32.totalorder %s93, %s94
    %p103 = scmp.eq.s32.totalorder %s20, 0
    %p104 = por %p102, %p103
    %p105 = scmp.ne.s32.totalorder %s93, %s94
    %p106 = scmp.eq.s32.totalorder %s21, 3
    %p107 = por %p105, %p106
    %p109 = scmp.ne.s32.totalorder %s94, %s108
    %p110 = scmp.eq.s32.totalorder %s21, 0
    %p111 = por %p109, %p110
    %s113 = sadd.s32 %s112, 1
    %p116 = scmp.eq.s32.totalorder %s15, 3
    %p117 = scmp.ne.s32.totalorder %s112, %s114
    %p118 = scmp.eq.s32.totalorder %s15, 0
    %p119 = por %p117, %p118
    %p120 = scmp.ne.s32.totalorder %s112, %s114
    %p121 = scmp.eq.s32.totalorder %s20, 3
    %p122 = por %p120, %p121
    %p123 = scmp.ne.s32.totalorder %s114, %s115
    %p124 = scmp.eq.s32.totalorder %s20, 0
    %p125 = por %p123, %p124
    %p126 = scmp.ne.s32.totalorder %s114, %s115
    %p127 = scmp.eq.s32.totalorder %s21, 3
    %p128 = por %p126, %p127
    %p130 = scmp.ne.s32.totalorder %s115, %s129
    %p131 = scmp.eq.s32.totalorder %s21, 0
    %p132 = por %p130, %p131
    %s134 = sadd.s32 %s133, 1
    %p137 = scmp.eq.s32.totalorder %s15, 3
    %p138 = scmp.ne.s32.totalorder %s133, %s135
    %p139 = scmp.eq.s32.totalorder %s15, 0
    %p140 = por %p138, %p139
    %p141 = scmp.ne.s32.totalorder %s133, %s135
    %p142 = scmp.eq.s32.totalorder %s20, 3
    %p143 = por %p141, %p142
    %p144 = scmp.ne.s32.totalorder %s135, %s136
    %p145 = scmp.eq.s32.totalorder %s20, 0
    %p146 = por %p144, %p145
    %p147 = scmp.ne.s32.totalorder %s135, %s136
    %p148 = scmp.eq.s32.totalorder %s21, 3
    %p149 = por %p147, %p148
    %p151 = scmp.ne.s32.totalorder %s136, %s150
    %p152 = scmp.eq.s32.totalorder %s21, 0
    %p153 = por %p151, %p152
    %s155 = sadd.s32 %s154, 1
    %p158 = scmp.eq.s32.totalorder %s15, 3
    %p159 = scmp.ne.s32.totalorder %s154, %s156
    %p160 = scmp.eq.s32.totalorder %s15, 0
    %p161 = por %p159, %p160
    %p162 = scmp.ne.s32.totalorder %s154, %s156
    %p163 = scmp.eq.s32.totalorder %s20, 3
    %p164 = por %p162, %p163
    %p165 = scmp.ne.s32.totalorder %s156, %s157
    %p166 = scmp.eq.s32.totalorder %s20, 0
    %p167 = por %p165, %p166
    %p168 = scmp.ne.s32.totalorder %s156, %s157
    %p169 = scmp.eq.s32.totalorder %s21, 3
    %p170 = por %p168, %p169
    %p172 = scmp.ne.s32.totalorder %s157, %s171
    %p173 = scmp.eq.s32.totalorder %s21, 0
    %p174 = por %p172, %p173
    %s176 = sadd.s32 %s175, 1
    %p179 = scmp.eq.s32.totalorder %s15, 3
    %p180 = scmp.ne.s32.totalorder %s175, %s177
    %p181 = scmp.eq.s32.totalorder %s15, 0
    %p182 = por %p180, %p181
    %p183 = scmp.ne.s32.totalorder %s175, %s177
    %p184 = scmp.eq.s32.totalorder %s20, 3
    %p185 = por %p183, %p184
    %p186 = scmp.ne.s32.totalorder %s177, %s178
    %p187 = scmp.eq.s32.totalorder %s20, 0
    %p188 = por %p186, %p187
    %p189 = scmp.ne.s32.totalorder %s177, %s178
    %p190 = scmp.eq.s32.totalorder %s21, 3
    %p191 = por %p189, %p190
    %p193 = scmp.ne.s32.totalorder %s178, %s192
    %p194 = scmp.eq.s32.totalorder %s21, 0
    %p195 = por %p193, %p194
    %s197 = sadd.s32 %s196, 1
    %p200 = scmp.eq.s32.totalorder %s15, 3
    %p201 = scmp.ne.s32.totalorder %s196, %s198
    %p202 = scmp.eq.s32.totalorder %s15, 0
    %p203 = por %p201, %p202
    %p204 = scmp.ne.s32.totalorder %s196, %s198
    %p205 = scmp.eq.s32.totalorder %s20, 3
    %p206 = por %p204, %p205
    %p207 = scmp.ne.s32.totalorder %s198, %s199
    %p208 = scmp.eq.s32.totalorder %s20, 0
    %p209 = por %p207, %p208
    %p210 = scmp.ne.s32.totalorder %s198, %s199
    %p211 = scmp.eq.s32.totalorder %s21, 3
    %p212 = por %p210, %p211
    %p214 = scmp.ne.s32.totalorder %s199, %s213
    %p215 = scmp.eq.s32.totalorder %s21, 0
    %p216 = por %p214, %p215
    %s217 = ssub.s32 %s15, %s22
    %p218 = scmp.eq.s32.totalorder %s217, 0
    %s220 = sadd.s32 %s219, 1
    %s221 = scalar_select %p218, %s219, %s220
    %p224 = pneg %p218
    %p225 = scmp.eq.s32.totalorder %s15, 3
    %p226 = por %p224, %p225
    %p227 = scmp.ne.s32.totalorder %s219, %s222
    %p228 = scmp.eq.s32.totalorder %s15, 0
    %p229 = por %p227, %p228
    %p230 = scmp.ne.s32.totalorder %s219, %s222
    %p231 = scmp.eq.s32.totalorder %s20, 3
    %p232 = por %p230, %p231
    %p233 = scmp.ne.s32.totalorder %s222, %s223
    %p234 = scmp.eq.s32.totalorder %s20, 0
    %p235 = por %p233, %p234
    %p236 = scmp.ne.s32.totalorder %s222, %s223
    %p237 = scmp.eq.s32.totalorder %s21, 3
    %p238 = por %p236, %p237
    %p240 = scmp.ne.s32.totalorder %s223, %s239
    %p241 = scmp.eq.s32.totalorder %s21, 0
    %p242 = por %p240, %p241
    %p243 = scmp.le.s32.totalorder 1, %s15
    %p244 = scmp.lt.s32.totalorder %s15, 5
    %p245 = pnand %p243, %p244
    %p246 = pneg %p245
    // Predicated region
    $region9: #{mossformer_se_forward.1} parent=5 // pred_check
      _
    $region10: #{mossformer_se_forward.1} parent=5 // pred_check_branch
      %248 = sbr.rel (%p245) target = $region12
    $region11: #{mossformer_se_forward.1} parent=5 // pred_region
      %s249 = ssub.s32 %s15, 1
      // Predicated region
      $region13: #{mossformer_se_forward.1} parent=11 // pred_check
        %p250 = pneg %p62
      $region14: #{mossformer_se_forward.1} parent=11 // pred_check_branch
        %252 = sbr.rel (%p250) target = $region16
      $region15: #{mossformer_se_forward.1} parent=11 // pred_region
        _
      $region16: #{mossformer_se_forward.1} parent=11 // pred_fallthru
        _
      // Predicated region
      $region17: #{mossformer_se_forward.1} parent=11 // pred_check
        %p253 = pneg %p83
      $region18: #{mossformer_se_forward.1} parent=11 // pred_check_branch
        %255 = sbr.rel (%p253) target = $region20
      $region19: #{mossformer_se_forward.1} parent=11 // pred_region
        _
      $region20: #{mossformer_se_forward.1} parent=11 // pred_fallthru
        _
      // Predicated region
      $region21: #{mossformer_se_forward.1} parent=11 // pred_check
        %p256 = pneg %p104
      $region22: #{mossformer_se_forward.1} parent=11 // pred_check_branch
        %258 = sbr.rel (%p256) target = $region24
      $region23: #{mossformer_se_forward.1} parent=11 // pred_region
        _
      $region24: #{mossformer_se_forward.1} parent=11 // pred_fallthru
        _
      // Predicated region
      $region25: #{mossformer_se_forward.1} parent=11 // pred_check
        %p259 = pneg %p125
      $region26: #{mossformer_se_forward.1} parent=11 // pred_check_branch
        %261 = sbr.rel (%p259) target = $region28
      $region27: #{mossformer_se_forward.1} parent=11 // pred_region
        _
      $region28: #{mossformer_se_forward.1} parent=11 // pred_fallthru
        _
      // Predicated region
      $region29: #{mossformer_se_forward.1} parent=11 // pred_check
        %p262 = pneg %p146
      $region30: #{mossformer_se_forward.1} parent=11 // pred_check_branch
        %264 = sbr.rel (%p262) target = $region32
      $region31: #{mossformer_se_forward.1} parent=11 // pred_region
        _
      $region32: #{mossformer_se_forward.1} parent=11 // pred_fallthru
        _
      // Predicated region
      $region33: #{mossformer_se_forward.1} parent=11 // pred_check
        %p265 = pneg %p167
      $region34: #{mossformer_se_forward.1} parent=11 // pred_check_branch
        %267 = sbr.rel (%p265) target = $region36
      $region35: #{mossformer_se_forward.1} parent=11 // pred_region
        _
      $region36: #{mossformer_se_forward.1} parent=11 // pred_fallthru
        _
      // Predicated region
      $region37: #{mossformer_se_forward.1} parent=11 // pred_check
        %p268 = pneg %p188
      $region38: #{mossformer_se_forward.1} parent=11 // pred_check_branch
        %270 = sbr.rel (%p268) target = $region40
      $region39: #{mossformer_se_forward.1} parent=11 // pred_region
        _
      $region40: #{mossformer_se_forward.1} parent=11 // pred_fallthru
        _
      // Predicated region
      $region41: #{mossformer_se_forward.1} parent=11 // pred_check
        %p271 = pneg %p209
      $region42: #{mossformer_se_forward.1} parent=11 // pred_check_branch
        %273 = sbr.rel (%p271) target = $region44
      $region43: #{mossformer_se_forward.1} parent=11 // pred_region
        _
      $region44: #{mossformer_se_forward.1} parent=11 // pred_fallthru
        _
    $region12: #{mossformer_se_forward.1} parent=5 // pred_fallthru
      _
    %p274 = scmp.lt.s32.totalorder %s15, 4
    // Predicated region
    $region45: #{mossformer_se_forward.1} parent=5 // pred_check
      %p275 = pneg %p274
    $region46: #{mossformer_se_forward.1} parent=5 // pred_check_branch
      %277 = sbr.rel (%p275) target = $region48
    $region47: #{mossformer_se_forward.1} parent=5 // pred_region
      // Predicated region
      $region49: #{mossformer_se_forward.1} parent=47 // pred_check
        %p278 = pneg %p35
      $region50: #{mossformer_se_forward.1} parent=47 // pred_check_branch
        %280 = sbr.rel (%p278) target = $region52
      $region51: #{mossformer_se_forward.1} parent=47 // pred_region
        %p281 = scmp.lt.s32.totalorder %s15, 3
        %s282 = scalar_select %p281, %s15, 3
        %s283 = smul.addr %s282, 16
        %s284 = smul.addr %s283, 8
        %s285 = scalar_lea.vmem %s0, %s284
      $region52: #{mossformer_se_forward.1} parent=47 // pred_fallthru
        _
    $region48: #{mossformer_se_forward.1} parent=5 // pred_fallthru
      _
    %p286 = scmp.le.s32.totalorder 1, %s15
    %p287 = scmp.lt.s32.totalorder %s15, 5
    %p288 = pnand %p286, %p287
    %p289 = pneg %p288
    // Predicated region
    $region53: #{mossformer_se_forward.1} parent=5 // pred_check
      _
    $region54: #{mossformer_se_forward.1} parent=5 // pred_check_branch
      %291 = sbr.rel (%p288) target = $region56
    $region55: #{mossformer_se_forward.1} parent=5 // pred_region
      %s292 = ssub.s32 %s15, 1
      %p293 = scmp.lt.s32.totalorder %s20, 3
      %s294 = scalar_select %p293, %s20, 3
      %s295 = smul.addr %s294, 16
      %s296 = smul.addr %s295, 8
      %s297 = scalar_lea.vmem %s0, %s296
      %p298 = pneg %p41
      %p299 = pneg %p38
      %p300 = pneg %p62
      %p301 = pneg %p59
      %p302 = pneg %p83
      %p303 = pneg %p80
      %p304 = pneg %p104
      %p305 = pneg %p101
      %p306 = pneg %p125
      %p307 = pneg %p122
      %p308 = pneg %p146
      %p309 = pneg %p143
      %p310 = pneg %p167
      %p311 = pneg %p164
      %p312 = pneg %p188
      %p313 = pneg %p185
      %p314 = pneg %p209
      %p315 = pneg %p206
      %p316 = pneg %p235
      %p317 = pneg %p232
      %p318 = scmp.lt.s32.totalorder %s20, 3
      %s319 = scalar_select %p318, %s20, 3
      %s320 = smul.addr %s319, 16
      %s321 = smul.addr %s320, 8
      %s322 = scalar_lea.vmem %s9, %s321
      %p323 = scmp.lt.s32.totalorder %s20, 3
      %s324 = scalar_select %p323, %s20, 3
      %s325 = smul.addr %s324, 16
      %s326 = smul.addr %s325, 8
      %s327 = scalar_lea.vmem %s0, %s326
      %p328 = scmp.lt.s32.totalorder %s20, 3
      %s329 = scalar_select %p328, %s20, 3
      %s330 = smul.addr %s329, 16
      %s331 = smul.addr %s330, 8
      %s332 = scalar_lea.vmem %s9, %s331
      %v334 = vld [vmem:[%s327] sm:$0xff]
      %v335 = vld [vmem:[%s327 + $0x8] sm:$0xff]
      %v336 = vld [vmem:[%s327 + $0x10] sm:$0xff]
      %v337 = vld [vmem:[%s327 + $0x18] sm:$0xff]
      %v338 = vld [vmem:[%s327 + $0x20] sm:$0xff]
      %v339 = vld [vmem:[%s327 + $0x28] sm:$0xff]
      %v340 = vld [vmem:[%s327 + $0x30] sm:$0xff]
      %v341 = vld [vmem:[%s327 + $0x38] sm:$0xff]
      %v342 = vld [vmem:[%s327 + $0x40] sm:$0xff]
      %v343 = vld [vmem:[%s327 + $0x48] sm:$0xff]
      %v344 = vld [vmem:[%s327 + $0x50] sm:$0xff]
      %v345 = vld [vmem:[%s327 + $0x58] sm:$0xff]
      %v346 = vld [vmem:[%s327 + $0x60] sm:$0xff]
      %v347 = vld [vmem:[%s327 + $0x68] sm:$0xff]
      %v348 = vld [vmem:[%s327 + $0x70] sm:$0xff]
      %v349 = vld [vmem:[%s327 + $0x78] sm:$0xff]
      %v350 = vmul.f32 %v334, 3.0517578e-05
      %v351 = vmul.f32 %v335, 3.0517578e-05
      %v352 = vmul.f32 %v336, 3.0517578e-05
      %v353 = vmul.f32 %v337, 3.0517578e-05
      %v354 = vmul.f32 %v338, 3.0517578e-05
      %v355 = vmul.f32 %v339, 3.0517578e-05
      %v356 = vmul.f32 %v340, 3.0517578e-05
      %v357 = vmul.f32 %v341, 3.0517578e-05
      %v358 = vmul.f32 %v342, 3.0517578e-05
      %v359 = vmul.f32 %v343, 3.0517578e-05
      %v360 = vmul.f32 %v344, 3.0517578e-05
      %v361 = vmul.f32 %v345, 3.0517578e-05
      %v362 = vmul.f32 %v346, 3.0517578e-05
      %v363 = vmul.f32 %v347, 3.0517578e-05
      %v364 = vmul.f32 %v348, 3.0517578e-05
      %v365 = vmul.f32 %v349, 3.0517578e-05
      %v366 = vmul.f32 %v350, %v350
      %v367 = vmul.f32 %v351, %v351
      %v368 = vmul.f32 %v352, %v352
      %v369 = vmul.f32 %v353, %v353
      %v370 = vmul.f32 %v354, %v354
      %v371 = vmul.f32 %v355, %v355
      %v372 = vmul.f32 %v356, %v356
      %v373 = vmul.f32 %v357, %v357
      %v374 = vmul.f32 %v358, %v358
      %v375 = vmul.f32 %v359, %v359
      %v376 = vmul.f32 %v360, %v360
      %v377 = vmul.f32 %v361, %v361
      %v378 = vmul.f32 %v362, %v362
      %v379 = vmul.f32 %v363, %v363
      %v380 = vmul.f32 %v364, %v364
      %v381 = vmul.f32 %v365, %v365
      %vm382 = vcmask 261120
      %v383 = vsel %vm382, %v366, 0.0
      %384 = vadd.xlane.f32.xlu0 %v383
      %v385 = vpop.xlane.xlu0 %384
      %v386 = vsel %vm382, %v367, 0.0
      %387 = vadd.xlane.f32.xlu0 %v386
      %v388 = vpop.xlane.xlu0 %387
      %v389 = vsel %vm382, %v368, 0.0
      %390 = vadd.xlane.f32.xlu0 %v389
      %v391 = vpop.xlane.xlu0 %390
      %v392 = vsel %vm382, %v369, 0.0
      %393 = vadd.xlane.f32.xlu0 %v392
      %v394 = vpop.xlane.xlu0 %393
      %v395 = vsel %vm382, %v370, 0.0
      %396 = vadd.xlane.f32.xlu0 %v395
      %v397 = vpop.xlane.xlu0 %396
      %v398 = vsel %vm382, %v371, 0.0
      %399 = vadd.xlane.f32.xlu0 %v398
      %v400 = vpop.xlane.xlu0 %399
      %v401 = vsel %vm382, %v372, 0.0
      %402 = vadd.xlane.f32.xlu0 %v401
      %v403 = vpop.xlane.xlu0 %402
      %v404 = vsel %vm382, %v373, 0.0
      %405 = vadd.xlane.f32.xlu0 %v404
      %v406 = vpop.xlane.xlu0 %405
      %v407 = vsel %vm382, %v374, 0.0
      %408 = vadd.xlane.f32.xlu0 %v407
      %v409 = vpop.xlane.xlu0 %408
      %v410 = vsel %vm382, %v375, 0.0
      %411 = vadd.xlane.f32.xlu0 %v410
      %v412 = vpop.xlane.xlu0 %411
      %v413 = vsel %vm382, %v376, 0.0
      %414 = vadd.xlane.f32.xlu0 %v413
      %v415 = vpop.xlane.xlu0 %414
      %v416 = vsel %vm382, %v377, 0.0
      %417 = vadd.xlane.f32.xlu0 %v416
      %v418 = vpop.xlane.xlu0 %417
      %v419 = vsel %vm382, %v378, 0.0
      %420 = vadd.xlane.f32.xlu0 %v419
      %v421 = vpop.xlane.xlu0 %420
      %v422 = vsel %vm382, %v379, 0.0
      %423 = vadd.xlane.f32.xlu0 %v422
      %v424 = vpop.xlane.xlu0 %423
      %v425 = vsel %vm382, %v380, 0.0
      %426 = vadd.xlane.f32.xlu0 %v425
      %v427 = vpop.xlane.xlu0 %426
      %v428 = vsel %vm382, %v381, 0.0
      %429 = vadd.xlane.f32.xlu0 %v428
      %v430 = vpop.xlane.xlu0 %429
      %v431 = vadd.f32 %v385, %v388
      %v432 = vadd.f32 %v431, %v391
      %v433 = vadd.f32 %v432, %v394
      %v434 = vadd.f32 %v433, %v397
      %v435 = vadd.f32 %v434, %v400
      %v436 = vadd.f32 %v435, %v403
      %v437 = vadd.f32 %v436, %v406
      %v438 = vadd.f32 %v437, %v409
      %v439 = vadd.f32 %v438, %v412
      %v440 = vadd.f32 %v439, %v415
      %v441 = vadd.f32 %v440, %v418
      %v442 = vadd.f32 %v441, %v421
      %v443 = vadd.f32 %v442, %v424
      %v444 = vadd.f32 %v443, %v427
      %v445 = vadd.f32 %v444, %v430
      %v446 = vrot.slane %v445, 4
      %v447 = vadd.f32 %v445, %v446
      %v448 = vrot.slane %v447, 2
      %v449 = vadd.f32 %v447, %v448
      %v450 = vrot.slane %v449, 1
      %v451 = vadd.f32 %v449, %v450
      %v452 = vmul.f32 %v451, 0.000246063
      %v453 = vadd.f32 %v452, 1e-06
      %v454 = vrsqrt.pop %v453
      %v455 = vmul.f32 %v454, %v453
      %v456 = vmul.f32 %v455, %v454
      %v457 = vmul.f32 0.5, %v456
      %v458 = vsub.f32 1.5, %v457
      %v459 = vmul.f32 %v454, %v458
      %v460 = vmul.f32 %v453, %v459
      %vm461 = vcmp.eq.f32.partialorder %v453, inf
      %v462 = vsel %vm461, %v453, %v460
      %vm463 = vcmp.eq.f32.partialorder %v453, 0.0
      %v464 = vand.u32 %v453, 2147483648
      %v465 = vsel %vm463, %v464, %v462
      %v466 = vrsqrt.pop %v453
      %v467 = vmul.f32 %v466, %v453
      %v468 = vmul.f32 %v467, %v466
      %v469 = vmul.f32 0.5, %v468
      %v470 = vsub.f32 1.5, %v469
      %v471 = vmul.f32 %v466, %v470
      %vm472 = vweird.f32 %v453
      %vm473 = vweird.f32 %v466
      %vm474 = vmor %vm472, %vm473
      %v475 = vsel %vm474, %v466, %v471
      %v476 = vmul.f32 %v350, %v475
      %v477 = vmul.f32 %v351, %v475
      %v478 = vmul.f32 %v352, %v475
      %v479 = vmul.f32 %v353, %v475
      %v480 = vmul.f32 %v354, %v475
      %v481 = vmul.f32 %v355, %v475
      %v482 = vmul.f32 %v356, %v475
      %v483 = vmul.f32 %v357, %v475
      %v484 = vmul.f32 %v358, %v475
      %v485 = vmul.f32 %v359, %v475
      %v486 = vmul.f32 %v360, %v475
      %v487 = vmul.f32 %v361, %v475
      %v488 = vmul.f32 %v362, %v475
      %v489 = vmul.f32 %v363, %v475
      %v490 = vmul.f32 %v364, %v475
      %v491 = vmul.f32 %v365, %v475
      %v492 = vpack.c.bf16 %v477, %v476
      %v493 = vpack.c.bf16 %v479, %v478
      %v494 = vpack.c.bf16 %v481, %v480
      %v495 = vpack.c.bf16 %v483, %v482
      %v496 = vpack.c.bf16 %v485, %v484
      %v497 = vpack.c.bf16 %v487, %v486
      %v498 = vpack.c.bf16 %v489, %v488
      %v499 = vpack.c.bf16 %v491, %v490
      %v500 = vld [vmem:[%s1] sm:$0xf]
      %v501 = vld [vmem:[%s1 + $0x4] sm:$0xf]
      %v502 = vld [vmem:[%s1 + $0x8] sm:$0xf]
      %v503 = vld [vmem:[%s1 + $0xc] sm:$0xf]
      %v508 = vunpack.c.l.b16 %v500
      %v509 = vunpack.c.l.b16 %v501
      %v510 = vunpack.c.l.b16 %v502
      %v511 = vunpack.c.l.b16 %v503
      %v512 = vpack.c.b16 %v509, %v508
      %v513 = vpack.c.b16 %v511, %v510
      %v517 = vsel %vm382, %v492, 0
      %v520 = vsel %vm382, %v493, 0
      %v523 = vsel %vm382, %v494, 0
      %v526 = vsel %vm382, %v495, 0
      %v529 = vsel %vm382, %v496, 0
      %v532 = vsel %vm382, %v497, 0
      %v535 = vsel %vm382, %v498, 0
      %v538 = vsel %vm382, %v499, 0
      %540 = vmatpush.bf16.msra.mxu0 0
      %541 = vmatpush.bf16.msra.mxu0 0
      %542 = vmatpush.bf16.msra.mxu0 0
      %543 = vmatpush.bf16.msra.mxu0 0
      %544 = vmatpush.bf16.msra.mxu0 0
      %545 = vmatpush.bf16.msra.mxu0 0
      %546 = vmatpush.bf16.msra.mxu0 %v513
      %547 = vmatpush.bf16.msra.mxu0 %v512
      %548 = vmatmul.bf16.gmra.mxu0 %v517
      %v549 = vpop.f32.mrf.mxu0
      %v550 = vadd.f32 0.0, %v549
      %v551 = vpop.f32.mrf.mxu0
      %v552 = vadd.f32 0.0, %v551
      %553 = vmatmul.bf16.gmra.mxu0 %v520
      %v554 = vpop.f32.mrf.mxu0
      %v555 = vadd.f32 0.0, %v554
      %v556 = vpop.f32.mrf.mxu0
      %v557 = vadd.f32 0.0, %v556
      %558 = vmatmul.bf16.gmra.mxu0 %v523
      %v559 = vpop.f32.mrf.mxu0
      %v560 = vadd.f32 0.0, %v559
      %v561 = vpop.f32.mrf.mxu0
      %v562 = vadd.f32 0.0, %v561
      %563 = vmatmul.bf16.gmra.mxu0 %v526
      %v564 = vpop.f32.mrf.mxu0
      %v565 = vadd.f32 0.0, %v564
      %v566 = vpop.f32.mrf.mxu0
      %v567 = vadd.f32 0.0, %v566
      %568 = vmatmul.bf16.gmra.mxu0 %v529
      %v569 = vpop.f32.mrf.mxu0
      %v570 = vadd.f32 0.0, %v569
      %v571 = vpop.f32.mrf.mxu0
      %v572 = vadd.f32 0.0, %v571
      %573 = vmatmul.bf16.gmra.mxu0 %v532
      %v574 = vpop.f32.mrf.mxu0
      %v575 = vadd.f32 0.0, %v574
      %v576 = vpop.f32.mrf.mxu0
      %v577 = vadd.f32 0.0, %v576
      %578 = vmatmul.bf16.gmra.mxu0 %v535
      %v579 = vpop.f32.mrf.mxu0
      %v580 = vadd.f32 0.0, %v579
      %v581 = vpop.f32.mrf.mxu0
      %v582 = vadd.f32 0.0, %v581
      %583 = vmatmul.bf16.gmra.mxu0 %v538
      %v584 = vpop.f32.mrf.mxu0
      %v585 = vadd.f32 0.0, %v584
      %v586 = vpop.f32.mrf.mxu0
      %v587 = vadd.f32 0.0, %v586
      %588 = vdwg.mxu0
      %v589 = vmul.f32 %v550, %v550
      %v590 = vmul.f32 %v552, %v552
      %v591 = vmul.f32 %v555, %v555
      %v592 = vmul.f32 %v557, %v557
      %v593 = vmul.f32 %v560, %v560
      %v594 = vmul.f32 %v562, %v562
      %v595 = vmul.f32 %v565, %v565
      %v596 = vmul.f32 %v567, %v567
      %v597 = vmul.f32 %v570, %v570
      %v598 = vmul.f32 %v572, %v572
      %v599 = vmul.f32 %v575, %v575
      %v600 = vmul.f32 %v577, %v577
      %v601 = vmul.f32 %v580, %v580
      %v602 = vmul.f32 %v582, %v582
      %v603 = vmul.f32 %v585, %v585
      %v604 = vmul.f32 %v587, %v587
      %621 = vrot.lane.b32.xlu0 %v589, 111
      %v622 = vpop.permute.xlu0 %621
      %623 = vrot.lane.b32.xlu0 %v590, 111
      %v624 = vpop.permute.xlu0 %623
      %625 = vrot.lane.b32.xlu0 %v591, 111
      %v626 = vpop.permute.xlu0 %625
      %627 = vrot.lane.b32.xlu0 %v592, 111
      %v628 = vpop.permute.xlu0 %627
      %629 = vrot.lane.b32.xlu0 %v593, 111
      %v630 = vpop.permute.xlu0 %629
      %631 = vrot.lane.b32.xlu0 %v594, 111
      %v632 = vpop.permute.xlu0 %631
      %633 = vrot.lane.b32.xlu0 %v595, 111
      %v634 = vpop.permute.xlu0 %633
      %635 = vrot.lane.b32.xlu0 %v596, 111
      %v636 = vpop.permute.xlu0 %635
      %637 = vrot.lane.b32.xlu0 %v597, 111
      %v638 = vpop.permute.xlu0 %637
      %639 = vrot.lane.b32.xlu0 %v598, 111
      %v640 = vpop.permute.xlu0 %639
      %641 = vrot.lane.b32.xlu0 %v599, 111
      %v642 = vpop.permute.xlu0 %641
      %643 = vrot.lane.b32.xlu0 %v600, 111
      %v644 = vpop.permute.xlu0 %643
      %645 = vrot.lane.b32.xlu0 %v601, 111
      %v646 = vpop.permute.xlu0 %645
      %647 = vrot.lane.b32.xlu0 %v602, 111
      %v648 = vpop.permute.xlu0 %647
      %649 = vrot.lane.b32.xlu0 %v603, 111
      %v650 = vpop.permute.xlu0 %649
      %651 = vrot.lane.b32.xlu0 %v604, 111
      %v652 = vpop.permute.xlu0 %651
      %v669 = vadd.f32 %v589, %v622
      %v670 = vadd.f32 %v590, %v624
      %v671 = vadd.f32 %v591, %v626
      %v672 = vadd.f32 %v592, %v628
      %v673 = vadd.f32 %v593, %v630
      %v674 = vadd.f32 %v594, %v632
      %v675 = vadd.f32 %v595, %v634
      %v676 = vadd.f32 %v596, %v636
      %v677 = vadd.f32 %v597, %v638
      %v678 = vadd.f32 %v598, %v640
      %v679 = vadd.f32 %v599, %v642
      %v680 = vadd.f32 %v600, %v644
      %v681 = vadd.f32 %v601, %v646
      %v682 = vadd.f32 %v602, %v648
      %v683 = vadd.f32 %v603, %v650
      %v684 = vadd.f32 %v604, %v652
      %v685 = vadd.f32 %v669, 1e-12
      %v686 = vadd.f32 %v670, 1e-12
      %v687 = vadd.f32 %v671, 1e-12
      %v688 = vadd.f32 %v672, 1e-12
      %v689 = vadd.f32 %v673, 1e-12
      %v690 = vadd.f32 %v674, 1e-12
      %v691 = vadd.f32 %v675, 1e-12
      %v692 = vadd.f32 %v676, 1e-12
      %v693 = vadd.f32 %v677, 1e-12
      %v694 = vadd.f32 %v678, 1e-12
      %v695 = vadd.f32 %v679, 1e-12
      %v696 = vadd.f32 %v680, 1e-12
      %v697 = vadd.f32 %v681, 1e-12
      %v698 = vadd.f32 %v682, 1e-12
      %v699 = vadd.f32 %v683, 1e-12
      %v700 = vadd.f32 %v684, 1e-12
      %v701 = vlog2.pop %v685
      %v702 = vmul.f32 %v701, 0.6931472
      %v703 = vlog2.pop %v686
      %v704 = vmul.f32 %v703, 0.6931472
      %v705 = vlog2.pop %v687
      %v706 = vmul.f32 %v705, 0.6931472
      %v707 = vlog2.pop %v688
      %v708 = vmul.f32 %v707, 0.6931472
      %v709 = vlog2.pop %v689
      %v710 = vmul.f32 %v709, 0.6931472
      %v711 = vlog2.pop %v690
      %v712 = vmul.f32 %v711, 0.6931472
      %v713 = vlog2.pop %v691
      %v714 = vmul.f32 %v713, 0.6931472
      %v715 = vlog2.pop %v692
      %v716 = vmul.f32 %v715, 0.6931472
      %v717 = vlog2.pop %v693
      %v718 = vmul.f32 %v717, 0.6931472
      %v719 = vlog2.pop %v694
      %v720 = vmul.f32 %v719, 0.6931472
      %v721 = vlog2.pop %v695
      %v722 = vmul.f32 %v721, 0.6931472
      %v723 = vlog2.pop %v696
      %v724 = vmul.f32 %v723, 0.6931472
      %v725 = vlog2.pop %v697
      %v726 = vmul.f32 %v725, 0.6931472
      %v727 = vlog2.pop %v698
      %v728 = vmul.f32 %v727, 0.6931472
      %v729 = vlog2.pop %v699
      %v730 = vmul.f32 %v729, 0.6931472
      %v731 = vlog2.pop %v700
      %v732 = vmul.f32 %v731, 0.6931472
      %v733 = vmul.f32 %v702, 0.15
      %v734 = vmul.f32 %v704, 0.15
      %v735 = vmul.f32 %v706, 0.15
      %v736 = vmul.f32 %v708, 0.15
      %v737 = vmul.f32 %v710, 0.15
      %v738 = vmul.f32 %v712, 0.15
      %v739 = vmul.f32 %v714, 0.15
      %v740 = vmul.f32 %v716, 0.15
      %v741 = vmul.f32 %v718, 0.15
      %v742 = vmul.f32 %v720, 0.15
      %v743 = vmul.f32 %v722, 0.15
      %v744 = vmul.f32 %v724, 0.15
      %v745 = vmul.f32 %v726, 0.15
      %v746 = vmul.f32 %v728, 0.15
      %v747 = vmul.f32 %v730, 0.15
      %v748 = vmul.f32 %v732, 0.15
      %v749 = vmul.f32 %v733, 1.442695
      %v750 = vpow.pop %v749
      %v751 = vmul.f32 %v734, 1.442695
      %v752 = vpow.pop %v751
      %v753 = vmul.f32 %v735, 1.442695
      %v754 = vpow.pop %v753
      %v755 = vmul.f32 %v736, 1.442695
      %v756 = vpow.pop %v755
      %v757 = vmul.f32 %v737, 1.442695
      %v758 = vpow.pop %v757
      %v759 = vmul.f32 %v738, 1.442695
      %v760 = vpow.pop %v759
      %v761 = vmul.f32 %v739, 1.442695
      %v762 = vpow.pop %v761
      %v763 = vmul.f32 %v740, 1.442695
      %v764 = vpow.pop %v763
      %v765 = vmul.f32 %v741, 1.442695
      %v766 = vpow.pop %v765
      %v767 = vmul.f32 %v742, 1.442695
      %v768 = vpow.pop %v767
      %v769 = vmul.f32 %v743, 1.442695
      %v770 = vpow.pop %v769
      %v771 = vmul.f32 %v744, 1.442695
      %v772 = vpow.pop %v771
      %v773 = vmul.f32 %v745, 1.442695
      %v774 = vpow.pop %v773
      %v775 = vmul.f32 %v746, 1.442695
      %v776 = vpow.pop %v775
      %v777 = vmul.f32 %v747, 1.442695
      %v778 = vpow.pop %v777
      %v779 = vmul.f32 %v748, 1.442695
      %v780 = vpow.pop %v779
      %v781 = vmul.f32 %v702, -0.35
      %v782 = vmul.f32 %v704, -0.35
      %v783 = vmul.f32 %v706, -0.35
      %v784 = vmul.f32 %v708, -0.35
      %v785 = vmul.f32 %v710, -0.35
      %v786 = vmul.f32 %v712, -0.35
      %v787 = vmul.f32 %v714, -0.35
      %v788 = vmul.f32 %v716, -0.35
      %v789 = vmul.f32 %v718, -0.35
      %v790 = vmul.f32 %v720, -0.35
      %v791 = vmul.f32 %v722, -0.35
      %v792 = vmul.f32 %v724, -0.35
      %v793 = vmul.f32 %v726, -0.35
      %v794 = vmul.f32 %v728, -0.35
      %v795 = vmul.f32 %v730, -0.35
      %v796 = vmul.f32 %v732, -0.35
      %v797 = vmul.f32 %v781, 1.442695
      %v798 = vpow.pop %v797
      %v799 = vmul.f32 %v782, 1.442695
      %v800 = vpow.pop %v799
      %v801 = vmul.f32 %v783, 1.442695
      %v802 = vpow.pop %v801
      %v803 = vmul.f32 %v784, 1.442695
      %v804 = vpow.pop %v803
      %v805 = vmul.f32 %v785, 1.442695
      %v806 = vpow.pop %v805
      %v807 = vmul.f32 %v786, 1.442695
      %v808 = vpow.pop %v807
      %v809 = vmul.f32 %v787, 1.442695
      %v810 = vpow.pop %v809
      %v811 = vmul.f32 %v788, 1.442695
      %v812 = vpow.pop %v811
      %v813 = vmul.f32 %v789, 1.442695
      %v814 = vpow.pop %v813
      %v815 = vmul.f32 %v790, 1.442695
      %v816 = vpow.pop %v815
      %v817 = vmul.f32 %v791, 1.442695
      %v818 = vpow.pop %v817
      %v819 = vmul.f32 %v792, 1.442695
      %v820 = vpow.pop %v819
      %v821 = vmul.f32 %v793, 1.442695
      %v822 = vpow.pop %v821
      %v823 = vmul.f32 %v794, 1.442695
      %v824 = vpow.pop %v823
      %v825 = vmul.f32 %v795, 1.442695
      %v826 = vpow.pop %v825
      %v827 = vmul.f32 %v796, 1.442695
      %v828 = vpow.pop %v827
      %v829 = vmul.f32 %v550, %v798
      %v830 = vmul.f32 %v552, %v800
      %v831 = vmul.f32 %v555, %v802
      %v832 = vmul.f32 %v557, %v804
      %v833 = vmul.f32 %v560, %v806
      %v834 = vmul.f32 %v562, %v808
      %v835 = vmul.f32 %v565, %v810
      %v836 = vmul.f32 %v567, %v812
      %v837 = vmul.f32 %v570, %v814
      %v838 = vmul.f32 %v572, %v816
      %v839 = vmul.f32 %v575, %v818
      %v840 = vmul.f32 %v577, %v820
      %v841 = vmul.f32 %v580, %v822
      %v842 = vmul.f32 %v582, %v824
      %v843 = vmul.f32 %v585, %v826
      %v844 = vmul.f32 %v587, %v828
      %861 = vrot.lane.b32.xlu0 %v798, 17
      %v862 = vpop.permute.xlu0 %861
      %863 = vrot.lane.b32.xlu0 %v800, 17
      %v864 = vpop.permute.xlu0 %863
      %865 = vrot.lane.b32.xlu0 %v802, 17
      %v866 = vpop.permute.xlu0 %865
      %867 = vrot.lane.b32.xlu0 %v804, 17
      %v868 = vpop.permute.xlu0 %867
      %869 = vrot.lane.b32.xlu0 %v806, 17
      %v870 = vpop.permute.xlu0 %869
      %871 = vrot.lane.b32.xlu0 %v808, 17
      %v872 = vpop.permute.xlu0 %871
      %873 = vrot.lane.b32.xlu0 %v810, 17
      %v874 = vpop.permute.xlu0 %873
      %875 = vrot.lane.b32.xlu0 %v812, 17
      %v876 = vpop.permute.xlu0 %875
      %877 = vrot.lane.b32.xlu0 %v814, 17
      %v878 = vpop.permute.xlu0 %877
      %879 = vrot.lane.b32.xlu0 %v816, 17
      %v880 = vpop.permute.xlu0 %879
      %881 = vrot.lane.b32.xlu0 %v818, 17
      %v882 = vpop.permute.xlu0 %881
      %883 = vrot.lane.b32.xlu0 %v820, 17
      %v884 = vpop.permute.xlu0 %883
      %885 = vrot.lane.b32.xlu0 %v822, 17
      %v886 = vpop.permute.xlu0 %885
      %887 = vrot.lane.b32.xlu0 %v824, 17
      %v888 = vpop.permute.xlu0 %887
      %889 = vrot.lane.b32.xlu0 %v826, 17
      %v890 = vpop.permute.xlu0 %889
      %891 = vrot.lane.b32.xlu0 %v828, 17
      %v892 = vpop.permute.xlu0 %891
      %v909 = vmul.f32 %v550, %v862
      %v910 = vmul.f32 %v552, %v864
      %v911 = vmul.f32 %v555, %v866
      %v912 = vmul.f32 %v557, %v868
      %v913 = vmul.f32 %v560, %v870
      %v914 = vmul.f32 %v562, %v872
      %v915 = vmul.f32 %v565, %v874
      %v916 = vmul.f32 %v567, %v876
      %v917 = vmul.f32 %v570, %v878
      %v918 = vmul.f32 %v572, %v880
      %v919 = vmul.f32 %v575, %v882
      %v920 = vmul.f32 %v577, %v884
      %v921 = vmul.f32 %v580, %v886
      %v922 = vmul.f32 %v582, %v888
      %v923 = vmul.f32 %v585, %v890
      %v924 = vmul.f32 %v587, %v892
      %vm925 = vcmask 138240
      %926 = vst.msk [vmem:[#allocation2] sm:$0xff] %vm925, %v829
      %927 = vst.msk [vmem:[#allocation2 + $0x8] sm:$0xff] %vm925, %v830
      %928 = vst.msk [vmem:[#allocation2 + $0x10] sm:$0xff] %vm925, %v831
      %929 = vst.msk [vmem:[#allocation2 + $0x18] sm:$0xff] %vm925, %v832
      %930 = vst.msk [vmem:[#allocation2 + $0x20] sm:$0xff] %vm925, %v833
      %931 = vst.msk [vmem:[#allocation2 + $0x28] sm:$0xff] %vm925, %v834
      %932 = vst.msk [vmem:[#allocation2 + $0x30] sm:$0xff] %vm925, %v835
      %933 = vst.msk [vmem:[#allocation2 + $0x38] sm:$0xff] %vm925, %v836
      %934 = vst.msk [vmem:[#allocation2 + $0x40] sm:$0xff] %vm925, %v837
      %935 = vst.msk [vmem:[#allocation2 + $0x48] sm:$0xff] %vm925, %v838
      %936 = vst.msk [vmem:[#allocation2 + $0x50] sm:$0xff] %vm925, %v839
      %937 = vst.msk [vmem:[#allocation2 + $0x58] sm:$0xff] %vm925, %v840
      %938 = vst.msk [vmem:[#allocation2 + $0x60] sm:$0xff] %vm925, %v841
      %939 = vst.msk [vmem:[#allocation2 + $0x68] sm:$0xff] %vm925, %v842
      %940 = vst.msk [vmem:[#allocation2 + $0x70] sm:$0xff] %vm925, %v843
      %941 = vst.msk [vmem:[#allocation2 + $0x78] sm:$0xff] %vm925, %v844
      %958 = vrot.lane.b32.xlu0 %v909, 111
      %v959 = vpop.permute.xlu0 %958
      %960 = vrot.lane.b32.xlu0 %v910, 111
      %v961 = vpop.permute.xlu0 %960
      %962 = vrot.lane.b32.xlu0 %v911, 111
      %v963 = vpop.permute.xlu0 %962
      %964 = vrot.lane.b32.xlu0 %v912, 111
      %v965 = vpop.permute.xlu0 %964
      %966 = vrot.lane.b32.xlu0 %v913, 111
      %v967 = vpop.permute.xlu0 %966
      %968 = vrot.lane.b32.xlu0 %v914, 111
      %v969 = vpop.permute.xlu0 %968
      %970 = vrot.lane.b32.xlu0 %v915, 111
      %v971 = vpop.permute.xlu0 %970
      %972 = vrot.lane.b32.xlu0 %v916, 111
      %v973 = vpop.permute.xlu0 %972
      %974 = vrot.lane.b32.xlu0 %v917, 111
      %v975 = vpop.permute.xlu0 %974
      %976 = vrot.lane.b32.xlu0 %v918, 111
      %v977 = vpop.permute.xlu0 %976
      %978 = vrot.lane.b32.xlu0 %v919, 111
      %v979 = vpop.permute.xlu0 %978
      %980 = vrot.lane.b32.xlu0 %v920, 111
      %v981 = vpop.permute.xlu0 %980
      %982 = vrot.lane.b32.xlu0 %v921, 111
      %v983 = vpop.permute.xlu0 %982
      %984 = vrot.lane.b32.xlu0 %v922, 111
      %v985 = vpop.permute.xlu0 %984
      %986 = vrot.lane.b32.xlu0 %v923, 111
      %v987 = vpop.permute.xlu0 %986
      %988 = vrot.lane.b32.xlu0 %v924, 111
      %v989 = vpop.permute.xlu0 %988
      %1006 = vst.msk [vmem:[#allocation3] sm:$0xff] %vm925, %v959
      %1007 = vst.msk [vmem:[#allocation3 + $0x8] sm:$0xff] %vm925, %v961
      %1008 = vst.msk [vmem:[#allocation3 + $0x10] sm:$0xff] %vm925, %v963
      %1009 = vst.msk [vmem:[#allocation3 + $0x18] sm:$0xff] %vm925, %v965
      %1010 = vst.msk [vmem:[#allocation3 + $0x20] sm:$0xff] %vm925, %v967
      %1011 = vst.msk [vmem:[#allocation3 + $0x28] sm:$0xff] %vm925, %v969
      %1012 = vst.msk [vmem:[#allocation3 + $0x30] sm:$0xff] %vm925, %v971
      %1013 = vst.msk [vmem:[#allocation3 + $0x38] sm:$0xff] %vm925, %v973
      %1014 = vst.msk [vmem:[#allocation3 + $0x40] sm:$0xff] %vm925, %v975
      %1015 = vst.msk [vmem:[#allocation3 + $0x48] sm:$0xff] %vm925, %v977
      %1016 = vst.msk [vmem:[#allocation3 + $0x50] sm:$0xff] %vm925, %v979
      %1017 = vst.msk [vmem:[#allocation3 + $0x58] sm:$0xff] %vm925, %v981
      %1018 = vst.msk [vmem:[#allocation3 + $0x60] sm:$0xff] %vm925, %v983
      %1019 = vst.msk [vmem:[#allocation3 + $0x68] sm:$0xff] %vm925, %v985
      %1020 = vst.msk [vmem:[#allocation3 + $0x70] sm:$0xff] %vm925, %v987
      %1021 = vst.msk [vmem:[#allocation3 + $0x78] sm:$0xff] %vm925, %v989
      %1038 = vrot.lane.b32.xlu0 %v829, 17
      %v1039 = vpop.permute.xlu0 %1038
      %1040 = vrot.lane.b32.xlu0 %v830, 17
      %v1041 = vpop.permute.xlu0 %1040
      %1042 = vrot.lane.b32.xlu0 %v831, 17
      %v1043 = vpop.permute.xlu0 %1042
      %1044 = vrot.lane.b32.xlu0 %v832, 17
      %v1045 = vpop.permute.xlu0 %1044
      %1046 = vrot.lane.b32.xlu0 %v833, 17
      %v1047 = vpop.permute.xlu0 %1046
      %1048 = vrot.lane.b32.xlu0 %v834, 17
      %v1049 = vpop.permute.xlu0 %1048
      %1050 = vrot.lane.b32.xlu0 %v835, 17
      %v1051 = vpop.permute.xlu0 %1050
      %1052 = vrot.lane.b32.xlu0 %v836, 17
      %v1053 = vpop.permute.xlu0 %1052
      %1054 = vrot.lane.b32.xlu0 %v837, 17
      %v1055 = vpop.permute.xlu0 %1054
      %1056 = vrot.lane.b32.xlu0 %v838, 17
      %v1057 = vpop.permute.xlu0 %1056
      %1058 = vrot.lane.b32.xlu0 %v839, 17
      %v1059 = vpop.permute.xlu0 %1058
      %1060 = vrot.lane.b32.xlu0 %v840, 17
      %v1061 = vpop.permute.xlu0 %1060
      %1062 = vrot.lane.b32.xlu0 %v841, 17
      %v1063 = vpop.permute.xlu0 %1062
      %1064 = vrot.lane.b32.xlu0 %v842, 17
      %v1065 = vpop.permute.xlu0 %1064
      %1066 = vrot.lane.b32.xlu0 %v843, 17
      %v1067 = vpop.permute.xlu0 %1066
      %1068 = vrot.lane.b32.xlu0 %v844, 17
      %v1069 = vpop.permute.xlu0 %1068
      %1086 = vrot.lane.b32.xlu0 %v909, 17
      %v1087 = vpop.permute.xlu0 %1086
      %1088 = vrot.lane.b32.xlu0 %v910, 17
      %v1089 = vpop.permute.xlu0 %1088
      %1090 = vrot.lane.b32.xlu0 %v911, 17
      %v1091 = vpop.permute.xlu0 %1090
      %1092 = vrot.lane.b32.xlu0 %v912, 17
      %v1093 = vpop.permute.xlu0 %1092
      %1094 = vrot.lane.b32.xlu0 %v913, 17
      %v1095 = vpop.permute.xlu0 %1094
      %1096 = vrot.lane.b32.xlu0 %v914, 17
      %v1097 = vpop.permute.xlu0 %1096
      %1098 = vrot.lane.b32.xlu0 %v915, 17
      %v1099 = vpop.permute.xlu0 %1098
      %1100 = vrot.lane.b32.xlu0 %v916, 17
      %v1101 = vpop.permute.xlu0 %1100
      %1102 = vrot.lane.b32.xlu0 %v917, 17
      %v1103 = vpop.permute.xlu0 %1102
      %1104 = vrot.lane.b32.xlu0 %v918, 17
      %v1105 = vpop.permute.xlu0 %1104
      %1106 = vrot.lane.b32.xlu0 %v919, 17
      %v1107 = vpop.permute.xlu0 %1106
      %1108 = vrot.lane.b32.xlu0 %v920, 17
      %v1109 = vpop.permute.xlu0 %1108
      %1110 = vrot.lane.b32.xlu0 %v921, 17
      %v1111 = vpop.permute.xlu0 %1110
      %1112 = vrot.lane.b32.xlu0 %v922, 17
      %v1113 = vpop.permute.xlu0 %1112
      %1114 = vrot.lane.b32.xlu0 %v923, 17
      %v1115 = vpop.permute.xlu0 %1114
      %1116 = vrot.lane.b32.xlu0 %v924, 17
      %v1117 = vpop.permute.xlu0 %1116
      %v1134 = vsel %vm925, %v750, %v1039
      %v1135 = vsel %vm925, %v752, %v1041
      %v1136 = vsel %vm925, %v754, %v1043
      %v1137 = vsel %vm925, %v756, %v1045
      %v1138 = vsel %vm925, %v758, %v1047
      %v1139 = vsel %vm925, %v760, %v1049
      %v1140 = vsel %vm925, %v762, %v1051
      %v1141 = vsel %vm925, %v764, %v1053
      %v1142 = vsel %vm925, %v766, %v1055
      %v1143 = vsel %vm925, %v768, %v1057
      %v1144 = vsel %vm925, %v770, %v1059
      %v1145 = vsel %vm925, %v772, %v1061
      %v1146 = vsel %vm925, %v774, %v1063
      %v1147 = vsel %vm925, %v776, %v1065
      %v1148 = vsel %vm925, %v778, %v1067
      %v1149 = vsel %vm925, %v780, %v1069
      %vm1150 = vcmask 277504
      %v1151 = vsel %vm1150, %v1134, %v1087
      %v1152 = vsel %vm1150, %v1135, %v1089
      %v1153 = vsel %vm1150, %v1136, %v1091
      %v1154 = vsel %vm1150, %v1137, %v1093
      %v1155 = vsel %vm1150, %v1138, %v1095
      %v1156 = vsel %vm1150, %v1139, %v1097
      %v1157 = vsel %vm1150, %v1140, %v1099
      %v1158 = vsel %vm1150, %v1141, %v1101
      %v1159 = vsel %vm1150, %v1142, %v1103
      %v1160 = vsel %vm1150, %v1143, %v1105
      %v1161 = vsel %vm1150, %v1144, %v1107
      %v1162 = vsel %vm1150, %v1145, %v1109
      %v1163 = vsel %vm1150, %v1146, %v1111
      %v1164 = vsel %vm1150, %v1147, %v1113
      %v1165 = vsel %vm1150, %v1148, %v1115
      %v1166 = vsel %vm1150, %v1149, %v1117
      %v1167 = vpack.c.bf16 %v1152, %v1151
      %v1168 = vpack.c.bf16 %v1154, %v1153
      %v1169 = vpack.c.bf16 %v1156, %v1155
      %v1170 = vpack.c.bf16 %v1158, %v1157
      %v1171 = vpack.c.bf16 %v1160, %v1159
      %v1172 = vpack.c.bf16 %v1162, %v1161
      %v1173 = vpack.c.bf16 %v1164, %v1163
      %v1174 = vpack.c.bf16 %v1166, %v1165
      %v1175 = vld [vmem:[%s2] sm:$0xf]
      %v1176 = vld [vmem:[%s2 + $0x4] sm:$0xf]
      %v1177 = vld [vmem:[%s2 + $0x8] sm:$0xf]
      %v1178 = vld [vmem:[%s2 + $0xc] sm:$0xf]
      %v1179 = vld [vmem:[%s2 + $0x10] sm:$0xf]
      %v1180 = vld [vmem:[%s2 + $0x14] sm:$0xf]
      %v1181 = vld [vmem:[%s2 + $0x18] sm:$0x3]
      %v1182 = vld [vmem:[%s7] sm:$0x3]
      %v1184 = vperm.slane %v1182, 0
      %v1193 = vunpack.c.l.b16 %v1175
      %v1194 = vunpack.c.l.b16 %v1176
      %v1195 = vunpack.c.l.b16 %v1177
      %v1196 = vunpack.c.l.b16 %v1178
      %v1197 = vunpack.c.l.b16 %v1179
      %v1198 = vunpack.c.l.b16 %v1180
      %v1199 = vunpack.c.l.b16 %v1181
      %v1200 = vpack.c.b16 %v1194, %v1193
      %v1201 = vpack.c.b16 %v1196, %v1195
      %v1202 = vpack.c.b16 %v1198, %v1197
      %v1203 = vpack.c.b16 %v1199, %v1199
      %vm1207 = vcmask 416768
      %v1209 = vsel %vm1207, %v1167, 0
      %v1212 = vsel %vm1207, %v1168, 0
      %v1215 = vsel %vm1207, %v1169, 0
      %v1218 = vsel %vm1207, %v1170, 0
      %v1221 = vsel %vm1207, %v1171, 0
      %v1224 = vsel %vm1207, %v1172, 0
      %v1227 = vsel %vm1207, %v1173, 0
      %v1230 = vsel %vm1207, %v1174, 0
      %vm1232 = vcmask 1040384
      %vm1233 = vcmask 1041408
      %v1234 = vsel %vm1232, 4294967295, 65535
      %v1235 = vsel %vm1233, %v1234, 0
      %v1237 = vand.u32 %v1203, %v1235
      %1239 = vmatpush.bf16.msra.mxu0 0
      %1240 = vmatpush.bf16.msra.mxu0 0
      %1241 = vmatpush.bf16.msra.mxu0 0
      %1242 = vmatpush.bf16.msra.mxu0 0
      %1243 = vmatpush.bf16.msra.mxu0 %v1237
      %1244 = vmatpush.bf16.msra.mxu0 %v1202
      %1245 = vmatpush.bf16.msra.mxu0 %v1201
      %1246 = vmatpush.bf16.msra.mxu0 %v1200
      %1247 = vmatmul.bf16.gmra.mxu0 %v1209
      %v1248 = vpop.f32.mrf.mxu0
      %v1249 = vadd.f32 %v1184, %v1248
      %v1250 = vpop.f32.mrf.mxu0
      %v1251 = vadd.f32 %v1184, %v1250
      %1252 = vmatmul.bf16.gmra.mxu0 %v1212
      %v1253 = vpop.f32.mrf.mxu0
      %v1254 = vadd.f32 %v1184, %v1253
      %v1255 = vpop.f32.mrf.mxu0
      %v1256 = vadd.f32 %v1184, %v1255
      %1257 = vmatmul.bf16.gmra.mxu0 %v1215
      %v1258 = vpop.f32.mrf.mxu0
      %v1259 = vadd.f32 %v1184, %v1258
      %v1260 = vpop.f32.mrf.mxu0
      %v1261 = vadd.f32 %v1184, %v1260
      %1262 = vmatmul.bf16.gmra.mxu0 %v1218
      %v1263 = vpop.f32.mrf.mxu0
      %v1264 = vadd.f32 %v1184, %v1263
      %v1265 = vpop.f32.mrf.mxu0
      %v1266 = vadd.f32 %v1184, %v1265
      %1267 = vmatmul.bf16.gmra.mxu0 %v1221
      %v1268 = vpop.f32.mrf.mxu0
      %v1269 = vadd.f32 %v1184, %v1268
      %v1270 = vpop.f32.mrf.mxu0
      %v1271 = vadd.f32 %v1184, %v1270
      %1272 = vmatmul.bf16.gmra.mxu0 %v1224
      %v1273 = vpop.f32.mrf.mxu0
      %v1274 = vadd.f32 %v1184, %v1273
      %v1275 = vpop.f32.mrf.mxu0
      %v1276 = vadd.f32 %v1184, %v1275
      %1277 = vmatmul.bf16.gmra.mxu0 %v1227
      %v1278 = vpop.f32.mrf.mxu0
      %v1279 = vadd.f32 %v1184, %v1278
      %v1280 = vpop.f32.mrf.mxu0
      %v1281 = vadd.f32 %v1184, %v1280
      %1282 = vmatmul.bf16.gmra.mxu0 %v1230
      %v1283 = vpop.f32.mrf.mxu0
      %v1284 = vadd.f32 %v1184, %v1283
      %v1285 = vpop.f32.mrf.mxu0
      %v1286 = vadd.f32 %v1184, %v1285
      %1287 = vdwg.mxu0
      %vm1288 = vcmp.ge.f32.partialorder %v1249, 0.0
      %vm1289 = vcmp.ge.f32.partialorder %v1251, 0.0
      %vm1290 = vcmp.ge.f32.partialorder %v1254, 0.0
      %vm1291 = vcmp.ge.f32.partialorder %v1256, 0.0
      %vm1292 = vcmp.ge.f32.partialorder %v1259, 0.0
      %vm1293 = vcmp.ge.f32.partialorder %v1261, 0.0
      %vm1294 = vcmp.ge.f32.partialorder %v1264, 0.0
      %vm1295 = vcmp.ge.f32.partialorder %v1266, 0.0
      %vm1296 = vcmp.ge.f32.partialorder %v1269, 0.0
      %vm1297 = vcmp.ge.f32.partialorder %v1271, 0.0
      %vm1298 = vcmp.ge.f32.partialorder %v1274, 0.0
      %vm1299 = vcmp.ge.f32.partialorder %v1276, 0.0
      %vm1300 = vcmp.ge.f32.partialorder %v1279, 0.0
      %vm1301 = vcmp.ge.f32.partialorder %v1281, 0.0
      %vm1302 = vcmp.ge.f32.partialorder %v1284, 0.0
      %vm1303 = vcmp.ge.f32.partialorder %v1286, 0.0
      %v1304 = vmul.f32 %v1249, 0.25
      %v1305 = vmul.f32 %v1251, 0.25
      %v1306 = vmul.f32 %v1254, 0.25
      %v1307 = vmul.f32 %v1256, 0.25
      %v1308 = vmul.f32 %v1259, 0.25
      %v1309 = vmul.f32 %v1261, 0.25
      %v1310 = vmul.f32 %v1264, 0.25
      %v1311 = vmul.f32 %v1266, 0.25
      %v1312 = vmul.f32 %v1269, 0.25
      %v1313 = vmul.f32 %v1271, 0.25
      %v1314 = vmul.f32 %v1274, 0.25
      %v1315 = vmul.f32 %v1276, 0.25
      %v1316 = vmul.f32 %v1279, 0.25
      %v1317 = vmul.f32 %v1281, 0.25
      %v1318 = vmul.f32 %v1284, 0.25
      %v1319 = vmul.f32 %v1286, 0.25
      %v1320 = vsel %vm1288, %v1249, %v1304
      %v1321 = vsel %vm1289, %v1251, %v1305
      %v1322 = vsel %vm1290, %v1254, %v1306
      %v1323 = vsel %vm1291, %v1256, %v1307
      %v1324 = vsel %vm1292, %v1259, %v1308
      %v1325 = vsel %vm1293, %v1261, %v1309
      %v1326 = vsel %vm1294, %v1264, %v1310
      %v1327 = vsel %vm1295, %v1266, %v1311
      %v1328 = vsel %vm1296, %v1269, %v1312
      %v1329 = vsel %vm1297, %v1271, %v1313
      %v1330 = vsel %vm1298, %v1274, %v1314
      %v1331 = vsel %vm1299, %v1276, %v1315
      %v1332 = vsel %vm1300, %v1279, %v1316
      %v1333 = vsel %vm1301, %v1281, %v1317
      %v1334 = vsel %vm1302, %v1284, %v1318
      %v1335 = vsel %vm1303, %v1286, %v1319
      %1336 = vadd.xlane.f32.xlu0 %v1320
      %v1337 = vpop.xlane.xlu0 %1336
      %1338 = vadd.xlane.f32.xlu0 %v1321
      %v1339 = vpop.xlane.xlu0 %1338
      %1340 = vadd.xlane.f32.xlu0 %v1322
      %v1341 = vpop.xlane.xlu0 %1340
      %1342 = vadd.xlane.f32.xlu0 %v1323
      %v1343 = vpop.xlane.xlu0 %1342
      %1344 = vadd.xlane.f32.xlu0 %v1324
      %v1345 = vpop.xlane.xlu0 %1344
      %1346 = vadd.xlane.f32.xlu0 %v1325
      %v1347 = vpop.xlane.xlu0 %1346
      %1348 = vadd.xlane.f32.xlu0 %v1326
      %v1349 = vpop.xlane.xlu0 %1348
      %1350 = vadd.xlane.f32.xlu0 %v1327
      %v1351 = vpop.xlane.xlu0 %1350
      %1352 = vadd.xlane.f32.xlu0 %v1328
      %v1353 = vpop.xlane.xlu0 %1352
      %1354 = vadd.xlane.f32.xlu0 %v1329
      %v1355 = vpop.xlane.xlu0 %1354
      %1356 = vadd.xlane.f32.xlu0 %v1330
      %v1357 = vpop.xlane.xlu0 %1356
      %1358 = vadd.xlane.f32.xlu0 %v1331
      %v1359 = vpop.xlane.xlu0 %1358
      %1360 = vadd.xlane.f32.xlu0 %v1332
      %v1361 = vpop.xlane.xlu0 %1360
      %1362 = vadd.xlane.f32.xlu0 %v1333
      %v1363 = vpop.xlane.xlu0 %1362
      %1364 = vadd.xlane.f32.xlu0 %v1334
      %v1365 = vpop.xlane.xlu0 %1364
      %1366 = vadd.xlane.f32.xlu0 %v1335
      %v1367 = vpop.xlane.xlu0 %1366
      %v1368 = vrcp.pop 128.0
      %v1369 = vmul.f32 128.0, %v1368
      %v1370 = vsub.f32 1.0, %v1369
      %v1371 = vmul.f32 %v1368, %v1370
      %v1372 = vadd.f32 %v1368, %v1371
      %vm1373 = vweird.f32 %v1368
      %v1374 = vsel %vm1373, %v1368, %v1372
      %v1375 = vmul.f32 %v1337, %v1374
      %v1376 = vmul.f32 %v1339, %v1374
      %v1377 = vmul.f32 %v1341, %v1374
      %v1378 = vmul.f32 %v1343, %v1374
      %v1379 = vmul.f32 %v1345, %v1374
      %v1380 = vmul.f32 %v1347, %v1374
      %v1381 = vmul.f32 %v1349, %v1374
      %v1382 = vmul.f32 %v1351, %v1374
      %v1383 = vmul.f32 %v1353, %v1374
      %v1384 = vmul.f32 %v1355, %v1374
      %v1385 = vmul.f32 %v1357, %v1374
      %v1386 = vmul.f32 %v1359, %v1374
      %v1387 = vmul.f32 %v1361, %v1374
      %v1388 = vmul.f32 %v1363, %v1374
      %v1389 = vmul.f32 %v1365, %v1374
      %v1390 = vmul.f32 %v1367, %v1374
      %v1391 = vsub.f32 %v1320, %v1375
      %v1392 = vsub.f32 %v1321, %v1376
      %v1393 = vsub.f32 %v1322, %v1377
      %v1394 = vsub.f32 %v1323, %v1378
      %v1395 = vsub.f32 %v1324, %v1379
      %v1396 = vsub.f32 %v1325, %v1380
      %v1397 = vsub.f32 %v1326, %v1381
      %v1398 = vsub.f32 %v1327, %v1382
      %v1399 = vsub.f32 %v1328, %v1383
      %v1400 = vsub.f32 %v1329, %v1384
      %v1401 = vsub.f32 %v1330, %v1385
      %v1402 = vsub.f32 %v1331, %v1386
      %v1403 = vsub.f32 %v1332, %v1387
      %v1404 = vsub.f32 %v1333, %v1388
      %v1405 = vsub.f32 %v1334, %v1389
      %v1406 = vsub.f32 %v1335, %v1390
      %v1407 = vmul.f32 %v1391, %v1391
      %v1408 = vmul.f32 %v1392, %v1392
      %v1409 = vmul.f32 %v1393, %v1393
      %v1410 = vmul.f32 %v1394, %v1394
      %v1411 = vmul.f32 %v1395, %v1395
      %v1412 = vmul.f32 %v1396, %v1396
      %v1413 = vmul.f32 %v1397, %v1397
      %v1414 = vmul.f32 %v1398, %v1398
      %v1415 = vmul.f32 %v1399, %v1399
      %v1416 = vmul.f32 %v1400, %v1400
      %v1417 = vmul.f32 %v1401, %v1401
      %v1418 = vmul.f32 %v1402, %v1402
      %v1419 = vmul.f32 %v1403, %v1403
      %v1420 = vmul.f32 %v1404, %v1404
      %v1421 = vmul.f32 %v1405, %v1405
      %v1422 = vmul.f32 %v1406, %v1406
      %1423 = vadd.xlane.f32.xlu0 %v1407
      %v1424 = vpop.xlane.xlu0 %1423
      %1425 = vadd.xlane.f32.xlu0 %v1408
      %v1426 = vpop.xlane.xlu0 %1425
      %1427 = vadd.xlane.f32.xlu0 %v1409
      %v1428 = vpop.xlane.xlu0 %1427
      %1429 = vadd.xlane.f32.xlu0 %v1410
      %v1430 = vpop.xlane.xlu0 %1429
      %1431 = vadd.xlane.f32.xlu0 %v1411
      %v1432 = vpop.xlane.xlu0 %1431
      %1433 = vadd.xlane.f32.xlu0 %v1412
      %v1434 = vpop.xlane.xlu0 %1433
      %1435 = vadd.xlane.f32.xlu0 %v1413
      %v1436 = vpop.xlane.xlu0 %1435
      %1437 = vadd.xlane.f32.xlu0 %v1414
      %v1438 = vpop.xlane.xlu0 %1437
      %1439 = vadd.xlane.f32.xlu0 %v1415
      %v1440 = vpop.xlane.xlu0 %1439
      %1441 = vadd.xlane.f32.xlu0 %v1416
      %v1442 = vpop.xlane.xlu0 %1441
      %1443 = vadd.xlane.f32.xlu0 %v1417
      %v1444 = vpop.xlane.xlu0 %1443
      %1445 = vadd.xlane.f32.xlu0 %v1418
      %v1446 = vpop.xlane.xlu0 %1445
      %1447 = vadd.xlane.f32.xlu0 %v1419
      %v1448 = vpop.xlane.xlu0 %1447
      %1449 = vadd.xlane.f32.xlu0 %v1420
      %v1450 = vpop.xlane.xlu0 %1449
      %1451 = vadd.xlane.f32.xlu0 %v1421
      %v1452 = vpop.xlane.xlu0 %1451
      %1453 = vadd.xlane.f32.xlu0 %v1422
      %v1454 = vpop.xlane.xlu0 %1453
      %v1455 = vmul.f32 %v1424, %v1374
      %v1456 = vmul.f32 %v1426, %v1374
      %v1457 = vmul.f32 %v1428, %v1374
      %v1458 = vmul.f32 %v1430, %v1374
      %v1459 = vmul.f32 %v1432, %v1374
      %v1460 = vmul.f32 %v1434, %v1374
      %v1461 = vmul.f32 %v1436, %v1374
      %v1462 = vmul.f32 %v1438, %v1374
      %v1463 = vmul.f32 %v1440, %v1374
      %v1464 = vmul.f32 %v1442, %v1374
      %v1465 = vmul.f32 %v1444, %v1374
      %v1466 = vmul.f32 %v1446, %v1374
      %v1467 = vmul.f32 %v1448, %v1374
      %v1468 = vmul.f32 %v1450, %v1374
      %v1469 = vmul.f32 %v1452, %v1374
      %v1470 = vmul.f32 %v1454, %v1374
      %v1471 = vadd.f32 %v1455, 1e-05
      %v1472 = vadd.f32 %v1456, 1e-05
      %v1473 = vadd.f32 %v1457, 1e-05
      %v1474 = vadd.f32 %v1458, 1e-05
      %v1475 = vadd.f32 %v1459, 1e-05
      %v1476 = vadd.f32 %v1460, 1e-05
      %v1477 = vadd.f32 %v1461, 1e-05
      %v1478 = vadd.f32 %v1462, 1e-05
      %v1479 = vadd.f32 %v1463, 1e-05
      %v1480 = vadd.f32 %v1464, 1e-05
      %v1481 = vadd.f32 %v1465, 1e-05
      %v1482 = vadd.f32 %v1466, 1e-05
      %v1483 = vadd.f32 %v1467, 1e-05
      %v1484 = vadd.f32 %v1468, 1e-05
      %v1485 = vadd.f32 %v1469, 1e-05
      %v1486 = vadd.f32 %v1470, 1e-05
      %v1487 = vrsqrt.pop %v1471
      %v1488 = vmul.f32 %v1487, %v1471
      %v1489 = vmul.f32 %v1488, %v1487
      %v1490 = vmul.f32 0.5, %v1489
      %v1491 = vsub.f32 1.5, %v1490
      %v1492 = vmul.f32 %v1487, %v1491
      %vm1493 = vweird.f32 %v1471
      %vm1494 = vweird.f32 %v1487
      %vm1495 = vmor %vm1493, %vm1494
      %v1496 = vsel %vm1495, %v1487, %v1492
      %v1497 = vrsqrt.pop %v1472
      %v1498 = vmul.f32 %v1497, %v1472
      %v1499 = vmul.f32 %v1498, %v1497
      %v1500 = vmul.f32 0.5, %v1499
      %v1501 = vsub.f32 1.5, %v1500
      %v1502 = vmul.f32 %v1497, %v1501
      %vm1503 = vweird.f32 %v1472
      %vm1504 = vweird.f32 %v1497
      %vm1505 = vmor %vm1503, %vm1504
      %v1506 = vsel %vm1505, %v1497, %v1502
      %v1507 = vrsqrt.pop %v1473
      %v1508 = vmul.f32 %v1507, %v1473
      %v1509 = vmul.f32 %v1508, %v1507
      %v1510 = vmul.f32 0.5, %v1509
      %v1511 = vsub.f32 1.5, %v1510
      %v1512 = vmul.f32 %v1507, %v1511
      %vm1513 = vweird.f32 %v1473
      %vm1514 = vweird.f32 %v1507
      %vm1515 = vmor %vm1513, %vm1514
      %v1516 = vsel %vm1515, %v1507, %v1512
      %v1517 = vrsqrt.pop %v1474
      %v1518 = vmul.f32 %v1517, %v1474
      %v1519 = vmul.f32 %v1518, %v1517
      %v1520 = vmul.f32 0.5, %v1519
      %v1521 = vsub.f32 1.5, %v1520
      %v1522 = vmul.f32 %v1517, %v1521
      %vm1523 = vweird.f32 %v1474
      %vm1524 = vweird.f32 %v1517
      %vm1525 = vmor %vm1523, %vm1524
      %v1526 = vsel %vm1525, %v1517, %v1522
      %v1527 = vrsqrt.pop %v1475
      %v1528 = vmul.f32 %v1527, %v1475
      %v1529 = vmul.f32 %v1528, %v1527
      %v1530 = vmul.f32 0.5, %v1529
      %v1531 = vsub.f32 1.5, %v1530
      %v1532 = vmul.f32 %v1527, %v1531
      %vm1533 = vweird.f32 %v1475
      %vm1534 = vweird.f32 %v1527
      %vm1535 = vmor %vm1533, %vm1534
      %v1536 = vsel %vm1535, %v1527, %v1532
      %v1537 = vrsqrt.pop %v1476
      %v1538 = vmul.f32 %v1537, %v1476
      %v1539 = vmul.f32 %v1538, %v1537
      %v1540 = vmul.f32 0.5, %v1539
      %v1541 = vsub.f32 1.5, %v1540
      %v1542 = vmul.f32 %v1537, %v1541
      %vm1543 = vweird.f32 %v1476
      %vm1544 = vweird.f32 %v1537
      %vm1545 = vmor %vm1543, %vm1544
      %v1546 = vsel %vm1545, %v1537, %v1542
      %v1547 = vrsqrt.pop %v1477
      %v1548 = vmul.f32 %v1547, %v1477
      %v1549 = vmul.f32 %v1548, %v1547
      %v1550 = vmul.f32 0.5, %v1549
      %v1551 = vsub.f32 1.5, %v1550
      %v1552 = vmul.f32 %v1547, %v1551
      %vm1553 = vweird.f32 %v1477
      %vm1554 = vweird.f32 %v1547
      %vm1555 = vmor %vm1553, %vm1554
      %v1556 = vsel %vm1555, %v1547, %v1552
      %v1557 = vrsqrt.pop %v1478
      %v1558 = vmul.f32 %v1557, %v1478
      %v1559 = vmul.f32 %v1558, %v1557
      %v1560 = vmul.f32 0.5, %v1559
      %v1561 = vsub.f32 1.5, %v1560
      %v1562 = vmul.f32 %v1557, %v1561
      %vm1563 = vweird.f32 %v1478
      %vm1564 = vweird.f32 %v1557
      %vm1565 = vmor %vm1563, %vm1564
      %v1566 = vsel %vm1565, %v1557, %v1562
      %v1567 = vrsqrt.pop %v1479
      %v1568 = vmul.f32 %v1567, %v1479
      %v1569 = vmul.f32 %v1568, %v1567
      %v1570 = vmul.f32 0.5, %v1569
      %v1571 = vsub.f32 1.5, %v1570
      %v1572 = vmul.f32 %v1567, %v1571
      %vm1573 = vweird.f32 %v1479
      %vm1574 = vweird.f32 %v1567
      %vm1575 = vmor %vm1573, %vm1574
      %v1576 = vsel %vm1575, %v1567, %v1572
      %v1577 = vrsqrt.pop %v1480
      %v1578 = vmul.f32 %v1577, %v1480
      %v1579 = vmul.f32 %v1578, %v1577
      %v1580 = vmul.f32 0.5, %v1579
      %v1581 = vsub.f32 1.5, %v1580
      %v1582 = vmul.f32 %v1577, %v1581
      %vm1583 = vweird.f32 %v1480
      %vm1584 = vweird.f32 %v1577
      %vm1585 = vmor %vm1583, %vm1584
      %v1586 = vsel %vm1585, %v1577, %v1582
      %v1587 = vrsqrt.pop %v1481
      %v1588 = vmul.f32 %v1587, %v1481
      %v1589 = vmul.f32 %v1588, %v1587
      %v1590 = vmul.f32 0.5, %v1589
      %v1591 = vsub.f32 1.5, %v1590
      %v1592 = vmul.f32 %v1587, %v1591
      %vm1593 = vweird.f32 %v1481
      %vm1594 = vweird.f32 %v1587
      %vm1595 = vmor %vm1593, %vm1594
      %v1596 = vsel %vm1595, %v1587, %v1592
      %v1597 = vrsqrt.pop %v1482
      %v1598 = vmul.f32 %v1597, %v1482
      %v1599 = vmul.f32 %v1598, %v1597
      %v1600 = vmul.f32 0.5, %v1599
      %v1601 = vsub.f32 1.5, %v1600
      %v1602 = vmul.f32 %v1597, %v1601
      %vm1603 = vweird.f32 %v1482
      %vm1604 = vweird.f32 %v1597
      %vm1605 = vmor %vm1603, %vm1604
      %v1606 = vsel %vm1605, %v1597, %v1602
      %v1607 = vrsqrt.pop %v1483
      %v1608 = vmul.f32 %v1607, %v1483
      %v1609 = vmul.f32 %v1608, %v1607
      %v1610 = vmul.f32 0.5, %v1609
      %v1611 = vsub.f32 1.5, %v1610
      %v1612 = vmul.f32 %v1607, %v1611
      %vm1613 = vweird.f32 %v1483
      %vm1614 = vweird.f32 %v1607
      %vm1615 = vmor %vm1613, %vm1614
      %v1616 = vsel %vm1615, %v1607, %v1612
      %v1617 = vrsqrt.pop %v1484
      %v1618 = vmul.f32 %v1617, %v1484
      %v1619 = vmul.f32 %v1618, %v1617
      %v1620 = vmul.f32 0.5, %v1619
      %v1621 = vsub.f32 1.5, %v1620
      %v1622 = vmul.f32 %v1617, %v1621
      %vm1623 = vweird.f32 %v1484
      %vm1624 = vweird.f32 %v1617
      %vm1625 = vmor %vm1623, %vm1624
      %v1626 = vsel %vm1625, %v1617, %v1622
      %v1627 = vrsqrt.pop %v1485
      %v1628 = vmul.f32 %v1627, %v1485
      %v1629 = vmul.f32 %v1628, %v1627
      %v1630 = vmul.f32 0.5, %v1629
      %v1631 = vsub.f32 1.5, %v1630
      %v1632 = vmul.f32 %v1627, %v1631
      %vm1633 = vweird.f32 %v1485
      %vm1634 = vweird.f32 %v1627
      %vm1635 = vmor %vm1633, %vm1634
      %v1636 = vsel %vm1635, %v1627, %v1632
      %v1637 = vrsqrt.pop %v1486
      %v1638 = vmul.f32 %v1637, %v1486
      %v1639 = vmul.f32 %v1638, %v1637
      %v1640 = vmul.f32 0.5, %v1639
      %v1641 = vsub.f32 1.5, %v1640
      %v1642 = vmul.f32 %v1637, %v1641
      %vm1643 = vweird.f32 %v1486
      %vm1644 = vweird.f32 %v1637
      %vm1645 = vmor %vm1643, %vm1644
      %v1646 = vsel %vm1645, %v1637, %v1642
      %v1647 = vmul.f32 %v1391, %v1496
      %v1648 = vmul.f32 %v1392, %v1506
      %v1649 = vmul.f32 %v1393, %v1516
      %v1650 = vmul.f32 %v1394, %v1526
      %v1651 = vmul.f32 %v1395, %v1536
      %v1652 = vmul.f32 %v1396, %v1546
      %v1653 = vmul.f32 %v1397, %v1556
      %v1654 = vmul.f32 %v1398, %v1566
      %v1655 = vmul.f32 %v1399, %v1576
      %v1656 = vmul.f32 %v1400, %v1586
      %v1657 = vmul.f32 %v1401, %v1596
      %v1658 = vmul.f32 %v1402, %v1606
      %v1659 = vmul.f32 %v1403, %v1616
      %v1660 = vmul.f32 %v1404, %v1626
      %v1661 = vmul.f32 %v1405, %v1636
      %v1662 = vmul.f32 %v1406, %v1646
      %s1663 = scalar_lea.vmem %s7, 2
      %v1664 = vld [vmem:[%s1663] sm:$0x3]
      %v1666 = vperm.slane %v1664, 0
      %v1668 = vmul.f32 %v1647, %v1666
      %v1669 = vmul.f32 %v1648, %v1666
      %v1670 = vmul.f32 %v1649, %v1666
      %v1671 = vmul.f32 %v1650, %v1666
      %v1672 = vmul.f32 %v1651, %v1666
      %v1673 = vmul.f32 %v1652, %v1666
      %v1674 = vmul.f32 %v1653, %v1666
      %v1675 = vmul.f32 %v1654, %v1666
      %v1676 = vmul.f32 %v1655, %v1666
      %v1677 = vmul.f32 %v1656, %v1666
      %v1678 = vmul.f32 %v1657, %v1666
      %v1679 = vmul.f32 %v1658, %v1666
      %v1680 = vmul.f32 %v1659, %v1666
      %v1681 = vmul.f32 %v1660, %v1666
      %v1682 = vmul.f32 %v1661, %v1666
      %v1683 = vmul.f32 %v1662, %v1666
      %s1684 = scalar_lea.vmem %s7, 4
      %v1685 = vld [vmem:[%s1684] sm:$0x3]
      %v1687 = vperm.slane %v1685, 0
      %v1689 = vadd.f32 %v1668, %v1687
      %v1690 = vadd.f32 %v1669, %v1687
      %v1691 = vadd.f32 %v1670, %v1687
      %v1692 = vadd.f32 %v1671, %v1687
      %v1693 = vadd.f32 %v1672, %v1687
      %v1694 = vadd.f32 %v1673, %v1687
      %v1695 = vadd.f32 %v1674, %v1687
      %v1696 = vadd.f32 %v1675, %v1687
      %v1697 = vadd.f32 %v1676, %v1687
      %v1698 = vadd.f32 %v1677, %v1687
      %v1699 = vadd.f32 %v1678, %v1687
      %v1700 = vadd.f32 %v1679, %v1687
      %v1701 = vadd.f32 %v1680, %v1687
      %v1702 = vadd.f32 %v1681, %v1687
      %v1703 = vadd.f32 %v1682, %v1687
      %v1704 = vadd.f32 %v1683, %v1687
      %v1705 = vpack.c.bf16 %v1690, %v1689
      %v1706 = vpack.c.bf16 %v1692, %v1691
      %v1707 = vpack.c.bf16 %v1694, %v1693
      %v1708 = vpack.c.bf16 %v1696, %v1695
      %v1709 = vpack.c.bf16 %v1698, %v1697
      %v1710 = vpack.c.bf16 %v1700, %v1699
      %v1711 = vpack.c.bf16 %v1702, %v1701
      %v1712 = vpack.c.bf16 %v1704, %v1703
      %v1713 = vld [vmem:[%s3] sm:$0xff]
      %v1714 = vld [vmem:[%s3 + $0x8] sm:$0xff]
      %v1715 = vld [vmem:[%s3 + $0x10] sm:$0xff]
      %v1716 = vld [vmem:[%s3 + $0x18] sm:$0xff]
      %v1717 = vld [vmem:[%s3 + $0x20] sm:$0xff]
      %v1718 = vld [vmem:[%s3 + $0x28] sm:$0xff]
      %v1719 = vld [vmem:[%s3 + $0x30] sm:$0xff]
      %v1720 = vld [vmem:[%s3 + $0x38] sm:$0xff]
      %v1721 = vld [vmem:[%s3 + $0x40] sm:$0xff]
      %v1722 = vld [vmem:[%s3 + $0x48] sm:$0xff]
      %v1723 = vld [vmem:[%s3 + $0x50] sm:$0xff]
      %v1724 = vld [vmem:[%s3 + $0x58] sm:$0xff]
      %v1725 = vld [vmem:[%s3 + $0x60] sm:$0xff]
      %v1726 = vld [vmem:[%s3 + $0x68] sm:$0xff]
      %v1727 = vld [vmem:[%s3 + $0x70] sm:$0xff]
      %v1728 = vld [vmem:[%s3 + $0x78] sm:$0xff]
      %s1729 = scalar_lea.vmem %s7, 6
      %v1730 = vld [vmem:[%s1729] sm:$0x3]
      %v1732 = vperm.slane %v1730, 0
      %v1733 = vperm.slane %v1730, 1
      %v1752 = vunpack.c.l.b16 %v1713
      %v1753 = vunpack.c.h.b16 %v1713
      %v1754 = vunpack.c.l.b16 %v1714
      %v1755 = vunpack.c.h.b16 %v1714
      %v1756 = vunpack.c.l.b16 %v1715
      %v1757 = vunpack.c.h.b16 %v1715
      %v1758 = vunpack.c.l.b16 %v1716
      %v1759 = vunpack.c.h.b16 %v1716
      %v1760 = vunpack.c.l.b16 %v1717
      %v1761 = vunpack.c.h.b16 %v1717
      %v1762 = vunpack.c.l.b16 %v1718
      %v1763 = vunpack.c.h.b16 %v1718
      %v1764 = vunpack.c.l.b16 %v1719
      %v1765 = vunpack.c.h.b16 %v1719
      %v1766 = vunpack.c.l.b16 %v1720
      %v1767 = vunpack.c.h.b16 %v1720
      %v1768 = vunpack.c.l.b16 %v1721
      %v1769 = vunpack.c.h.b16 %v1721
      %v1770 = vunpack.c.l.b16 %v1722
      %v1771 = vunpack.c.h.b16 %v1722
      %v1772 = vunpack.c.l.b16 %v1723
      %v1773 = vunpack.c.h.b16 %v1723
      %v1774 = vunpack.c.l.b16 %v1724
      %v1775 = vunpack.c.h.b16 %v1724
      %v1776 = vunpack.c.l.b16 %v1725
      %v1777 = vunpack.c.h.b16 %v1725
      %v1778 = vunpack.c.l.b16 %v1726
      %v1779 = vunpack.c.h.b16 %v1726
      %v1780 = vunpack.c.l.b16 %v1727
      %v1781 = vunpack.c.h.b16 %v1727
      %v1782 = vunpack.c.l.b16 %v1728
      %v1783 = vunpack.c.h.b16 %v1728
      %v1784 = vpack.c.b16 %v1754, %v1752
      %v1785 = vpack.c.b16 %v1755, %v1753
      %v1786 = vpack.c.b16 %v1758, %v1756
      %v1787 = vpack.c.b16 %v1759, %v1757
      %v1788 = vpack.c.b16 %v1762, %v1760
      %v1789 = vpack.c.b16 %v1763, %v1761
      %v1790 = vpack.c.b16 %v1766, %v1764
      %v1791 = vpack.c.b16 %v1767, %v1765
      %v1792 = vpack.c.b16 %v1770, %v1768
      %v1793 = vpack.c.b16 %v1771, %v1769
      %v1794 = vpack.c.b16 %v1774, %v1772
      %v1795 = vpack.c.b16 %v1775, %v1773
      %v1796 = vpack.c.b16 %v1778, %v1776
      %v1797 = vpack.c.b16 %v1779, %v1777
      %v1798 = vpack.c.b16 %v1782, %v1780
      %v1799 = vpack.c.b16 %v1783, %v1781
      %1816 = vmatpush.bf16.msra.mxu0 %v1798
      %1817 = vmatpush.bf16.msra.mxu0 %v1796
      %1818 = vmatpush.bf16.msra.mxu0 %v1794
      %1819 = vmatpush.bf16.msra.mxu0 %v1792
      %1820 = vmatpush.bf16.msra.mxu0 %v1790
      %1821 = vmatpush.bf16.msra.mxu0 %v1788
      %1822 = vmatpush.bf16.msra.mxu0 %v1786
      %1823 = vmatpush.bf16.msra.mxu0 %v1784
      %1824 = vmatmul.bf16.gmra.mxu0 %v1705
      %v1825 = vpop.f32.mrf.mxu0
      %v1826 = vadd.f32 %v1732, %v1825
      %v1827 = vpop.f32.mrf.mxu0
      %v1828 = vadd.f32 %v1732, %v1827
      %1829 = vmatmul.bf16.gmra.mxu0 %v1706
      %v1830 = vpop.f32.mrf.mxu0
      %v1831 = vadd.f32 %v1732, %v1830
      %v1832 = vpop.f32.mrf.mxu0
      %v1833 = vadd.f32 %v1732, %v1832
      %1834 = vmatmul.bf16.gmra.mxu0 %v1707
      %v1835 = vpop.f32.mrf.mxu0
      %v1836 = vadd.f32 %v1732, %v1835
      %v1837 = vpop.f32.mrf.mxu0
      %v1838 = vadd.f32 %v1732, %v1837
      %1839 = vmatmul.bf16.gmra.mxu0 %v1708
      %v1840 = vpop.f32.mrf.mxu0
      %v1841 = vadd.f32 %v1732, %v1840
      %v1842 = vpop.f32.mrf.mxu0
      %v1843 = vadd.f32 %v1732, %v1842
      %1844 = vmatmul.bf16.gmra.mxu0 %v1709
      %v1845 = vpop.f32.mrf.mxu0
      %v1846 = vadd.f32 %v1732, %v1845
      %v1847 = vpop.f32.mrf.mxu0
      %v1848 = vadd.f32 %v1732, %v1847
      %1849 = vmatmul.bf16.gmra.mxu0 %v1710
      %v1850 = vpop.f32.mrf.mxu0
      %v1851 = vadd.f32 %v1732, %v1850
      %v1852 = vpop.f32.mrf.mxu0
      %v1853 = vadd.f32 %v1732, %v1852
      %1854 = vmatmul.bf16.gmra.mxu0 %v1711
      %v1855 = vpop.f32.mrf.mxu0
      %v1856 = vadd.f32 %v1732, %v1855
      %v1857 = vpop.f32.mrf.mxu0
      %v1858 = vadd.f32 %v1732, %v1857
      %1859 = vmatmul.bf16.gmra.mxu0 %v1712
      %v1860 = vpop.f32.mrf.mxu0
      %v1861 = vadd.f32 %v1732, %v1860
      %v1862 = vpop.f32.mrf.mxu0
      %v1863 = vadd.f32 %v1732, %v1862
      %1864 = vdwg.mxu0
      %1865 = vmatpush.bf16.msra.mxu0 %v1799
      %1866 = vmatpush.bf16.msra.mxu0 %v1797
      %1867 = vmatpush.bf16.msra.mxu0 %v1795
      %1868 = vmatpush.bf16.msra.mxu0 %v1793
      %1869 = vmatpush.bf16.msra.mxu0 %v1791
      %1870 = vmatpush.bf16.msra.mxu0 %v1789
      %1871 = vmatpush.bf16.msra.mxu0 %v1787
      %1872 = vmatpush.bf16.msra.mxu0 %v1785
      %1873 = vmatmul.bf16.gmra.mxu0 %v1705
      %v1874 = vpop.f32.mrf.mxu0
      %v1875 = vadd.f32 %v1733, %v1874
      %v1876 = vpop.f32.mrf.mxu0
      %v1877 = vadd.f32 %v1733, %v1876
      %1878 = vmatmul.bf16.gmra.mxu0 %v1706
      %v1879 = vpop.f32.mrf.mxu0
      %v1880 = vadd.f32 %v1733, %v1879
      %v1881 = vpop.f32.mrf.mxu0
      %v1882 = vadd.f32 %v1733, %v1881
      %1883 = vmatmul.bf16.gmra.mxu0 %v1707
      %v1884 = vpop.f32.mrf.mxu0
      %v1885 = vadd.f32 %v1733, %v1884
      %v1886 = vpop.f32.mrf.mxu0
      %v1887 = vadd.f32 %v1733, %v1886
      %1888 = vmatmul.bf16.gmra.mxu0 %v1708
      %v1889 = vpop.f32.mrf.mxu0
      %v1890 = vadd.f32 %v1733, %v1889
      %v1891 = vpop.f32.mrf.mxu0
      %v1892 = vadd.f32 %v1733, %v1891
      %1893 = vmatmul.bf16.gmra.mxu0 %v1709
      %v1894 = vpop.f32.mrf.mxu0
      %v1895 = vadd.f32 %v1733, %v1894
      %v1896 = vpop.f32.mrf.mxu0
      %v1897 = vadd.f32 %v1733, %v1896
      %1898 = vmatmul.bf16.gmra.mxu0 %v1710
      %v1899 = vpop.f32.mrf.mxu0
      %v1900 = vadd.f32 %v1733, %v1899
      %v1901 = vpop.f32.mrf.mxu0
      %v1902 = vadd.f32 %v1733, %v1901
      %1903 = vmatmul.bf16.gmra.mxu0 %v1711
      %v1904 = vpop.f32.mrf.mxu0
      %v1905 = vadd.f32 %v1733, %v1904
      %v1906 = vpop.f32.mrf.mxu0
      %v1907 = vadd.f32 %v1733, %v1906
      %1908 = vmatmul.bf16.gmra.mxu0 %v1712
      %v1909 = vpop.f32.mrf.mxu0
      %v1910 = vadd.f32 %v1733, %v1909
      %v1911 = vpop.f32.mrf.mxu0
      %v1912 = vadd.f32 %v1733, %v1911
      %1913 = vdwg.mxu0
      %v1914 = vmul.f32 %v1826, %v1826
      %v1915 = vmul.f32 %v1875, %v1875
      %v1916 = vmul.f32 %v1828, %v1828
      %v1917 = vmul.f32 %v1877, %v1877
      %v1918 = vmul.f32 %v1831, %v1831
      %v1919 = vmul.f32 %v1880, %v1880
      %v1920 = vmul.f32 %v1833, %v1833
      %v1921 = vmul.f32 %v1882, %v1882
      %v1922 = vmul.f32 %v1836, %v1836
      %v1923 = vmul.f32 %v1885, %v1885
      %v1924 = vmul.f32 %v1838, %v1838
      %v1925 = vmul.f32 %v1887, %v1887
      %v1926 = vmul.f32 %v1841, %v1841
      %v1927 = vmul.f32 %v1890, %v1890
      %v1928 = vmul.f32 %v1843, %v1843
      %v1929 = vmul.f32 %v1892, %v1892
      %v1930 = vmul.f32 %v1846, %v1846
      %v1931 = vmul.f32 %v1895, %v1895
      %v1932 = vmul.f32 %v1848, %v1848
      %v1933 = vmul.f32 %v1897, %v1897
      %v1934 = vmul.f32 %v1851, %v1851
      %v1935 = vmul.f32 %v1900, %v1900
      %v1936 = vmul.f32 %v1853, %v1853
      %v1937 = vmul.f32 %v1902, %v1902
      %v1938 = vmul.f32 %v1856, %v1856
      %v1939 = vmul.f32 %v1905, %v1905
      %v1940 = vmul.f32 %v1858, %v1858
      %v1941 = vmul.f32 %v1907, %v1907
      %v1942 = vmul.f32 %v1861, %v1861
      %v1943 = vmul.f32 %v1910, %v1910
      %v1944 = vmul.f32 %v1863, %v1863
      %v1945 = vmul.f32 %v1912, %v1912
      %v1946 = vmul.f32 %v1826, %v1914
      %v1947 = vmul.f32 %v1875, %v1915
      %v1948 = vmul.f32 %v1828, %v1916
      %v1949 = vmul.f32 %v1877, %v1917
      %v1950 = vmul.f32 %v1831, %v1918
      %v1951 = vmul.f32 %v1880, %v1919
      %v1952 = vmul.f32 %v1833, %v1920
      %v1953 = vmul.f32 %v1882, %v1921
      %v1954 = vmul.f32 %v1836, %v1922
      %v1955 = vmul.f32 %v1885, %v1923
      %v1956 = vmul.f32 %v1838, %v1924
      %v1957 = vmul.f32 %v1887, %v1925
      %v1958 = vmul.f32 %v1841, %v1926
      %v1959 = vmul.f32 %v1890, %v1927
      %v1960 = vmul.f32 %v1843, %v1928
      %v1961 = vmul.f32 %v1892, %v1929
      %v1962 = vmul.f32 %v1846, %v1930
      %v1963 = vmul.f32 %v1895, %v1931
      %v1964 = vmul.f32 %v1848, %v1932
      %v1965 = vmul.f32 %v1897, %v1933
      %v1966 = vmul.f32 %v1851, %v1934
      %v1967 = vmul.f32 %v1900, %v1935
      %v1968 = vmul.f32 %v1853, %v1936
      %v1969 = vmul.f32 %v1902, %v1937
      %v1970 = vmul.f32 %v1856, %v1938
      %v1971 = vmul.f32 %v1905, %v1939
      %v1972 = vmul.f32 %v1858, %v1940
      %v1973 = vmul.f32 %v1907, %v1941
      %v1974 = vmul.f32 %v1861, %v1942
      %v1975 = vmul.f32 %v1910, %v1943
      %v1976 = vmul.f32 %v1863, %v1944
      %v1977 = vmul.f32 %v1912, %v1945
      %v1978 = vmul.f32 %v1946, 0.044715
      %v1979 = vmul.f32 %v1947, 0.044715
      %v1980 = vmul.f32 %v1948, 0.044715
      %v1981 = vmul.f32 %v1949, 0.044715
      %v1982 = vmul.f32 %v1950, 0.044715
      %v1983 = vmul.f32 %v1951, 0.044715
      %v1984 = vmul.f32 %v1952, 0.044715
      %v1985 = vmul.f32 %v1953, 0.044715
      %v1986 = vmul.f32 %v1954, 0.044715
      %v1987 = vmul.f32 %v1955, 0.044715
      %v1988 = vmul.f32 %v1956, 0.044715
      %v1989 = vmul.f32 %v1957, 0.044715
      %v1990 = vmul.f32 %v1958, 0.044715
      %v1991 = vmul.f32 %v1959, 0.044715
      %v1992 = vmul.f32 %v1960, 0.044715
      %v1993 = vmul.f32 %v1961, 0.044715
      %v1994 = vmul.f32 %v1962, 0.044715
      %v1995 = vmul.f32 %v1963, 0.044715
      %v1996 = vmul.f32 %v1964, 0.044715
      %v1997 = vmul.f32 %v1965, 0.044715
      %v1998 = vmul.f32 %v1966, 0.044715
      %v1999 = vmul.f32 %v1967, 0.044715
      %v2000 = vmul.f32 %v1968, 0.044715
      %v2001 = vmul.f32 %v1969, 0.044715
      %v2002 = vmul.f32 %v1970, 0.044715
      %v2003 = vmul.f32 %v1971, 0.044715
      %v2004 = vmul.f32 %v1972, 0.044715
      %v2005 = vmul.f32 %v1973, 0.044715
      %v2006 = vmul.f32 %v1974, 0.044715
      %v2007 = vmul.f32 %v1975, 0.044715
      %v2008 = vmul.f32 %v1976, 0.044715
      %v2009 = vmul.f32 %v1977, 0.044715
      %v2010 = vadd.f32 %v1826, %v1978
      %v2011 = vadd.f32 %v1875, %v1979
      %v2012 = vadd.f32 %v1828, %v1980
      %v2013 = vadd.f32 %v1877, %v1981
      %v2014 = vadd.f32 %v1831, %v1982
      %v2015 = vadd.f32 %v1880, %v1983
      %v2016 = vadd.f32 %v1833, %v1984
      %v2017 = vadd.f32 %v1882, %v1985
      %v2018 = vadd.f32 %v1836, %v1986
      %v2019 = vadd.f32 %v1885, %v1987
      %v2020 = vadd.f32 %v1838, %v1988
      %v2021 = vadd.f32 %v1887, %v1989
      %v2022 = vadd.f32 %v1841, %v1990
      %v2023 = vadd.f32 %v1890, %v1991
      %v2024 = vadd.f32 %v1843, %v1992
      %v2025 = vadd.f32 %v1892, %v1993
      %v2026 = vadd.f32 %v1846, %v1994
      %v2027 = vadd.f32 %v1895, %v1995
      %v2028 = vadd.f32 %v1848, %v1996
      %v2029 = vadd.f32 %v1897, %v1997
      %v2030 = vadd.f32 %v1851, %v1998
      %v2031 = vadd.f32 %v1900, %v1999
      %v2032 = vadd.f32 %v1853, %v2000
      %v2033 = vadd.f32 %v1902, %v2001
      %v2034 = vadd.f32 %v1856, %v2002
      %v2035 = vadd.f32 %v1905, %v2003
      %v2036 = vadd.f32 %v1858, %v2004
      %v2037 = vadd.f32 %v1907, %v2005
      %v2038 = vadd.f32 %v1861, %v2006
      %v2039 = vadd.f32 %v1910, %v2007
      %v2040 = vadd.f32 %v1863, %v2008
      %v2041 = vadd.f32 %v1912, %v2009
      %v2042 = vmul.f32 %v2010, 0.7978846
      %v2043 = vmul.f32 %v2011, 0.7978846
      %v2044 = vmul.f32 %v2012, 0.7978846
      %v2045 = vmul.f32 %v2013, 0.7978846
      %v2046 = vmul.f32 %v2014, 0.7978846
      %v2047 = vmul.f32 %v2015, 0.7978846
      %v2048 = vmul.f32 %v2016, 0.7978846
      %v2049 = vmul.f32 %v2017, 0.7978846
      %v2050 = vmul.f32 %v2018, 0.7978846
      %v2051 = vmul.f32 %v2019, 0.7978846
      %v2052 = vmul.f32 %v2020, 0.7978846
      %v2053 = vmul.f32 %v2021, 0.7978846
      %v2054 = vmul.f32 %v2022, 0.7978846
      %v2055 = vmul.f32 %v2023, 0.7978846
      %v2056 = vmul.f32 %v2024, 0.7978846
      %v2057 = vmul.f32 %v2025, 0.7978846
      %v2058 = vmul.f32 %v2026, 0.7978846
      %v2059 = vmul.f32 %v2027, 0.7978846
      %v2060 = vmul.f32 %v2028, 0.7978846
      %v2061 = vmul.f32 %v2029, 0.7978846
      %v2062 = vmul.f32 %v2030, 0.7978846
      %v2063 = vmul.f32 %v2031, 0.7978846
      %v2064 = vmul.f32 %v2032, 0.7978846
      %v2065 = vmul.f32 %v2033, 0.7978846
      %v2066 = vmul.f32 %v2034, 0.7978846
      %v2067 = vmul.f32 %v2035, 0.7978846
      %v2068 = vmul.f32 %v2036, 0.7978846
      %v2069 = vmul.f32 %v2037, 0.7978846
      %v2070 = vmul.f32 %v2038, 0.7978846
      %v2071 = vmul.f32 %v2039, 0.7978846
      %v2072 = vmul.f32 %v2040, 0.7978846
      %v2073 = vmul.f32 %v2041, 0.7978846
      %v2074 = vtanh.pop %v2042
      %v2075 = vtanh.pop %v2043
      %v2076 = vtanh.pop %v2044
      %v2077 = vtanh.pop %v2045
      %v2078 = vtanh.pop %v2046
      %v2079 = vtanh.pop %v2047
      %v2080 = vtanh.pop %v2048
      %v2081 = vtanh.pop %v2049
      %v2082 = vtanh.pop %v2050
      %v2083 = vtanh.pop %v2051
      %v2084 = vtanh.pop %v2052
      %v2085 = vtanh.pop %v2053
      %v2086 = vtanh.pop %v2054
      %v2087 = vtanh.pop %v2055
      %v2088 = vtanh.pop %v2056
      %v2089 = vtanh.pop %v2057
      %v2090 = vtanh.pop %v2058
      %v2091 = vtanh.pop %v2059
      %v2092 = vtanh.pop %v2060
      %v2093 = vtanh.pop %v2061
      %v2094 = vtanh.pop %v2062
      %v2095 = vtanh.pop %v2063
      %v2096 = vtanh.pop %v2064
      %v2097 = vtanh.pop %v2065
      %v2098 = vtanh.pop %v2066
      %v2099 = vtanh.pop %v2067
      %v2100 = vtanh.pop %v2068
      %v2101 = vtanh.pop %v2069
      %v2102 = vtanh.pop %v2070
      %v2103 = vtanh.pop %v2071
      %v2104 = vtanh.pop %v2072
      %v2105 = vtanh.pop %v2073
      %v2106 = vadd.f32 %v2074, 1.0
      %v2107 = vadd.f32 %v2075, 1.0
      %v2108 = vadd.f32 %v2076, 1.0
      %v2109 = vadd.f32 %v2077, 1.0
      %v2110 = vadd.f32 %v2078, 1.0
      %v2111 = vadd.f32 %v2079, 1.0
      %v2112 = vadd.f32 %v2080, 1.0
      %v2113 = vadd.f32 %v2081, 1.0
      %v2114 = vadd.f32 %v2082, 1.0
      %v2115 = vadd.f32 %v2083, 1.0
      %v2116 = vadd.f32 %v2084, 1.0
      %v2117 = vadd.f32 %v2085, 1.0
      %v2118 = vadd.f32 %v2086, 1.0
      %v2119 = vadd.f32 %v2087, 1.0
      %v2120 = vadd.f32 %v2088, 1.0
      %v2121 = vadd.f32 %v2089, 1.0
      %v2122 = vadd.f32 %v2090, 1.0
      %v2123 = vadd.f32 %v2091, 1.0
      %v2124 = vadd.f32 %v2092, 1.0
      %v2125 = vadd.f32 %v2093, 1.0
      %v2126 = vadd.f32 %v2094, 1.0
      %v2127 = vadd.f32 %v2095, 1.0
      %v2128 = vadd.f32 %v2096, 1.0
      %v2129 = vadd.f32 %v2097, 1.0
      %v2130 = vadd.f32 %v2098, 1.0
      %v2131 = vadd.f32 %v2099, 1.0
      %v2132 = vadd.f32 %v2100, 1.0
      %v2133 = vadd.f32 %v2101, 1.0
      %v2134 = vadd.f32 %v2102, 1.0
      %v2135 = vadd.f32 %v2103, 1.0
      %v2136 = vadd.f32 %v2104, 1.0
      %v2137 = vadd.f32 %v2105, 1.0
      %v2138 = vmul.f32 %v2106, 0.5
      %v2139 = vmul.f32 %v2107, 0.5
      %v2140 = vmul.f32 %v2108, 0.5
      %v2141 = vmul.f32 %v2109, 0.5
      %v2142 = vmul.f32 %v2110, 0.5
      %v2143 = vmul.f32 %v2111, 0.5
      %v2144 = vmul.f32 %v2112, 0.5
      %v2145 = vmul.f32 %v2113, 0.5
      %v2146 = vmul.f32 %v2114, 0.5
      %v2147 = vmul.f32 %v2115, 0.5
      %v2148 = vmul.f32 %v2116, 0.5
      %v2149 = vmul.f32 %v2117, 0.5
      %v2150 = vmul.f32 %v2118, 0.5
      %v2151 = vmul.f32 %v2119, 0.5
      %v2152 = vmul.f32 %v2120, 0.5
      %v2153 = vmul.f32 %v2121, 0.5
      %v2154 = vmul.f32 %v2122, 0.5
      %v2155 = vmul.f32 %v2123, 0.5
      %v2156 = vmul.f32 %v2124, 0.5
      %v2157 = vmul.f32 %v2125, 0.5
      %v2158 = vmul.f32 %v2126, 0.5
      %v2159 = vmul.f32 %v2127, 0.5
      %v2160 = vmul.f32 %v2128, 0.5
      %v2161 = vmul.f32 %v2129, 0.5
      %v2162 = vmul.f32 %v2130, 0.5
      %v2163 = vmul.f32 %v2131, 0.5
      %v2164 = vmul.f32 %v2132, 0.5
      %v2165 = vmul.f32 %v2133, 0.5
      %v2166 = vmul.f32 %v2134, 0.5
      %v2167 = vmul.f32 %v2135, 0.5
      %v2168 = vmul.f32 %v2136, 0.5
      %v2169 = vmul.f32 %v2137, 0.5
      %v2170 = vmul.f32 %v1826, %v2138
      %v2171 = vmul.f32 %v1875, %v2139
      %v2172 = vmul.f32 %v1828, %v2140
      %v2173 = vmul.f32 %v1877, %v2141
      %v2174 = vmul.f32 %v1831, %v2142
      %v2175 = vmul.f32 %v1880, %v2143
      %v2176 = vmul.f32 %v1833, %v2144
      %v2177 = vmul.f32 %v1882, %v2145
      %v2178 = vmul.f32 %v1836, %v2146
      %v2179 = vmul.f32 %v1885, %v2147
      %v2180 = vmul.f32 %v1838, %v2148
      %v2181 = vmul.f32 %v1887, %v2149
      %v2182 = vmul.f32 %v1841, %v2150
      %v2183 = vmul.f32 %v1890, %v2151
      %v2184 = vmul.f32 %v1843, %v2152
      %v2185 = vmul.f32 %v1892, %v2153
      %v2186 = vmul.f32 %v1846, %v2154
      %v2187 = vmul.f32 %v1895, %v2155
      %v2188 = vmul.f32 %v1848, %v2156
      %v2189 = vmul.f32 %v1897, %v2157
      %v2190 = vmul.f32 %v1851, %v2158
      %v2191 = vmul.f32 %v1900, %v2159
      %v2192 = vmul.f32 %v1853, %v2160
      %v2193 = vmul.f32 %v1902, %v2161
      %v2194 = vmul.f32 %v1856, %v2162
      %v2195 = vmul.f32 %v1905, %v2163
      %v2196 = vmul.f32 %v1858, %v2164
      %v2197 = vmul.f32 %v1907, %v2165
      %v2198 = vmul.f32 %v1861, %v2166
      %v2199 = vmul.f32 %v1910, %v2167
      %v2200 = vmul.f32 %v1863, %v2168
      %v2201 = vmul.f32 %v1912, %v2169
      %v2202 = vpack.c.bf16 %v2172, %v2170
      %v2203 = vpack.c.bf16 %v2173, %v2171
      %v2204 = vpack.c.bf16 %v2176, %v2174
      %v2205 = vpack.c.bf16 %v2177, %v2175
      %v2206 = vpack.c.bf16 %v2180, %v2178
      %v2207 = vpack.c.bf16 %v2181, %v2179
      %v2208 = vpack.c.bf16 %v2184, %v2182
      %v2209 = vpack.c.bf16 %v2185, %v2183
      %v2210 = vpack.c.bf16 %v2188, %v2186
      %v2211 = vpack.c.bf16 %v2189, %v2187
      %v2212 = vpack.c.bf16 %v2192, %v2190
      %v2213 = vpack.c.bf16 %v2193, %v2191
      %v2214 = vpack.c.bf16 %v2196, %v2194
      %v2215 = vpack.c.bf16 %v2197, %v2195
      %v2216 = vpack.c.bf16 %v2200, %v2198
      %v2217 = vpack.c.bf16 %v2201, %v2199
      %v2218 = vld [vmem:[%s4] sm:$0xf]
      %v2219 = vld [vmem:[%s4 + $0x4] sm:$0xf]
      %v2220 = vld [vmem:[%s4 + $0x8] sm:$0xf]
      %v2221 = vld [vmem:[%s4 + $0xc] sm:$0xf]
      %v2222 = vld [vmem:[%s4 + $0x10] sm:$0xf]
      %v2223 = vld [vmem:[%s4 + $0x14] sm:$0xf]
      %v2224 = vld [vmem:[%s4 + $0x18] sm:$0xf]
      %v2225 = vld [vmem:[%s4 + $0x1c] sm:$0xf]
      %v2226 = vld [vmem:[%s4 + $0x20] sm:$0xf]
      %v2227 = vld [vmem:[%s4 + $0x24] sm:$0xf]
      %v2228 = vld [vmem:[%s4 + $0x28] sm:$0xf]
      %v2229 = vld [vmem:[%s4 + $0x2c] sm:$0xf]
      %v2230 = vld [vmem:[%s4 + $0x30] sm:$0xf]
      %v2231 = vld [vmem:[%s4 + $0x34] sm:$0xf]
      %v2232 = vld [vmem:[%s4 + $0x38] sm:$0xf]
      %v2233 = vld [vmem:[%s4 + $0x3c] sm:$0xf]
      %v2234 = vld [vmem:[%s4 + $0x40] sm:$0xf]
      %v2235 = vld [vmem:[%s4 + $0x44] sm:$0xf]
      %v2236 = vld [vmem:[%s4 + $0x48] sm:$0xf]
      %v2237 = vld [vmem:[%s4 + $0x4c] sm:$0xf]
      %v2238 = vld [vmem:[%s4 + $0x50] sm:$0xf]
      %v2239 = vld [vmem:[%s4 + $0x54] sm:$0xf]
      %v2240 = vld [vmem:[%s4 + $0x58] sm:$0xf]
      %v2241 = vld [vmem:[%s4 + $0x5c] sm:$0xf]
      %v2242 = vld [vmem:[%s4 + $0x60] sm:$0xf]
      %v2243 = vld [vmem:[%s4 + $0x64] sm:$0xf]
      %v2244 = vld [vmem:[%s4 + $0x68] sm:$0xf]
      %v2245 = vld [vmem:[%s4 + $0x6c] sm:$0xf]
      %v2246 = vld [vmem:[%s4 + $0x70] sm:$0xf]
      %v2247 = vld [vmem:[%s4 + $0x74] sm:$0xf]
      %v2248 = vld [vmem:[%s4 + $0x78] sm:$0xf]
      %v2249 = vld [vmem:[%s4 + $0x7c] sm:$0xf]
      %s2250 = scalar_lea.vmem %s7, 8
      %v2251 = vld [vmem:[%s2250] sm:$0x3]
      %v2253 = vperm.slane %v2251, 0
      %v2287 = vunpack.c.l.b16 %v2218
      %v2288 = vunpack.c.l.b16 %v2219
      %v2289 = vunpack.c.l.b16 %v2220
      %v2290 = vunpack.c.l.b16 %v2221
      %v2291 = vunpack.c.l.b16 %v2222
      %v2292 = vunpack.c.l.b16 %v2223
      %v2293 = vunpack.c.l.b16 %v2224
      %v2294 = vunpack.c.l.b16 %v2225
      %v2295 = vunpack.c.l.b16 %v2226
      %v2296 = vunpack.c.l.b16 %v2227
      %v2297 = vunpack.c.l.b16 %v2228
      %v2298 = vunpack.c.l.b16 %v2229
      %v2299 = vunpack.c.l.b16 %v2230
      %v2300 = vunpack.c.l.b16 %v2231
      %v2301 = vunpack.c.l.b16 %v2232
      %v2302 = vunpack.c.l.b16 %v2233
      %v2303 = vunpack.c.l.b16 %v2234
      %v2304 = vunpack.c.l.b16 %v2235
      %v2305 = vunpack.c.l.b16 %v2236
      %v2306 = vunpack.c.l.b16 %v2237
      %v2307 = vunpack.c.l.b16 %v2238
      %v2308 = vunpack.c.l.b16 %v2239
      %v2309 = vunpack.c.l.b16 %v2240
      %v2310 = vunpack.c.l.b16 %v2241
      %v2311 = vunpack.c.l.b16 %v2242
      %v2312 = vunpack.c.l.b16 %v2243
      %v2313 = vunpack.c.l.b16 %v2244
      %v2314 = vunpack.c.l.b16 %v2245
      %v2315 = vunpack.c.l.b16 %v2246
      %v2316 = vunpack.c.l.b16 %v2247
      %v2317 = vunpack.c.l.b16 %v2248
      %v2318 = vunpack.c.l.b16 %v2249
      %v2319 = vpack.c.b16 %v2288, %v2287
      %v2320 = vpack.c.b16 %v2290, %v2289
      %v2321 = vpack.c.b16 %v2292, %v2291
      %v2322 = vpack.c.b16 %v2294, %v2293
      %v2323 = vpack.c.b16 %v2296, %v2295
      %v2324 = vpack.c.b16 %v2298, %v2297
      %v2325 = vpack.c.b16 %v2300, %v2299
      %v2326 = vpack.c.b16 %v2302, %v2301
      %v2327 = vpack.c.b16 %v2304, %v2303
      %v2328 = vpack.c.b16 %v2306, %v2305
      %v2329 = vpack.c.b16 %v2308, %v2307
      %v2330 = vpack.c.b16 %v2310, %v2309
      %v2331 = vpack.c.b16 %v2312, %v2311
      %v2332 = vpack.c.b16 %v2314, %v2313
      %v2333 = vpack.c.b16 %v2316, %v2315
      %v2334 = vpack.c.b16 %v2318, %v2317
      %2351 = vmatpush.bf16.msra.mxu0 %v2326
      %2352 = vmatpush.bf16.msra.mxu0 %v2325
      %2353 = vmatpush.bf16.msra.mxu0 %v2324
      %2354 = vmatpush.bf16.msra.mxu0 %v2323
      %2355 = vmatpush.bf16.msra.mxu0 %v2322
      %2356 = vmatpush.bf16.msra.mxu0 %v2321
      %2357 = vmatpush.bf16.msra.mxu0 %v2320
      %2358 = vmatpush.bf16.msra.mxu0 %v2319
      %2359 = vmatmul.bf16.gmra.mxu0 %v2202
      %v2360 = vpop.f32.mrf.mxu0
      %v2361 = vadd.f32 %v2253, %v2360
      %v2362 = vpop.f32.mrf.mxu0
      %v2363 = vadd.f32 %v2253, %v2362
      %2364 = vmatmul.bf16.gmra.mxu0 %v2204
      %v2365 = vpop.f32.mrf.mxu0
      %v2366 = vadd.f32 %v2253, %v2365
      %v2367 = vpop.f32.mrf.mxu0
      %v2368 = vadd.f32 %v2253, %v2367
      %2369 = vmatmul.bf16.gmra.mxu0 %v2206
      %v2370 = vpop.f32.mrf.mxu0
      %v2371 = vadd.f32 %v2253, %v2370
      %v2372 = vpop.f32.mrf.mxu0
      %v2373 = vadd.f32 %v2253, %v2372
      %2374 = vmatmul.bf16.gmra.mxu0 %v2208
      %v2375 = vpop.f32.mrf.mxu0
      %v2376 = vadd.f32 %v2253, %v2375
      %v2377 = vpop.f32.mrf.mxu0
      %v2378 = vadd.f32 %v2253, %v2377
      %2379 = vmatmul.bf16.gmra.mxu0 %v2210
      %v2380 = vpop.f32.mrf.mxu0
      %v2381 = vadd.f32 %v2253, %v2380
      %v2382 = vpop.f32.mrf.mxu0
      %v2383 = vadd.f32 %v2253, %v2382
      %2384 = vmatmul.bf16.gmra.mxu0 %v2212
      %v2385 = vpop.f32.mrf.mxu0
      %v2386 = vadd.f32 %v2253, %v2385
      %v2387 = vpop.f32.mrf.mxu0
      %v2388 = vadd.f32 %v2253, %v2387
      %2389 = vmatmul.bf16.gmra.mxu0 %v2214
      %v2390 = vpop.f32.mrf.mxu0
      %v2391 = vadd.f32 %v2253, %v2390
      %v2392 = vpop.f32.mrf.mxu0
      %v2393 = vadd.f32 %v2253, %v2392
      %2394 = vmatmul.bf16.gmra.mxu0 %v2216
      %v2395 = vpop.f32.mrf.mxu0
      %v2396 = vadd.f32 %v2253, %v2395
      %v2397 = vpop.f32.mrf.mxu0
      %v2398 = vadd.f32 %v2253, %v2397
      %2399 = vdwg.mxu0
      %2400 = vmatpush.bf16.msra.mxu0 %v2334
      %2401 = vmatpush.bf16.msra.mxu0 %v2333
      %2402 = vmatpush.bf16.msra.mxu0 %v2332
      %2403 = vmatpush.bf16.msra.mxu0 %v2331
      %2404 = vmatpush.bf16.msra.mxu0 %v2330
      %2405 = vmatpush.bf16.msra.mxu0 %v2329
      %2406 = vmatpush.bf16.msra.mxu0 %v2328
      %2407 = vmatpush.bf16.msra.mxu0 %v2327
      %2408 = vmatmul.bf16.gmra.mxu0 %v2203
      %v2409 = vpop.f32.mrf.mxu0
      %v2410 = vadd.f32 %v2361, %v2409
      %v2411 = vpop.f32.mrf.mxu0
      %v2412 = vadd.f32 %v2363, %v2411
      %2413 = vmatmul.bf16.gmra.mxu0 %v2205
      %v2414 = vpop.f32.mrf.mxu0
      %v2415 = vadd.f32 %v2366, %v2414
      %v2416 = vpop.f32.mrf.mxu0
      %v2417 = vadd.f32 %v2368, %v2416
      %2418 = vmatmul.bf16.gmra.mxu0 %v2207
      %v2419 = vpop.f32.mrf.mxu0
      %v2420 = vadd.f32 %v2371, %v2419
      %v2421 = vpop.f32.mrf.mxu0
      %v2422 = vadd.f32 %v2373, %v2421
      %2423 = vmatmul.bf16.gmra.mxu0 %v2209
      %v2424 = vpop.f32.mrf.mxu0
      %v2425 = vadd.f32 %v2376, %v2424
      %v2426 = vpop.f32.mrf.mxu0
      %v2427 = vadd.f32 %v2378, %v2426
      %2428 = vmatmul.bf16.gmra.mxu0 %v2211
      %v2429 = vpop.f32.mrf.mxu0
      %v2430 = vadd.f32 %v2381, %v2429
      %v2431 = vpop.f32.mrf.mxu0
      %v2432 = vadd.f32 %v2383, %v2431
      %2433 = vmatmul.bf16.gmra.mxu0 %v2213
      %v2434 = vpop.f32.mrf.mxu0
      %v2435 = vadd.f32 %v2386, %v2434
      %v2436 = vpop.f32.mrf.mxu0
      %v2437 = vadd.f32 %v2388, %v2436
      %2438 = vmatmul.bf16.gmra.mxu0 %v2215
      %v2439 = vpop.f32.mrf.mxu0
      %v2440 = vadd.f32 %v2391, %v2439
      %v2441 = vpop.f32.mrf.mxu0
      %v2442 = vadd.f32 %v2393, %v2441
      %2443 = vmatmul.bf16.gmra.mxu0 %v2217
      %v2444 = vpop.f32.mrf.mxu0
      %v2445 = vadd.f32 %v2396, %v2444
      %v2446 = vpop.f32.mrf.mxu0
      %v2447 = vadd.f32 %v2398, %v2446
      %2448 = vdwg.mxu0
      %v2449 = vadd.f32 %v1320, %v2410
      %v2450 = vadd.f32 %v1321, %v2412
      %v2451 = vadd.f32 %v1322, %v2415
      %v2452 = vadd.f32 %v1323, %v2417
      %v2453 = vadd.f32 %v1324, %v2420
      %v2454 = vadd.f32 %v1325, %v2422
      %v2455 = vadd.f32 %v1326, %v2425
      %v2456 = vadd.f32 %v1327, %v2427
      %v2457 = vadd.f32 %v1328, %v2430
      %v2458 = vadd.f32 %v1329, %v2432
      %v2459 = vadd.f32 %v1330, %v2435
      %v2460 = vadd.f32 %v1331, %v2437
      %v2461 = vadd.f32 %v1332, %v2440
      %v2462 = vadd.f32 %v1333, %v2442
      %v2463 = vadd.f32 %v1334, %v2445
      %v2464 = vadd.f32 %v1335, %v2447
      %2465 = vadd.xlane.f32.xlu0 %v2449
      %v2466 = vpop.xlane.xlu0 %2465
      %2467 = vadd.xlane.f32.xlu0 %v2450
      %v2468 = vpop.xlane.xlu0 %2467
      %2469 = vadd.xlane.f32.xlu0 %v2451
      %v2470 = vpop.xlane.xlu0 %2469
      %2471 = vadd.xlane.f32.xlu0 %v2452
      %v2472 = vpop.xlane.xlu0 %2471
      %2473 = vadd.xlane.f32.xlu0 %v2453
      %v2474 = vpop.xlane.xlu0 %2473
      %2475 = vadd.xlane.f32.xlu0 %v2454
      %v2476 = vpop.xlane.xlu0 %2475
      %2477 = vadd.xlane.f32.xlu0 %v2455
      %v2478 = vpop.xlane.xlu0 %2477
      %2479 = vadd.xlane.f32.xlu0 %v2456
      %v2480 = vpop.xlane.xlu0 %2479
      %2481 = vadd.xlane.f32.xlu0 %v2457
      %v2482 = vpop.xlane.xlu0 %2481
      %2483 = vadd.xlane.f32.xlu0 %v2458
      %v2484 = vpop.xlane.xlu0 %2483
      %2485 = vadd.xlane.f32.xlu0 %v2459
      %v2486 = vpop.xlane.xlu0 %2485
      %2487 = vadd.xlane.f32.xlu0 %v2460
      %v2488 = vpop.xlane.xlu0 %2487
      %2489 = vadd.xlane.f32.xlu0 %v2461
      %v2490 = vpop.xlane.xlu0 %2489
      %2491 = vadd.xlane.f32.xlu0 %v2462
      %v2492 = vpop.xlane.xlu0 %2491
      %2493 = vadd.xlane.f32.xlu0 %v2463
      %v2494 = vpop.xlane.xlu0 %2493
      %2495 = vadd.xlane.f32.xlu0 %v2464
      %v2496 = vpop.xlane.xlu0 %2495
      %v2497 = vmul.f32 %v2466, %v1374
      %v2498 = vmul.f32 %v2468, %v1374
      %v2499 = vmul.f32 %v2470, %v1374
      %v2500 = vmul.f32 %v2472, %v1374
      %v2501 = vmul.f32 %v2474, %v1374
      %v2502 = vmul.f32 %v2476, %v1374
      %v2503 = vmul.f32 %v2478, %v1374
      %v2504 = vmul.f32 %v2480, %v1374
      %v2505 = vmul.f32 %v2482, %v1374
      %v2506 = vmul.f32 %v2484, %v1374
      %v2507 = vmul.f32 %v2486, %v1374
      %v2508 = vmul.f32 %v2488, %v1374
      %v2509 = vmul.f32 %v2490, %v1374
      %v2510 = vmul.f32 %v2492, %v1374
      %v2511 = vmul.f32 %v2494, %v1374
      %v2512 = vmul.f32 %v2496, %v1374
      %v2513 = vsub.f32 %v2449, %v2497
      %v2514 = vsub.f32 %v2450, %v2498
      %v2515 = vsub.f32 %v2451, %v2499
      %v2516 = vsub.f32 %v2452, %v2500
      %v2517 = vsub.f32 %v2453, %v2501
      %v2518 = vsub.f32 %v2454, %v2502
      %v2519 = vsub.f32 %v2455, %v2503
      %v2520 = vsub.f32 %v2456, %v2504
      %v2521 = vsub.f32 %v2457, %v2505
      %v2522 = vsub.f32 %v2458, %v2506
      %v2523 = vsub.f32 %v2459, %v2507
      %v2524 = vsub.f32 %v2460, %v2508
      %v2525 = vsub.f32 %v2461, %v2509
      %v2526 = vsub.f32 %v2462, %v2510
      %v2527 = vsub.f32 %v2463, %v2511
      %v2528 = vsub.f32 %v2464, %v2512
      %v2529 = vmul.f32 %v2513, %v2513
      %v2530 = vmul.f32 %v2514, %v2514
      %v2531 = vmul.f32 %v2515, %v2515
      %v2532 = vmul.f32 %v2516, %v2516
      %v2533 = vmul.f32 %v2517, %v2517
      %v2534 = vmul.f32 %v2518, %v2518
      %v2535 = vmul.f32 %v2519, %v2519
      %v2536 = vmul.f32 %v2520, %v2520
      %v2537 = vmul.f32 %v2521, %v2521
      %v2538 = vmul.f32 %v2522, %v2522
      %v2539 = vmul.f32 %v2523, %v2523
      %v2540 = vmul.f32 %v2524, %v2524
      %v2541 = vmul.f32 %v2525, %v2525
      %v2542 = vmul.f32 %v2526, %v2526
      %v2543 = vmul.f32 %v2527, %v2527
      %v2544 = vmul.f32 %v2528, %v2528
      %2545 = vadd.xlane.f32.xlu0 %v2529
      %v2546 = vpop.xlane.xlu0 %2545
      %2547 = vadd.xlane.f32.xlu0 %v2530
      %v2548 = vpop.xlane.xlu0 %2547
      %2549 = vadd.xlane.f32.xlu0 %v2531
      %v2550 = vpop.xlane.xlu0 %2549
      %2551 = vadd.xlane.f32.xlu0 %v2532
      %v2552 = vpop.xlane.xlu0 %2551
      %2553 = vadd.xlane.f32.xlu0 %v2533
      %v2554 = vpop.xlane.xlu0 %2553
      %2555 = vadd.xlane.f32.xlu0 %v2534
      %v2556 = vpop.xlane.xlu0 %2555
      %2557 = vadd.xlane.f32.xlu0 %v2535
      %v2558 = vpop.xlane.xlu0 %2557
      %2559 = vadd.xlane.f32.xlu0 %v2536
      %v2560 = vpop.xlane.xlu0 %2559
      %2561 = vadd.xlane.f32.xlu0 %v2537
      %v2562 = vpop.xlane.xlu0 %2561
      %2563 = vadd.xlane.f32.xlu0 %v2538
      %v2564 = vpop.xlane.xlu0 %2563
      %2565 = vadd.xlane.f32.xlu0 %v2539
      %v2566 = vpop.xlane.xlu0 %2565
      %2567 = vadd.xlane.f32.xlu0 %v2540
      %v2568 = vpop.xlane.xlu0 %2567
      %2569 = vadd.xlane.f32.xlu0 %v2541
      %v2570 = vpop.xlane.xlu0 %2569
      %2571 = vadd.xlane.f32.xlu0 %v2542
      %v2572 = vpop.xlane.xlu0 %2571
      %2573 = vadd.xlane.f32.xlu0 %v2543
      %v2574 = vpop.xlane.xlu0 %2573
      %2575 = vadd.xlane.f32.xlu0 %v2544
      %v2576 = vpop.xlane.xlu0 %2575
      %v2577 = vmul.f32 %v2546, %v1374
      %v2578 = vmul.f32 %v2548, %v1374
      %v2579 = vmul.f32 %v2550, %v1374
      %v2580 = vmul.f32 %v2552, %v1374
      %v2581 = vmul.f32 %v2554, %v1374
      %v2582 = vmul.f32 %v2556, %v1374
      %v2583 = vmul.f32 %v2558, %v1374
      %v2584 = vmul.f32 %v2560, %v1374
      %v2585 = vmul.f32 %v2562, %v1374
      %v2586 = vmul.f32 %v2564, %v1374
      %v2587 = vmul.f32 %v2566, %v1374
      %v2588 = vmul.f32 %v2568, %v1374
      %v2589 = vmul.f32 %v2570, %v1374
      %v2590 = vmul.f32 %v2572, %v1374
      %v2591 = vmul.f32 %v2574, %v1374
      %v2592 = vmul.f32 %v2576, %v1374
      %v2593 = vadd.f32 %v2577, 1e-05
      %v2594 = vadd.f32 %v2578, 1e-05
      %v2595 = vadd.f32 %v2579, 1e-05
      %v2596 = vadd.f32 %v2580, 1e-05
      %v2597 = vadd.f32 %v2581, 1e-05
      %v2598 = vadd.f32 %v2582, 1e-05
      %v2599 = vadd.f32 %v2583, 1e-05
      %v2600 = vadd.f32 %v2584, 1e-05
      %v2601 = vadd.f32 %v2585, 1e-05
      %v2602 = vadd.f32 %v2586, 1e-05
      %v2603 = vadd.f32 %v2587, 1e-05
      %v2604 = vadd.f32 %v2588, 1e-05
      %v2605 = vadd.f32 %v2589, 1e-05
      %v2606 = vadd.f32 %v2590, 1e-05
      %v2607 = vadd.f32 %v2591, 1e-05
      %v2608 = vadd.f32 %v2592, 1e-05
      %v2609 = vrsqrt.pop %v2593
      %v2610 = vmul.f32 %v2609, %v2593
      %v2611 = vmul.f32 %v2610, %v2609
      %v2612 = vmul.f32 0.5, %v2611
      %v2613 = vsub.f32 1.5, %v2612
      %v2614 = vmul.f32 %v2609, %v2613
      %vm2615 = vweird.f32 %v2593
      %vm2616 = vweird.f32 %v2609
      %vm2617 = vmor %vm2615, %vm2616
      %v2618 = vsel %vm2617, %v2609, %v2614
      %v2619 = vrsqrt.pop %v2594
      %v2620 = vmul.f32 %v2619, %v2594
      %v2621 = vmul.f32 %v2620, %v2619
      %v2622 = vmul.f32 0.5, %v2621
      %v2623 = vsub.f32 1.5, %v2622
      %v2624 = vmul.f32 %v2619, %v2623
      %vm2625 = vweird.f32 %v2594
      %vm2626 = vweird.f32 %v2619
      %vm2627 = vmor %vm2625, %vm2626
      %v2628 = vsel %vm2627, %v2619, %v2624
      %v2629 = vrsqrt.pop %v2595
      %v2630 = vmul.f32 %v2629, %v2595
      %v2631 = vmul.f32 %v2630, %v2629
      %v2632 = vmul.f32 0.5, %v2631
      %v2633 = vsub.f32 1.5, %v2632
      %v2634 = vmul.f32 %v2629, %v2633
      %vm2635 = vweird.f32 %v2595
      %vm2636 = vweird.f32 %v2629
      %vm2637 = vmor %vm2635, %vm2636
      %v2638 = vsel %vm2637, %v2629, %v2634
      %v2639 = vrsqrt.pop %v2596
      %v2640 = vmul.f32 %v2639, %v2596
      %v2641 = vmul.f32 %v2640, %v2639
      %v2642 = vmul.f32 0.5, %v2641
      %v2643 = vsub.f32 1.5, %v2642
      %v2644 = vmul.f32 %v2639, %v2643
      %vm2645 = vweird.f32 %v2596
      %vm2646 = vweird.f32 %v2639
      %vm2647 = vmor %vm2645, %vm2646
      %v2648 = vsel %vm2647, %v2639, %v2644
      %v2649 = vrsqrt.pop %v2597
      %v2650 = vmul.f32 %v2649, %v2597
      %v2651 = vmul.f32 %v2650, %v2649
      %v2652 = vmul.f32 0.5, %v2651
      %v2653 = vsub.f32 1.5, %v2652
      %v2654 = vmul.f32 %v2649, %v2653
      %vm2655 = vweird.f32 %v2597
      %vm2656 = vweird.f32 %v2649
      %vm2657 = vmor %vm2655, %vm2656
      %v2658 = vsel %vm2657, %v2649, %v2654
      %v2659 = vrsqrt.pop %v2598
      %v2660 = vmul.f32 %v2659, %v2598
      %v2661 = vmul.f32 %v2660, %v2659
      %v2662 = vmul.f32 0.5, %v2661
      %v2663 = vsub.f32 1.5, %v2662
      %v2664 = vmul.f32 %v2659, %v2663
      %vm2665 = vweird.f32 %v2598
      %vm2666 = vweird.f32 %v2659
      %vm2667 = vmor %vm2665, %vm2666
      %v2668 = vsel %vm2667, %v2659, %v2664
      %v2669 = vrsqrt.pop %v2599
      %v2670 = vmul.f32 %v2669, %v2599
      %v2671 = vmul.f32 %v2670, %v2669
      %v2672 = vmul.f32 0.5, %v2671
      %v2673 = vsub.f32 1.5, %v2672
      %v2674 = vmul.f32 %v2669, %v2673
      %vm2675 = vweird.f32 %v2599
      %vm2676 = vweird.f32 %v2669
      %vm2677 = vmor %vm2675, %vm2676
      %v2678 = vsel %vm2677, %v2669, %v2674
      %v2679 = vrsqrt.pop %v2600
      %v2680 = vmul.f32 %v2679, %v2600
      %v2681 = vmul.f32 %v2680, %v2679
      %v2682 = vmul.f32 0.5, %v2681
      %v2683 = vsub.f32 1.5, %v2682
      %v2684 = vmul.f32 %v2679, %v2683
      %vm2685 = vweird.f32 %v2600
      %vm2686 = vweird.f32 %v2679
      %vm2687 = vmor %vm2685, %vm2686
      %v2688 = vsel %vm2687, %v2679, %v2684
      %v2689 = vrsqrt.pop %v2601
      %v2690 = vmul.f32 %v2689, %v2601
      %v2691 = vmul.f32 %v2690, %v2689
      %v2692 = vmul.f32 0.5, %v2691
      %v2693 = vsub.f32 1.5, %v2692
      %v2694 = vmul.f32 %v2689, %v2693
      %vm2695 = vweird.f32 %v2601
      %vm2696 = vweird.f32 %v2689
      %vm2697 = vmor %vm2695, %vm2696
      %v2698 = vsel %vm2697, %v2689, %v2694
      %v2699 = vrsqrt.pop %v2602
      %v2700 = vmul.f32 %v2699, %v2602
      %v2701 = vmul.f32 %v2700, %v2699
      %v2702 = vmul.f32 0.5, %v2701
      %v2703 = vsub.f32 1.5, %v2702
      %v2704 = vmul.f32 %v2699, %v2703
      %vm2705 = vweird.f32 %v2602
      %vm2706 = vweird.f32 %v2699
      %vm2707 = vmor %vm2705, %vm2706
      %v2708 = vsel %vm2707, %v2699, %v2704
      %v2709 = vrsqrt.pop %v2603
      %v2710 = vmul.f32 %v2709, %v2603
      %v2711 = vmul.f32 %v2710, %v2709
      %v2712 = vmul.f32 0.5, %v2711
      %v2713 = vsub.f32 1.5, %v2712
      %v2714 = vmul.f32 %v2709, %v2713
      %vm2715 = vweird.f32 %v2603
      %vm2716 = vweird.f32 %v2709
      %vm2717 = vmor %vm2715, %vm2716
      %v2718 = vsel %vm2717, %v2709, %v2714
      %v2719 = vrsqrt.pop %v2604
      %v2720 = vmul.f32 %v2719, %v2604
      %v2721 = vmul.f32 %v2720, %v2719
      %v2722 = vmul.f32 0.5, %v2721
      %v2723 = vsub.f32 1.5, %v2722
      %v2724 = vmul.f32 %v2719, %v2723
      %vm2725 = vweird.f32 %v2604
      %vm2726 = vweird.f32 %v2719
      %vm2727 = vmor %vm2725, %vm2726
      %v2728 = vsel %vm2727, %v2719, %v2724
      %v2729 = vrsqrt.pop %v2605
      %v2730 = vmul.f32 %v2729, %v2605
      %v2731 = vmul.f32 %v2730, %v2729
      %v2732 = vmul.f32 0.5, %v2731
      %v2733 = vsub.f32 1.5, %v2732
      %v2734 = vmul.f32 %v2729, %v2733
      %vm2735 = vweird.f32 %v2605
      %vm2736 = vweird.f32 %v2729
      %vm2737 = vmor %vm2735, %vm2736
      %v2738 = vsel %vm2737, %v2729, %v2734
      %v2739 = vrsqrt.pop %v2606
      %v2740 = vmul.f32 %v2739, %v2606
      %v2741 = vmul.f32 %v2740, %v2739
      %v2742 = vmul.f32 0.5, %v2741
      %v2743 = vsub.f32 1.5, %v2742
      %v2744 = vmul.f32 %v2739, %v2743
      %vm2745 = vweird.f32 %v2606
      %vm2746 = vweird.f32 %v2739
      %vm2747 = vmor %vm2745, %vm2746
      %v2748 = vsel %vm2747, %v2739, %v2744
      %v2749 = vrsqrt.pop %v2607
      %v2750 = vmul.f32 %v2749, %v2607
      %v2751 = vmul.f32 %v2750, %v2749
      %v2752 = vmul.f32 0.5, %v2751
      %v2753 = vsub.f32 1.5, %v2752
      %v2754 = vmul.f32 %v2749, %v2753
      %vm2755 = vweird.f32 %v2607
      %vm2756 = vweird.f32 %v2749
      %vm2757 = vmor %vm2755, %vm2756
      %v2758 = vsel %vm2757, %v2749, %v2754
      %v2759 = vrsqrt.pop %v2608
      %v2760 = vmul.f32 %v2759, %v2608
      %v2761 = vmul.f32 %v2760, %v2759
      %v2762 = vmul.f32 0.5, %v2761
      %v2763 = vsub.f32 1.5, %v2762
      %v2764 = vmul.f32 %v2759, %v2763
      %vm2765 = vweird.f32 %v2608
      %vm2766 = vweird.f32 %v2759
      %vm2767 = vmor %vm2765, %vm2766
      %v2768 = vsel %vm2767, %v2759, %v2764
      %v2769 = vmul.f32 %v2513, %v2618
      %v2770 = vmul.f32 %v2514, %v2628
      %v2771 = vmul.f32 %v2515, %v2638
      %v2772 = vmul.f32 %v2516, %v2648
      %v2773 = vmul.f32 %v2517, %v2658
      %v2774 = vmul.f32 %v2518, %v2668
      %v2775 = vmul.f32 %v2519, %v2678
      %v2776 = vmul.f32 %v2520, %v2688
      %v2777 = vmul.f32 %v2521, %v2698
      %v2778 = vmul.f32 %v2522, %v2708
      %v2779 = vmul.f32 %v2523, %v2718
      %v2780 = vmul.f32 %v2524, %v2728
      %v2781 = vmul.f32 %v2525, %v2738
      %v2782 = vmul.f32 %v2526, %v2748
      %v2783 = vmul.f32 %v2527, %v2758
      %v2784 = vmul.f32 %v2528, %v2768
      %s2785 = scalar_lea.vmem %s7, 10
      %v2786 = vld [vmem:[%s2785] sm:$0x3]
      %v2788 = vperm.slane %v2786, 0
      %v2790 = vmul.f32 %v2769, %v2788
      %v2791 = vmul.f32 %v2770, %v2788
      %v2792 = vmul.f32 %v2771, %v2788
      %v2793 = vmul.f32 %v2772, %v2788
      %v2794 = vmul.f32 %v2773, %v2788
      %v2795 = vmul.f32 %v2774, %v2788
      %v2796 = vmul.f32 %v2775, %v2788
      %v2797 = vmul.f32 %v2776, %v2788
      %v2798 = vmul.f32 %v2777, %v2788
      %v2799 = vmul.f32 %v2778, %v2788
      %v2800 = vmul.f32 %v2779, %v2788
      %v2801 = vmul.f32 %v2780, %v2788
      %v2802 = vmul.f32 %v2781, %v2788
      %v2803 = vmul.f32 %v2782, %v2788
      %v2804 = vmul.f32 %v2783, %v2788
      %v2805 = vmul.f32 %v2784, %v2788
      %s2806 = scalar_lea.vmem %s7, 12
      %v2807 = vld [vmem:[%s2806] sm:$0x3]
      %v2809 = vperm.slane %v2807, 0
      %v2811 = vadd.f32 %v2790, %v2809
      %v2812 = vadd.f32 %v2791, %v2809
      %v2813 = vadd.f32 %v2792, %v2809
      %v2814 = vadd.f32 %v2793, %v2809
      %v2815 = vadd.f32 %v2794, %v2809
      %v2816 = vadd.f32 %v2795, %v2809
      %v2817 = vadd.f32 %v2796, %v2809
      %v2818 = vadd.f32 %v2797, %v2809
      %v2819 = vadd.f32 %v2798, %v2809
      %v2820 = vadd.f32 %v2799, %v2809
      %v2821 = vadd.f32 %v2800, %v2809
      %v2822 = vadd.f32 %v2801, %v2809
      %v2823 = vadd.f32 %v2802, %v2809
      %v2824 = vadd.f32 %v2803, %v2809
      %v2825 = vadd.f32 %v2804, %v2809
      %v2826 = vadd.f32 %v2805, %v2809
      %v2827 = vpack.c.bf16 %v2812, %v2811
      %v2828 = vpack.c.bf16 %v2814, %v2813
      %v2829 = vpack.c.bf16 %v2816, %v2815
      %v2830 = vpack.c.bf16 %v2818, %v2817
      %v2831 = vpack.c.bf16 %v2820, %v2819
      %v2832 = vpack.c.bf16 %v2822, %v2821
      %v2833 = vpack.c.bf16 %v2824, %v2823
      %v2834 = vpack.c.bf16 %v2826, %v2825
      %s2835 = scalar_lea.vmem %s3, 128
      %v2836 = vld [vmem:[%s2835] sm:$0xff]
      %v2837 = vld [vmem:[%s2835 + $0x8] sm:$0xff]
      %v2838 = vld [vmem:[%s2835 + $0x10] sm:$0xff]
      %v2839 = vld [vmem:[%s2835 + $0x18] sm:$0xff]
      %v2840 = vld [vmem:[%s2835 + $0x20] sm:$0xff]
      %v2841 = vld [vmem:[%s2835 + $0x28] sm:$0xff]
      %v2842 = vld [vmem:[%s2835 + $0x30] sm:$0xff]
      %v2843 = vld [vmem:[%s2835 + $0x38] sm:$0xff]
      %v2844 = vld [vmem:[%s2835 + $0x40] sm:$0xff]
      %v2845 = vld [vmem:[%s2835 + $0x48] sm:$0xff]
      %v2846 = vld [vmem:[%s2835 + $0x50] sm:$0xff]
      %v2847 = vld [vmem:[%s2835 + $0x58] sm:$0xff]
      %v2848 = vld [vmem:[%s2835 + $0x60] sm:$0xff]
      %v2849 = vld [vmem:[%s2835 + $0x68] sm:$0xff]
      %v2850 = vld [vmem:[%s2835 + $0x70] sm:$0xff]
      %v2851 = vld [vmem:[%s2835 + $0x78] sm:$0xff]
      %s2852 = scalar_lea.vmem %s7, 14
      %v2853 = vld [vmem:[%s2852] sm:$0x3]
      %v2855 = vperm.slane %v2853, 0
      %v2856 = vperm.slane %v2853, 1
      %v2875 = vunpack.c.l.b16 %v2836
      %v2876 = vunpack.c.h.b16 %v2836
      %v2877 = vunpack.c.l.b16 %v2837
      %v2878 = vunpack.c.h.b16 %v2837
      %v2879 = vunpack.c.l.b16 %v2838
      %v2880 = vunpack.c.h.b16 %v2838
      %v2881 = vunpack.c.l.b16 %v2839
      %v2882 = vunpack.c.h.b16 %v2839
      %v2883 = vunpack.c.l.b16 %v2840
      %v2884 = vunpack.c.h.b16 %v2840
      %v2885 = vunpack.c.l.b16 %v2841
      %v2886 = vunpack.c.h.b16 %v2841
      %v2887 = vunpack.c.l.b16 %v2842
      %v2888 = vunpack.c.h.b16 %v2842
      %v2889 = vunpack.c.l.b16 %v2843
      %v2890 = vunpack.c.h.b16 %v2843
      %v2891 = vunpack.c.l.b16 %v2844
      %v2892 = vunpack.c.h.b16 %v2844
      %v2893 = vunpack.c.l.b16 %v2845
      %v2894 = vunpack.c.h.b16 %v2845
      %v2895 = vunpack.c.l.b16 %v2846
      %v2896 = vunpack.c.h.b16 %v2846
      %v2897 = vunpack.c.l.b16 %v2847
      %v2898 = vunpack.c.h.b16 %v2847
      %v2899 = vunpack.c.l.b16 %v2848
      %v2900 = vunpack.c.h.b16 %v2848
      %v2901 = vunpack.c.l.b16 %v2849
      %v2902 = vunpack.c.h.b16 %v2849
      %v2903 = vunpack.c.l.b16 %v2850
      %v2904 = vunpack.c.h.b16 %v2850
      %v2905 = vunpack.c.l.b16 %v2851
      %v2906 = vunpack.c.h.b16 %v2851
      %v2907 = vpack.c.b16 %v2877, %v2875
      %v2908 = vpack.c.b16 %v2878, %v2876
      %v2909 = vpack.c.b16 %v2881, %v2879
      %v2910 = vpack.c.b16 %v2882, %v2880
      %v2911 = vpack.c.b16 %v2885, %v2883
      %v2912 = vpack.c.b16 %v2886, %v2884
      %v2913 = vpack.c.b16 %v2889, %v2887
      %v2914 = vpack.c.b16 %v2890, %v2888
      %v2915 = vpack.c.b16 %v2893, %v2891
      %v2916 = vpack.c.b16 %v2894, %v2892
      %v2917 = vpack.c.b16 %v2897, %v2895
      %v2918 = vpack.c.b16 %v2898, %v2896
      %v2919 = vpack.c.b16 %v2901, %v2899
      %v2920 = vpack.c.b16 %v2902, %v2900
      %v2921 = vpack.c.b16 %v2905, %v2903
      %v2922 = vpack.c.b16 %v2906, %v2904
      %2939 = vmatpush.bf16.msra.mxu0 %v2921
      %2940 = vmatpush.bf16.msra.mxu0 %v2919
      %2941 = vmatpush.bf16.msra.mxu0 %v2917
      %2942 = vmatpush.bf16.msra.mxu0 %v2915
      %2943 = vmatpush.bf16.msra.mxu0 %v2913
      %2944 = vmatpush.bf16.msra.mxu0 %v2911
      %2945 = vmatpush.bf16.msra.mxu0 %v2909
      %2946 = vmatpush.bf16.msra.mxu0 %v2907
      %2947 = vmatmul.bf16.gmra.mxu0 %v2827
      %v2948 = vpop.f32.mrf.mxu0
      %v2949 = vadd.f32 %v2855, %v2948
      %v2950 = vpop.f32.mrf.mxu0
      %v2951 = vadd.f32 %v2855, %v2950
      %2952 = vmatmul.bf16.gmra.mxu0 %v2828
      %v2953 = vpop.f32.mrf.mxu0
      %v2954 = vadd.f32 %v2855, %v2953
      %v2955 = vpop.f32.mrf.mxu0
      %v2956 = vadd.f32 %v2855, %v2955
      %2957 = vmatmul.bf16.gmra.mxu0 %v2829
      %v2958 = vpop.f32.mrf.mxu0
      %v2959 = vadd.f32 %v2855, %v2958
      %v2960 = vpop.f32.mrf.mxu0
      %v2961 = vadd.f32 %v2855, %v2960
      %2962 = vmatmul.bf16.gmra.mxu0 %v2830
      %v2963 = vpop.f32.mrf.mxu0
      %v2964 = vadd.f32 %v2855, %v2963
      %v2965 = vpop.f32.mrf.mxu0
      %v2966 = vadd.f32 %v2855, %v2965
      %2967 = vmatmul.bf16.gmra.mxu0 %v2831
      %v2968 = vpop.f32.mrf.mxu0
      %v2969 = vadd.f32 %v2855, %v2968
      %v2970 = vpop.f32.mrf.mxu0
      %v2971 = vadd.f32 %v2855, %v2970
      %2972 = vmatmul.bf16.gmra.mxu0 %v2832
      %v2973 = vpop.f32.mrf.mxu0
      %v2974 = vadd.f32 %v2855, %v2973
      %v2975 = vpop.f32.mrf.mxu0
      %v2976 = vadd.f32 %v2855, %v2975
      %2977 = vmatmul.bf16.gmra.mxu0 %v2833
      %v2978 = vpop.f32.mrf.mxu0
      %v2979 = vadd.f32 %v2855, %v2978
      %v2980 = vpop.f32.mrf.mxu0
      %v2981 = vadd.f32 %v2855, %v2980
      %2982 = vmatmul.bf16.gmra.mxu0 %v2834
      %v2983 = vpop.f32.mrf.mxu0
      %v2984 = vadd.f32 %v2855, %v2983
      %v2985 = vpop.f32.mrf.mxu0
      %v2986 = vadd.f32 %v2855, %v2985
      %2987 = vdwg.mxu0
      %2988 = vmatpush.bf16.msra.mxu0 %v2922
      %2989 = vmatpush.bf16.msra.mxu0 %v2920
      %2990 = vmatpush.bf16.msra.mxu0 %v2918
      %2991 = vmatpush.bf16.msra.mxu0 %v2916
      %2992 = vmatpush.bf16.msra.mxu0 %v2914
      %2993 = vmatpush.bf16.msra.mxu0 %v2912
      %2994 = vmatpush.bf16.msra.mxu0 %v2910
      %2995 = vmatpush.bf16.msra.mxu0 %v2908
      %2996 = vmatmul.bf16.gmra.mxu0 %v2827
      %v2997 = vpop.f32.mrf.mxu0
      %v2998 = vadd.f32 %v2856, %v2997
      %v2999 = vpop.f32.mrf.mxu0
      %v3000 = vadd.f32 %v2856, %v2999
      %3001 = vmatmul.bf16.gmra.mxu0 %v2828
      %v3002 = vpop.f32.mrf.mxu0
      %v3003 = vadd.f32 %v2856, %v3002
      %v3004 = vpop.f32.mrf.mxu0
      %v3005 = vadd.f32 %v2856, %v3004
      %3006 = vmatmul.bf16.gmra.mxu0 %v2829
      %v3007 = vpop.f32.mrf.mxu0
      %v3008 = vadd.f32 %v2856, %v3007
      %v3009 = vpop.f32.mrf.mxu0
      %v3010 = vadd.f32 %v2856, %v3009
      %3011 = vmatmul.bf16.gmra.mxu0 %v2830
      %v3012 = vpop.f32.mrf.mxu0
      %v3013 = vadd.f32 %v2856, %v3012
      %v3014 = vpop.f32.mrf.mxu0
      %v3015 = vadd.f32 %v2856, %v3014
      %3016 = vmatmul.bf16.gmra.mxu0 %v2831
      %v3017 = vpop.f32.mrf.mxu0
      %v3018 = vadd.f32 %v2856, %v3017
      %v3019 = vpop.f32.mrf.mxu0
      %v3020 = vadd.f32 %v2856, %v3019
      %3021 = vmatmul.bf16.gmra.mxu0 %v2832
      %v3022 = vpop.f32.mrf.mxu0
      %v3023 = vadd.f32 %v2856, %v3022
      %v3024 = vpop.f32.mrf.mxu0
      %v3025 = vadd.f32 %v2856, %v3024
      %3026 = vmatmul.bf16.gmra.mxu0 %v2833
      %v3027 = vpop.f32.mrf.mxu0
      %v3028 = vadd.f32 %v2856, %v3027
      %v3029 = vpop.f32.mrf.mxu0
      %v3030 = vadd.f32 %v2856, %v3029
      %3031 = vmatmul.bf16.gmra.mxu0 %v2834
      %v3032 = vpop.f32.mrf.mxu0
      %v3033 = vadd.f32 %v2856, %v3032
      %v3034 = vpop.f32.mrf.mxu0
      %v3035 = vadd.f32 %v2856, %v3034
      %3036 = vdwg.mxu0
      %v3037 = vmul.f32 %v2949, %v2949
      %v3038 = vmul.f32 %v2998, %v2998
      %v3039 = vmul.f32 %v2951, %v2951
      %v3040 = vmul.f32 %v3000, %v3000
      %v3041 = vmul.f32 %v2954, %v2954
      %v3042 = vmul.f32 %v3003, %v3003
      %v3043 = vmul.f32 %v2956, %v2956
      %v3044 = vmul.f32 %v3005, %v3005
      %v3045 = vmul.f32 %v2959, %v2959
      %v3046 = vmul.f32 %v3008, %v3008
      %v3047 = vmul.f32 %v2961, %v2961
      %v3048 = vmul.f32 %v3010, %v3010
      %v3049 = vmul.f32 %v2964, %v2964
      %v3050 = vmul.f32 %v3013, %v3013
      %v3051 = vmul.f32 %v2966, %v2966
      %v3052 = vmul.f32 %v3015, %v3015
      %v3053 = vmul.f32 %v2969, %v2969
      %v3054 = vmul.f32 %v3018, %v3018
      %v3055 = vmul.f32 %v2971, %v2971
      %v3056 = vmul.f32 %v3020, %v3020
      %v3057 = vmul.f32 %v2974, %v2974
      %v3058 = vmul.f32 %v3023, %v3023
      %v3059 = vmul.f32 %v2976, %v2976
      %v3060 = vmul.f32 %v3025, %v3025
      %v3061 = vmul.f32 %v2979, %v2979
      %v3062 = vmul.f32 %v3028, %v3028
      %v3063 = vmul.f32 %v2981, %v2981
      %v3064 = vmul.f32 %v3030, %v3030
      %v3065 = vmul.f32 %v2984, %v2984
      %v3066 = vmul.f32 %v3033, %v3033
      %v3067 = vmul.f32 %v2986, %v2986
      %v3068 = vmul.f32 %v3035, %v3035
      %v3069 = vmul.f32 %v2949, %v3037
      %v3070 = vmul.f32 %v2998, %v3038
      %v3071 = vmul.f32 %v2951, %v3039
      %v3072 = vmul.f32 %v3000, %v3040
      %v3073 = vmul.f32 %v2954, %v3041
      %v3074 = vmul.f32 %v3003, %v3042
      %v3075 = vmul.f32 %v2956, %v3043
      %v3076 = vmul.f32 %v3005, %v3044
      %v3077 = vmul.f32 %v2959, %v3045
      %v3078 = vmul.f32 %v3008, %v3046
      %v3079 = vmul.f32 %v2961, %v3047
      %v3080 = vmul.f32 %v3010, %v3048
      %v3081 = vmul.f32 %v2964, %v3049
      %v3082 = vmul.f32 %v3013, %v3050
      %v3083 = vmul.f32 %v2966, %v3051
      %v3084 = vmul.f32 %v3015, %v3052
      %v3085 = vmul.f32 %v2969, %v3053
      %v3086 = vmul.f32 %v3018, %v3054
      %v3087 = vmul.f32 %v2971, %v3055
      %v3088 = vmul.f32 %v3020, %v3056
      %v3089 = vmul.f32 %v2974, %v3057
      %v3090 = vmul.f32 %v3023, %v3058
      %v3091 = vmul.f32 %v2976, %v3059
      %v3092 = vmul.f32 %v3025, %v3060
      %v3093 = vmul.f32 %v2979, %v3061
      %v3094 = vmul.f32 %v3028, %v3062
      %v3095 = vmul.f32 %v2981, %v3063
      %v3096 = vmul.f32 %v3030, %v3064
      %v3097 = vmul.f32 %v2984, %v3065
      %v3098 = vmul.f32 %v3033, %v3066
      %v3099 = vmul.f32 %v2986, %v3067
      %v3100 = vmul.f32 %v3035, %v3068
      %v3101 = vmul.f32 %v3069, 0.044715
      %v3102 = vmul.f32 %v3070, 0.044715
      %v3103 = vmul.f32 %v3071, 0.044715
      %v3104 = vmul.f32 %v3072, 0.044715
      %v3105 = vmul.f32 %v3073, 0.044715
      %v3106 = vmul.f32 %v3074, 0.044715
      %v3107 = vmul.f32 %v3075, 0.044715
      %v3108 = vmul.f32 %v3076, 0.044715
      %v3109 = vmul.f32 %v3077, 0.044715
      %v3110 = vmul.f32 %v3078, 0.044715
      %v3111 = vmul.f32 %v3079, 0.044715
      %v3112 = vmul.f32 %v3080, 0.044715
      %v3113 = vmul.f32 %v3081, 0.044715
      %v3114 = vmul.f32 %v3082, 0.044715
      %v3115 = vmul.f32 %v3083, 0.044715
      %v3116 = vmul.f32 %v3084, 0.044715
      %v3117 = vmul.f32 %v3085, 0.044715
      %v3118 = vmul.f32 %v3086, 0.044715
      %v3119 = vmul.f32 %v3087, 0.044715
      %v3120 = vmul.f32 %v3088, 0.044715
      %v3121 = vmul.f32 %v3089, 0.044715
      %v3122 = vmul.f32 %v3090, 0.044715
      %v3123 = vmul.f32 %v3091, 0.044715
      %v3124 = vmul.f32 %v3092, 0.044715
      %v3125 = vmul.f32 %v3093, 0.044715
      %v3126 = vmul.f32 %v3094, 0.044715
      %v3127 = vmul.f32 %v3095, 0.044715
      %v3128 = vmul.f32 %v3096, 0.044715
      %v3129 = vmul.f32 %v3097, 0.044715
      %v3130 = vmul.f32 %v3098, 0.044715
      %v3131 = vmul.f32 %v3099, 0.044715
      %v3132 = vmul.f32 %v3100, 0.044715
      %v3133 = vadd.f32 %v2949, %v3101
      %v3134 = vadd.f32 %v2998, %v3102
      %v3135 = vadd.f32 %v2951, %v3103
      %v3136 = vadd.f32 %v3000, %v3104
      %v3137 = vadd.f32 %v2954, %v3105
      %v3138 = vadd.f32 %v3003, %v3106
      %v3139 = vadd.f32 %v2956, %v3107
      %v3140 = vadd.f32 %v3005, %v3108
      %v3141 = vadd.f32 %v2959, %v3109
      %v3142 = vadd.f32 %v3008, %v3110
      %v3143 = vadd.f32 %v2961, %v3111
      %v3144 = vadd.f32 %v3010, %v3112
      %v3145 = vadd.f32 %v2964, %v3113
      %v3146 = vadd.f32 %v3013, %v3114
      %v3147 = vadd.f32 %v2966, %v3115
      %v3148 = vadd.f32 %v3015, %v3116
      %v3149 = vadd.f32 %v2969, %v3117
      %v3150 = vadd.f32 %v3018, %v3118
      %v3151 = vadd.f32 %v2971, %v3119
      %v3152 = vadd.f32 %v3020, %v3120
      %v3153 = vadd.f32 %v2974, %v3121
      %v3154 = vadd.f32 %v3023, %v3122
      %v3155 = vadd.f32 %v2976, %v3123
      %v3156 = vadd.f32 %v3025, %v3124
      %v3157 = vadd.f32 %v2979, %v3125
      %v3158 = vadd.f32 %v3028, %v3126
      %v3159 = vadd.f32 %v2981, %v3127
      %v3160 = vadd.f32 %v3030, %v3128
      %v3161 = vadd.f32 %v2984, %v3129
      %v3162 = vadd.f32 %v3033, %v3130
      %v3163 = vadd.f32 %v2986, %v3131
      %v3164 = vadd.f32 %v3035, %v3132
      %v3165 = vmul.f32 %v3133, 0.7978846
      %v3166 = vmul.f32 %v3134, 0.7978846
      %v3167 = vmul.f32 %v3135, 0.7978846
      %v3168 = vmul.f32 %v3136, 0.7978846
      %v3169 = vmul.f32 %v3137, 0.7978846
      %v3170 = vmul.f32 %v3138, 0.7978846
      %v3171 = vmul.f32 %v3139, 0.7978846
      %v3172 = vmul.f32 %v3140, 0.7978846
      %v3173 = vmul.f32 %v3141, 0.7978846
      %v3174 = vmul.f32 %v3142, 0.7978846
      %v3175 = vmul.f32 %v3143, 0.7978846
      %v3176 = vmul.f32 %v3144, 0.7978846
      %v3177 = vmul.f32 %v3145, 0.7978846
      %v3178 = vmul.f32 %v3146, 0.7978846
      %v3179 = vmul.f32 %v3147, 0.7978846
      %v3180 = vmul.f32 %v3148, 0.7978846
      %v3181 = vmul.f32 %v3149, 0.7978846
      %v3182 = vmul.f32 %v3150, 0.7978846
      %v3183 = vmul.f32 %v3151, 0.7978846
      %v3184 = vmul.f32 %v3152, 0.7978846
      %v3185 = vmul.f32 %v3153, 0.7978846
      %v3186 = vmul.f32 %v3154, 0.7978846
      %v3187 = vmul.f32 %v3155, 0.7978846
      %v3188 = vmul.f32 %v3156, 0.7978846
      %v3189 = vmul.f32 %v3157, 0.7978846
      %v3190 = vmul.f32 %v3158, 0.7978846
      %v3191 = vmul.f32 %v3159, 0.7978846
      %v3192 = vmul.f32 %v3160, 0.7978846
      %v3193 = vmul.f32 %v3161, 0.7978846
      %v3194 = vmul.f32 %v3162, 0.7978846
      %v3195 = vmul.f32 %v3163, 0.7978846
      %v3196 = vmul.f32 %v3164, 0.7978846
      %v3197 = vtanh.pop %v3165
      %v3198 = vtanh.pop %v3166
      %v3199 = vtanh.pop %v3167
      %v3200 = vtanh.pop %v3168
      %v3201 = vtanh.pop %v3169
      %v3202 = vtanh.pop %v3170
      %v3203 = vtanh.pop %v3171
      %v3204 = vtanh.pop %v3172
      %v3205 = vtanh.pop %v3173
      %v3206 = vtanh.pop %v3174
      %v3207 = vtanh.pop %v3175
      %v3208 = vtanh.pop %v3176
      %v3209 = vtanh.pop %v3177
      %v3210 = vtanh.pop %v3178
      %v3211 = vtanh.pop %v3179
      %v3212 = vtanh.pop %v3180
      %v3213 = vtanh.pop %v3181
      %v3214 = vtanh.pop %v3182
      %v3215 = vtanh.pop %v3183
      %v3216 = vtanh.pop %v3184
      %v3217 = vtanh.pop %v3185
      %v3218 = vtanh.pop %v3186
      %v3219 = vtanh.pop %v3187
      %v3220 = vtanh.pop %v3188
      %v3221 = vtanh.pop %v3189
      %v3222 = vtanh.pop %v3190
      %v3223 = vtanh.pop %v3191
      %v3224 = vtanh.pop %v3192
      %v3225 = vtanh.pop %v3193
      %v3226 = vtanh.pop %v3194
      %v3227 = vtanh.pop %v3195
      %v3228 = vtanh.pop %v3196
      %v3229 = vadd.f32 %v3197, 1.0
      %v3230 = vadd.f32 %v3198, 1.0
      %v3231 = vadd.f32 %v3199, 1.0
      %v3232 = vadd.f32 %v3200, 1.0
      %v3233 = vadd.f32 %v3201, 1.0
      %v3234 = vadd.f32 %v3202, 1.0
      %v3235 = vadd.f32 %v3203, 1.0
      %v3236 = vadd.f32 %v3204, 1.0
      %v3237 = vadd.f32 %v3205, 1.0
      %v3238 = vadd.f32 %v3206, 1.0
      %v3239 = vadd.f32 %v3207, 1.0
      %v3240 = vadd.f32 %v3208, 1.0
      %v3241 = vadd.f32 %v3209, 1.0
      %v3242 = vadd.f32 %v3210, 1.0
      %v3243 = vadd.f32 %v3211, 1.0
      %v3244 = vadd.f32 %v3212, 1.0
      %v3245 = vadd.f32 %v3213, 1.0
      %v3246 = vadd.f32 %v3214, 1.0
      %v3247 = vadd.f32 %v3215, 1.0
      %v3248 = vadd.f32 %v3216, 1.0
      %v3249 = vadd.f32 %v3217, 1.0
      %v3250 = vadd.f32 %v3218, 1.0
      %v3251 = vadd.f32 %v3219, 1.0
      %v3252 = vadd.f32 %v3220, 1.0
      %v3253 = vadd.f32 %v3221, 1.0
      %v3254 = vadd.f32 %v3222, 1.0
      %v3255 = vadd.f32 %v3223, 1.0
      %v3256 = vadd.f32 %v3224, 1.0
      %v3257 = vadd.f32 %v3225, 1.0
      %v3258 = vadd.f32 %v3226, 1.0
      %v3259 = vadd.f32 %v3227, 1.0
      %v3260 = vadd.f32 %v3228, 1.0
      %v3261 = vmul.f32 %v3229, 0.5
      %v3262 = vmul.f32 %v3230, 0.5
      %v3263 = vmul.f32 %v3231, 0.5
      %v3264 = vmul.f32 %v3232, 0.5
      %v3265 = vmul.f32 %v3233, 0.5
      %v3266 = vmul.f32 %v3234, 0.5
      %v3267 = vmul.f32 %v3235, 0.5
      %v3268 = vmul.f32 %v3236, 0.5
      %v3269 = vmul.f32 %v3237, 0.5
      %v3270 = vmul.f32 %v3238, 0.5
      %v3271 = vmul.f32 %v3239, 0.5
      %v3272 = vmul.f32 %v3240, 0.5
      %v3273 = vmul.f32 %v3241, 0.5
      %v3274 = vmul.f32 %v3242, 0.5
      %v3275 = vmul.f32 %v3243, 0.5
      %v3276 = vmul.f32 %v3244, 0.5
      %v3277 = vmul.f32 %v3245, 0.5
      %v3278 = vmul.f32 %v3246, 0.5
      %v3279 = vmul.f32 %v3247, 0.5
      %v3280 = vmul.f32 %v3248, 0.5
      %v3281 = vmul.f32 %v3249, 0.5
      %v3282 = vmul.f32 %v3250, 0.5
      %v3283 = vmul.f32 %v3251, 0.5
      %v3284 = vmul.f32 %v3252, 0.5
      %v3285 = vmul.f32 %v3253, 0.5
      %v3286 = vmul.f32 %v3254, 0.5
      %v3287 = vmul.f32 %v3255, 0.5
      %v3288 = vmul.f32 %v3256, 0.5
      %v3289 = vmul.f32 %v3257, 0.5
      %v3290 = vmul.f32 %v3258, 0.5
      %v3291 = vmul.f32 %v3259, 0.5
      %v3292 = vmul.f32 %v3260, 0.5
      %v3293 = vmul.f32 %v2949, %v3261
      %v3294 = vmul.f32 %v2998, %v3262
      %v3295 = vmul.f32 %v2951, %v3263
      %v3296 = vmul.f32 %v3000, %v3264
      %v3297 = vmul.f32 %v2954, %v3265
      %v3298 = vmul.f32 %v3003, %v3266
      %v3299 = vmul.f32 %v2956, %v3267
      %v3300 = vmul.f32 %v3005, %v3268
      %v3301 = vmul.f32 %v2959, %v3269
      %v3302 = vmul.f32 %v3008, %v3270
      %v3303 = vmul.f32 %v2961, %v3271
      %v3304 = vmul.f32 %v3010, %v3272
      %v3305 = vmul.f32 %v2964, %v3273
      %v3306 = vmul.f32 %v3013, %v3274
      %v3307 = vmul.f32 %v2966, %v3275
      %v3308 = vmul.f32 %v3015, %v3276
      %v3309 = vmul.f32 %v2969, %v3277
      %v3310 = vmul.f32 %v3018, %v3278
      %v3311 = vmul.f32 %v2971, %v3279
      %v3312 = vmul.f32 %v3020, %v3280
      %v3313 = vmul.f32 %v2974, %v3281
      %v3314 = vmul.f32 %v3023, %v3282
      %v3315 = vmul.f32 %v2976, %v3283
      %v3316 = vmul.f32 %v3025, %v3284
      %v3317 = vmul.f32 %v2979, %v3285
      %v3318 = vmul.f32 %v3028, %v3286
      %v3319 = vmul.f32 %v2981, %v3287
      %v3320 = vmul.f32 %v3030, %v3288
      %v3321 = vmul.f32 %v2984, %v3289
      %v3322 = vmul.f32 %v3033, %v3290
      %v3323 = vmul.f32 %v2986, %v3291
      %v3324 = vmul.f32 %v3035, %v3292
      %v3325 = vpack.c.bf16 %v3295, %v3293
      %v3326 = vpack.c.bf16 %v3296, %v3294
      %v3327 = vpack.c.bf16 %v3299, %v3297
      %v3328 = vpack.c.bf16 %v3300, %v3298
      %v3329 = vpack.c.bf16 %v3303, %v3301
      %v3330 = vpack.c.bf16 %v3304, %v3302
      %v3331 = vpack.c.bf16 %v3307, %v3305
      %v3332 = vpack.c.bf16 %v3308, %v3306
      %v3333 = vpack.c.bf16 %v3311, %v3309
      %v3334 = vpack.c.bf16 %v3312, %v3310
      %v3335 = vpack.c.bf16 %v3315, %v3313
      %v3336 = vpack.c.bf16 %v3316, %v3314
      %v3337 = vpack.c.bf16 %v3319, %v3317
      %v3338 = vpack.c.bf16 %v3320, %v3318
      %v3339 = vpack.c.bf16 %v3323, %v3321
      %v3340 = vpack.c.bf16 %v3324, %v3322
      %s3341 = scalar_lea.vmem %s4, 128
      %v3342 = vld [vmem:[%s3341] sm:$0xf]
      %v3343 = vld [vmem:[%s3341 + $0x4] sm:$0xf]
      %v3344 = vld [vmem:[%s3341 + $0x8] sm:$0xf]
      %v3345 = vld [vmem:[%s3341 + $0xc] sm:$0xf]
      %v3346 = vld [vmem:[%s3341 + $0x10] sm:$0xf]
      %v3347 = vld [vmem:[%s3341 + $0x14] sm:$0xf]
      %v3348 = vld [vmem:[%s3341 + $0x18] sm:$0xf]
      %v3349 = vld [vmem:[%s3341 + $0x1c] sm:$0xf]
      %v3350 = vld [vmem:[%s3341 + $0x20] sm:$0xf]
      %v3351 = vld [vmem:[%s3341 + $0x24] sm:$0xf]
      %v3352 = vld [vmem:[%s3341 + $0x28] sm:$0xf]
      %v3353 = vld [vmem:[%s3341 + $0x2c] sm:$0xf]
      %v3354 = vld [vmem:[%s3341 + $0x30] sm:$0xf]
      %v3355 = vld [vmem:[%s3341 + $0x34] sm:$0xf]
      %v3356 = vld [vmem:[%s3341 + $0x38] sm:$0xf]
      %v3357 = vld [vmem:[%s3341 + $0x3c] sm:$0xf]
      %v3358 = vld [vmem:[%s3341 + $0x40] sm:$0xf]
      %v3359 = vld [vmem:[%s3341 + $0x44] sm:$0xf]
      %v3360 = vld [vmem:[%s3341 + $0x48] sm:$0xf]
      %v3361 = vld [vmem:[%s3341 + $0x4c] sm:$0xf]
      %v3362 = vld [vmem:[%s3341 + $0x50] sm:$0xf]
      %v3363 = vld [vmem:[%s3341 + $0x54] sm:$0xf]
      %v3364 = vld [vmem:[%s3341 + $0x58] sm:$0xf]
      %v3365 = vld [vmem:[%s3341 + $0x5c] sm:$0xf]
      %v3366 = vld [vmem:[%s3341 + $0x60] sm:$0xf]
      %v3367 = vld [vmem:[%s3341 + $0x64] sm:$0xf]
      %v3368 = vld [vmem:[%s3341 + $0x68] sm:$0xf]
      %v3369 = vld [vmem:[%s3341 + $0x6c] sm:$0xf]
      %v3370 = vld [vmem:[%s3341 + $0x70] sm:$0xf]
      %v3371 = vld [vmem:[%s3341 + $0x74] sm:$0xf]
      %v3372 = vld [vmem:[%s3341 + $0x78] sm:$0xf]
      %v3373 = vld [vmem:[%s3341 + $0x7c] sm:$0xf]
      %s3374 = scalar_lea.vmem %s7, 16
      %v3375 = vld [vmem:[%s3374] sm:$0x3]
      %v3377 = vperm.slane %v3375, 0
      %v3411 = vunpack.c.l.b16 %v3342
      %v3412 = vunpack.c.l.b16 %v3343
      %v3413 = vunpack.c.l.b16 %v3344
      %v3414 = vunpack.c.l.b16 %v3345
      %v3415 = vunpack.c.l.b16 %v3346
      %v3416 = vunpack.c.l.b16 %v3347
      %v3417 = vunpack.c.l.b16 %v3348
      %v3418 = vunpack.c.l.b16 %v3349
      %v3419 = vunpack.c.l.b16 %v3350
      %v3420 = vunpack.c.l.b16 %v3351
      %v3421 = vunpack.c.l.b16 %v3352
      %v3422 = vunpack.c.l.b16 %v3353
      %v3423 = vunpack.c.l.b16 %v3354
      %v3424 = vunpack.c.l.b16 %v3355
      %v3425 = vunpack.c.l.b16 %v3356
      %v3426 = vunpack.c.l.b16 %v3357
      %v3427 = vunpack.c.l.b16 %v3358
      %v3428 = vunpack.c.l.b16 %v3359
      %v3429 = vunpack.c.l.b16 %v3360
      %v3430 = vunpack.c.l.b16 %v3361
      %v3431 = vunpack.c.l.b16 %v3362
      %v3432 = vunpack.c.l.b16 %v3363
      %v3433 = vunpack.c.l.b16 %v3364
      %v3434 = vunpack.c.l.b16 %v3365
      %v3435 = vunpack.c.l.b16 %v3366
      %v3436 = vunpack.c.l.b16 %v3367
      %v3437 = vunpack.c.l.b16 %v3368
      %v3438 = vunpack.c.l.b16 %v3369
      %v3439 = vunpack.c.l.b16 %v3370
      %v3440 = vunpack.c.l.b16 %v3371
      %v3441 = vunpack.c.l.b16 %v3372
      %v3442 = vunpack.c.l.b16 %v3373
      %v3443 = vpack.c.b16 %v3412, %v3411
      %v3444 = vpack.c.b16 %v3414, %v3413
      %v3445 = vpack.c.b16 %v3416, %v3415
      %v3446 = vpack.c.b16 %v3418, %v3417
      %v3447 = vpack.c.b16 %v3420, %v3419
      %v3448 = vpack.c.b16 %v3422, %v3421
      %v3449 = vpack.c.b16 %v3424, %v3423
      %v3450 = vpack.c.b16 %v3426, %v3425
      %v3451 = vpack.c.b16 %v3428, %v3427
      %v3452 = vpack.c.b16 %v3430, %v3429
      %v3453 = vpack.c.b16 %v3432, %v3431
      %v3454 = vpack.c.b16 %v3434, %v3433
      %v3455 = vpack.c.b16 %v3436, %v3435
      %v3456 = vpack.c.b16 %v3438, %v3437
      %v3457 = vpack.c.b16 %v3440, %v3439
      %v3458 = vpack.c.b16 %v3442, %v3441
      %3475 = vmatpush.bf16.msra.mxu0 %v3450
      %3476 = vmatpush.bf16.msra.mxu0 %v3449
      %3477 = vmatpush.bf16.msra.mxu0 %v3448
      %3478 = vmatpush.bf16.msra.mxu0 %v3447
      %3479 = vmatpush.bf16.msra.mxu0 %v3446
      %3480 = vmatpush.bf16.msra.mxu0 %v3445
      %3481 = vmatpush.bf16.msra.mxu0 %v3444
      %3482 = vmatpush.bf16.msra.mxu0 %v3443
      %3483 = vmatmul.bf16.gmra.mxu0 %v3325
      %v3484 = vpop.f32.mrf.mxu0
      %v3485 = vadd.f32 %v3377, %v3484
      %v3486 = vpop.f32.mrf.mxu0
      %v3487 = vadd.f32 %v3377, %v3486
      %3488 = vmatmul.bf16.gmra.mxu0 %v3327
      %v3489 = vpop.f32.mrf.mxu0
      %v3490 = vadd.f32 %v3377, %v3489
      %v3491 = vpop.f32.mrf.mxu0
      %v3492 = vadd.f32 %v3377, %v3491
      %3493 = vmatmul.bf16.gmra.mxu0 %v3329
      %v3494 = vpop.f32.mrf.mxu0
      %v3495 = vadd.f32 %v3377, %v3494
      %v3496 = vpop.f32.mrf.mxu0
      %v3497 = vadd.f32 %v3377, %v3496
      %3498 = vmatmul.bf16.gmra.mxu0 %v3331
      %v3499 = vpop.f32.mrf.mxu0
      %v3500 = vadd.f32 %v3377, %v3499
      %v3501 = vpop.f32.mrf.mxu0
      %v3502 = vadd.f32 %v3377, %v3501
      %3503 = vmatmul.bf16.gmra.mxu0 %v3333
      %v3504 = vpop.f32.mrf.mxu0
      %v3505 = vadd.f32 %v3377, %v3504
      %v3506 = vpop.f32.mrf.mxu0
      %v3507 = vadd.f32 %v3377, %v3506
      %3508 = vmatmul.bf16.gmra.mxu0 %v3335
      %v3509 = vpop.f32.mrf.mxu0
      %v3510 = vadd.f32 %v3377, %v3509
      %v3511 = vpop.f32.mrf.mxu0
      %v3512 = vadd.f32 %v3377, %v3511
      %3513 = vmatmul.bf16.gmra.mxu0 %v3337
      %v3514 = vpop.f32.mrf.mxu0
      %v3515 = vadd.f32 %v3377, %v3514
      %v3516 = vpop.f32.mrf.mxu0
      %v3517 = vadd.f32 %v3377, %v3516
      %3518 = vmatmul.bf16.gmra.mxu0 %v3339
      %v3519 = vpop.f32.mrf.mxu0
      %v3520 = vadd.f32 %v3377, %v3519
      %v3521 = vpop.f32.mrf.mxu0
      %v3522 = vadd.f32 %v3377, %v3521
      %3523 = vdwg.mxu0
      %3524 = vmatpush.bf16.msra.mxu0 %v3458
      %3525 = vmatpush.bf16.msra.mxu0 %v3457
      %3526 = vmatpush.bf16.msra.mxu0 %v3456
      %3527 = vmatpush.bf16.msra.mxu0 %v3455
      %3528 = vmatpush.bf16.msra.mxu0 %v3454
      %3529 = vmatpush.bf16.msra.mxu0 %v3453
      %3530 = vmatpush.bf16.msra.mxu0 %v3452
      %3531 = vmatpush.bf16.msra.mxu0 %v3451
      %3532 = vmatmul.bf16.gmra.mxu0 %v3326
      %v3533 = vpop.f32.mrf.mxu0
      %v3534 = vadd.f32 %v3485, %v3533
      %v3535 = vpop.f32.mrf.mxu0
      %v3536 = vadd.f32 %v3487, %v3535
      %3537 = vmatmul.bf16.gmra.mxu0 %v3328
      %v3538 = vpop.f32.mrf.mxu0
      %v3539 = vadd.f32 %v3490, %v3538
      %v3540 = vpop.f32.mrf.mxu0
      %v3541 = vadd.f32 %v3492, %v3540
      %3542 = vmatmul.bf16.gmra.mxu0 %v3330
      %v3543 = vpop.f32.mrf.mxu0
      %v3544 = vadd.f32 %v3495, %v3543
      %v3545 = vpop.f32.mrf.mxu0
      %v3546 = vadd.f32 %v3497, %v3545
      %3547 = vmatmul.bf16.gmra.mxu0 %v3332
      %v3548 = vpop.f32.mrf.mxu0
      %v3549 = vadd.f32 %v3500, %v3548
      %v3550 = vpop.f32.mrf.mxu0
      %v3551 = vadd.f32 %v3502, %v3550
      %3552 = vmatmul.bf16.gmra.mxu0 %v3334
      %v3553 = vpop.f32.mrf.mxu0
      %v3554 = vadd.f32 %v3505, %v3553
      %v3555 = vpop.f32.mrf.mxu0
      %v3556 = vadd.f32 %v3507, %v3555
      %3557 = vmatmul.bf16.gmra.mxu0 %v3336
      %v3558 = vpop.f32.mrf.mxu0
      %v3559 = vadd.f32 %v3510, %v3558
      %v3560 = vpop.f32.mrf.mxu0
      %v3561 = vadd.f32 %v3512, %v3560
      %3562 = vmatmul.bf16.gmra.mxu0 %v3338
      %v3563 = vpop.f32.mrf.mxu0
      %v3564 = vadd.f32 %v3515, %v3563
      %v3565 = vpop.f32.mrf.mxu0
      %v3566 = vadd.f32 %v3517, %v3565
      %3567 = vmatmul.bf16.gmra.mxu0 %v3340
      %v3568 = vpop.f32.mrf.mxu0
      %v3569 = vadd.f32 %v3520, %v3568
      %v3570 = vpop.f32.mrf.mxu0
      %v3571 = vadd.f32 %v3522, %v3570
      %3572 = vdwg.mxu0
      %v3573 = vadd.f32 %v2449, %v3534
      %v3574 = vadd.f32 %v2450, %v3536
      %v3575 = vadd.f32 %v2451, %v3539
      %v3576 = vadd.f32 %v2452, %v3541
      %v3577 = vadd.f32 %v2453, %v3544
      %v3578 = vadd.f32 %v2454, %v3546
      %v3579 = vadd.f32 %v2455, %v3549
      %v3580 = vadd.f32 %v2456, %v3551
      %v3581 = vadd.f32 %v2457, %v3554
      %v3582 = vadd.f32 %v2458, %v3556
      %v3583 = vadd.f32 %v2459, %v3559
      %v3584 = vadd.f32 %v2460, %v3561
      %v3585 = vadd.f32 %v2461, %v3564
      %v3586 = vadd.f32 %v2462, %v3566
      %v3587 = vadd.f32 %v2463, %v3569
      %v3588 = vadd.f32 %v2464, %v3571
      %v3589 = vpack.c.bf16 %v3574, %v3573
      %v3590 = vpack.c.bf16 %v3576, %v3575
      %v3591 = vpack.c.bf16 %v3578, %v3577
      %v3592 = vpack.c.bf16 %v3580, %v3579
      %v3593 = vpack.c.bf16 %v3582, %v3581
      %v3594 = vpack.c.bf16 %v3584, %v3583
      %v3595 = vpack.c.bf16 %v3586, %v3585
      %v3596 = vpack.c.bf16 %v3588, %v3587
      %v3597 = vld [vmem:[%s5] sm:$0xf]
      %v3598 = vld [vmem:[%s5 + $0x4] sm:$0xf]
      %v3599 = vld [vmem:[%s5 + $0x8] sm:$0xf]
      %v3600 = vld [vmem:[%s5 + $0xc] sm:$0xf]
      %v3601 = vld [vmem:[%s5 + $0x10] sm:$0xf]
      %v3602 = vld [vmem:[%s5 + $0x14] sm:$0xf]
      %v3603 = vld [vmem:[%s5 + $0x18] sm:$0xf]
      %v3604 = vld [vmem:[%s5 + $0x1c] sm:$0xf]
      %v3605 = vld [vmem:[%s5 + $0x20] sm:$0xf]
      %v3606 = vld [vmem:[%s5 + $0x24] sm:$0xf]
      %v3607 = vld [vmem:[%s5 + $0x28] sm:$0xf]
      %v3608 = vld [vmem:[%s5 + $0x2c] sm:$0xf]
      %v3609 = vld [vmem:[%s5 + $0x30] sm:$0xf]
      %v3610 = vld [vmem:[%s5 + $0x34] sm:$0xf]
      %v3611 = vld [vmem:[%s5 + $0x38] sm:$0xf]
      %v3612 = vld [vmem:[%s5 + $0x3c] sm:$0xf]
      %s3613 = scalar_lea.vmem %s7, 18
      %v3614 = vld [vmem:[%s3613] sm:$0x3]
      %v3616 = vperm.slane %v3614, 0
      %v3634 = vunpack.c.l.b16 %v3597
      %v3635 = vunpack.c.l.b16 %v3598
      %v3636 = vunpack.c.l.b16 %v3599
      %v3637 = vunpack.c.l.b16 %v3600
      %v3638 = vunpack.c.l.b16 %v3601
      %v3639 = vunpack.c.l.b16 %v3602
      %v3640 = vunpack.c.l.b16 %v3603
      %v3641 = vunpack.c.l.b16 %v3604
      %v3642 = vunpack.c.l.b16 %v3605
      %v3643 = vunpack.c.l.b16 %v3606
      %v3644 = vunpack.c.l.b16 %v3607
      %v3645 = vunpack.c.l.b16 %v3608
      %v3646 = vunpack.c.l.b16 %v3609
      %v3647 = vunpack.c.l.b16 %v3610
      %v3648 = vunpack.c.l.b16 %v3611
      %v3649 = vunpack.c.l.b16 %v3612
      %v3650 = vpack.c.b16 %v3635, %v3634
      %v3651 = vpack.c.b16 %v3637, %v3636
      %v3652 = vpack.c.b16 %v3639, %v3638
      %v3653 = vpack.c.b16 %v3641, %v3640
      %v3654 = vpack.c.b16 %v3643, %v3642
      %v3655 = vpack.c.b16 %v3645, %v3644
      %v3656 = vpack.c.b16 %v3647, %v3646
      %v3657 = vpack.c.b16 %v3649, %v3648
      %3666 = vmatpush.bf16.msra.mxu0 %v3657
      %3667 = vmatpush.bf16.msra.mxu0 %v3656
      %3668 = vmatpush.bf16.msra.mxu0 %v3655
      %3669 = vmatpush.bf16.msra.mxu0 %v3654
      %3670 = vmatpush.bf16.msra.mxu0 %v3653
      %3671 = vmatpush.bf16.msra.mxu0 %v3652
      %3672 = vmatpush.bf16.msra.mxu0 %v3651
      %3673 = vmatpush.bf16.msra.mxu0 %v3650
      %3674 = vmatmul.bf16.gmra.mxu0 %v3589
      %v3675 = vpop.f32.mrf.mxu0
      %v3676 = vadd.f32 %v3616, %v3675
      %v3677 = vpop.f32.mrf.mxu0
      %v3678 = vadd.f32 %v3616, %v3677
      %3679 = vmatmul.bf16.gmra.mxu0 %v3590
      %v3680 = vpop.f32.mrf.mxu0
      %v3681 = vadd.f32 %v3616, %v3680
      %v3682 = vpop.f32.mrf.mxu0
      %v3683 = vadd.f32 %v3616, %v3682
      %3684 = vmatmul.bf16.gmra.mxu0 %v3591
      %v3685 = vpop.f32.mrf.mxu0
      %v3686 = vadd.f32 %v3616, %v3685
      %v3687 = vpop.f32.mrf.mxu0
      %v3688 = vadd.f32 %v3616, %v3687
      %3689 = vmatmul.bf16.gmra.mxu0 %v3592
      %v3690 = vpop.f32.mrf.mxu0
      %v3691 = vadd.f32 %v3616, %v3690
      %v3692 = vpop.f32.mrf.mxu0
      %v3693 = vadd.f32 %v3616, %v3692
      %3694 = vmatmul.bf16.gmra.mxu0 %v3593
      %v3695 = vpop.f32.mrf.mxu0
      %v3696 = vadd.f32 %v3616, %v3695
      %v3697 = vpop.f32.mrf.mxu0
      %v3698 = vadd.f32 %v3616, %v3697
      %3699 = vmatmul.bf16.gmra.mxu0 %v3594
      %v3700 = vpop.f32.mrf.mxu0
      %v3701 = vadd.f32 %v3616, %v3700
      %v3702 = vpop.f32.mrf.mxu0
      %v3703 = vadd.f32 %v3616, %v3702
      %3704 = vmatmul.bf16.gmra.mxu0 %v3595
      %v3705 = vpop.f32.mrf.mxu0
      %v3706 = vadd.f32 %v3616, %v3705
      %v3707 = vpop.f32.mrf.mxu0
      %v3708 = vadd.f32 %v3616, %v3707
      %3709 = vmatmul.bf16.gmra.mxu0 %v3596
      %v3710 = vpop.f32.mrf.mxu0
      %v3711 = vadd.f32 %v3616, %v3710
      %v3712 = vpop.f32.mrf.mxu0
      %v3713 = vadd.f32 %v3616, %v3712
      %3714 = vdwg.mxu0
      %vm3715 = vcmp.ge.f32.partialorder %v3676, 0.0
      %vm3716 = vcmp.ge.f32.partialorder %v3678, 0.0
      %vm3717 = vcmp.ge.f32.partialorder %v3681, 0.0
      %vm3718 = vcmp.ge.f32.partialorder %v3683, 0.0
      %vm3719 = vcmp.ge.f32.partialorder %v3686, 0.0
      %vm3720 = vcmp.ge.f32.partialorder %v3688, 0.0
      %vm3721 = vcmp.ge.f32.partialorder %v3691, 0.0
      %vm3722 = vcmp.ge.f32.partialorder %v3693, 0.0
      %vm3723 = vcmp.ge.f32.partialorder %v3696, 0.0
      %vm3724 = vcmp.ge.f32.partialorder %v3698, 0.0
      %vm3725 = vcmp.ge.f32.partialorder %v3701, 0.0
      %vm3726 = vcmp.ge.f32.partialorder %v3703, 0.0
      %vm3727 = vcmp.ge.f32.partialorder %v3706, 0.0
      %vm3728 = vcmp.ge.f32.partialorder %v3708, 0.0
      %vm3729 = vcmp.ge.f32.partialorder %v3711, 0.0
      %vm3730 = vcmp.ge.f32.partialorder %v3713, 0.0
      %v3731 = vmul.f32 %v3676, 0.25
      %v3732 = vmul.f32 %v3678, 0.25
      %v3733 = vmul.f32 %v3681, 0.25
      %v3734 = vmul.f32 %v3683, 0.25
      %v3735 = vmul.f32 %v3686, 0.25
      %v3736 = vmul.f32 %v3688, 0.25
      %v3737 = vmul.f32 %v3691, 0.25
      %v3738 = vmul.f32 %v3693, 0.25
      %v3739 = vmul.f32 %v3696, 0.25
      %v3740 = vmul.f32 %v3698, 0.25
      %v3741 = vmul.f32 %v3701, 0.25
      %v3742 = vmul.f32 %v3703, 0.25
      %v3743 = vmul.f32 %v3706, 0.25
      %v3744 = vmul.f32 %v3708, 0.25
      %v3745 = vmul.f32 %v3711, 0.25
      %v3746 = vmul.f32 %v3713, 0.25
      %v3747 = vsel %vm3715, %v3676, %v3731
      %v3748 = vsel %vm3716, %v3678, %v3732
      %v3749 = vsel %vm3717, %v3681, %v3733
      %v3750 = vsel %vm3718, %v3683, %v3734
      %v3751 = vsel %vm3719, %v3686, %v3735
      %v3752 = vsel %vm3720, %v3688, %v3736
      %v3753 = vsel %vm3721, %v3691, %v3737
      %v3754 = vsel %vm3722, %v3693, %v3738
      %v3755 = vsel %vm3723, %v3696, %v3739
      %v3756 = vsel %vm3724, %v3698, %v3740
      %v3757 = vsel %vm3725, %v3701, %v3741
      %v3758 = vsel %vm3726, %v3703, %v3742
      %v3759 = vsel %vm3727, %v3706, %v3743
      %v3760 = vsel %vm3728, %v3708, %v3744
      %v3761 = vsel %vm3729, %v3711, %v3745
      %v3762 = vsel %vm3730, %v3713, %v3746
      %v3763 = vld [vmem:[#allocation2] sm:$0xff]
      %v3764 = vld [vmem:[#allocation2 + $0x8] sm:$0xff]
      %v3765 = vld [vmem:[#allocation2 + $0x10] sm:$0xff]
      %v3766 = vld [vmem:[#allocation2 + $0x18] sm:$0xff]
      %v3767 = vld [vmem:[#allocation2 + $0x20] sm:$0xff]
      %v3768 = vld [vmem:[#allocation2 + $0x28] sm:$0xff]
      %v3769 = vld [vmem:[#allocation2 + $0x30] sm:$0xff]
      %v3770 = vld [vmem:[#allocation2 + $0x38] sm:$0xff]
      %v3771 = vld [vmem:[#allocation2 + $0x40] sm:$0xff]
      %v3772 = vld [vmem:[#allocation2 + $0x48] sm:$0xff]
      %v3773 = vld [vmem:[#allocation2 + $0x50] sm:$0xff]
      %v3774 = vld [vmem:[#allocation2 + $0x58] sm:$0xff]
      %v3775 = vld [vmem:[#allocation2 + $0x60] sm:$0xff]
      %v3776 = vld [vmem:[#allocation2 + $0x68] sm:$0xff]
      %v3777 = vld [vmem:[#allocation2 + $0x70] sm:$0xff]
      %v3778 = vld [vmem:[#allocation2 + $0x78] sm:$0xff]
      %v3779 = vld [vmem:[#allocation3] sm:$0xff]
      %v3780 = vld [vmem:[#allocation3 + $0x8] sm:$0xff]
      %v3781 = vld [vmem:[#allocation3 + $0x10] sm:$0xff]
      %v3782 = vld [vmem:[#allocation3 + $0x18] sm:$0xff]
      %v3783 = vld [vmem:[#allocation3 + $0x20] sm:$0xff]
      %v3784 = vld [vmem:[#allocation3 + $0x28] sm:$0xff]
      %v3785 = vld [vmem:[#allocation3 + $0x30] sm:$0xff]
      %v3786 = vld [vmem:[#allocation3 + $0x38] sm:$0xff]
      %v3787 = vld [vmem:[#allocation3 + $0x40] sm:$0xff]
      %v3788 = vld [vmem:[#allocation3 + $0x48] sm:$0xff]
      %v3789 = vld [vmem:[#allocation3 + $0x50] sm:$0xff]
      %v3790 = vld [vmem:[#allocation3 + $0x58] sm:$0xff]
      %v3791 = vld [vmem:[#allocation3 + $0x60] sm:$0xff]
      %v3792 = vld [vmem:[#allocation3 + $0x68] sm:$0xff]
      %v3793 = vld [vmem:[#allocation3 + $0x70] sm:$0xff]
      %v3794 = vld [vmem:[#allocation3 + $0x78] sm:$0xff]
      %v3795 = vmul.f32 %v3747, %v3763
      %v3796 = vmul.f32 %v3748, %v3764
      %v3797 = vmul.f32 %v3749, %v3765
      %v3798 = vmul.f32 %v3750, %v3766
      %v3799 = vmul.f32 %v3751, %v3767
      %v3800 = vmul.f32 %v3752, %v3768
      %v3801 = vmul.f32 %v3753, %v3769
      %v3802 = vmul.f32 %v3754, %v3770
      %v3803 = vmul.f32 %v3755, %v3771
      %v3804 = vmul.f32 %v3756, %v3772
      %v3805 = vmul.f32 %v3757, %v3773
      %v3806 = vmul.f32 %v3758, %v3774
      %v3807 = vmul.f32 %v3759, %v3775
      %v3808 = vmul.f32 %v3760, %v3776
      %v3809 = vmul.f32 %v3761, %v3777
      %v3810 = vmul.f32 %v3762, %v3778
      %3827 = vrot.lane.b32.xlu0 %v3676, 111
      %v3828 = vpop.permute.xlu0 %3827
      %3829 = vrot.lane.b32.xlu0 %v3678, 111
      %v3830 = vpop.permute.xlu0 %3829
      %3831 = vrot.lane.b32.xlu0 %v3681, 111
      %v3832 = vpop.permute.xlu0 %3831
      %3833 = vrot.lane.b32.xlu0 %v3683, 111
      %v3834 = vpop.permute.xlu0 %3833
      %3835 = vrot.lane.b32.xlu0 %v3686, 111
      %v3836 = vpop.permute.xlu0 %3835
      %3837 = vrot.lane.b32.xlu0 %v3688, 111
      %v3838 = vpop.permute.xlu0 %3837
      %3839 = vrot.lane.b32.xlu0 %v3691, 111
      %v3840 = vpop.permute.xlu0 %3839
      %3841 = vrot.lane.b32.xlu0 %v3693, 111
      %v3842 = vpop.permute.xlu0 %3841
      %3843 = vrot.lane.b32.xlu0 %v3696, 111
      %v3844 = vpop.permute.xlu0 %3843
      %3845 = vrot.lane.b32.xlu0 %v3698, 111
      %v3846 = vpop.permute.xlu0 %3845
      %3847 = vrot.lane.b32.xlu0 %v3701, 111
      %v3848 = vpop.permute.xlu0 %3847
      %3849 = vrot.lane.b32.xlu0 %v3703, 111
      %v3850 = vpop.permute.xlu0 %3849
      %3851 = vrot.lane.b32.xlu0 %v3706, 111
      %v3852 = vpop.permute.xlu0 %3851
      %3853 = vrot.lane.b32.xlu0 %v3708, 111
      %v3854 = vpop.permute.xlu0 %3853
      %3855 = vrot.lane.b32.xlu0 %v3711, 111
      %v3856 = vpop.permute.xlu0 %3855
      %3857 = vrot.lane.b32.xlu0 %v3713, 111
      %v3858 = vpop.permute.xlu0 %3857
      %v3875 = vadd.f32 %v3795, %v3828
      %v3876 = vadd.f32 %v3796, %v3830
      %v3877 = vadd.f32 %v3797, %v3832
      %v3878 = vadd.f32 %v3798, %v3834
      %v3879 = vadd.f32 %v3799, %v3836
      %v3880 = vadd.f32 %v3800, %v3838
      %v3881 = vadd.f32 %v3801, %v3840
      %v3882 = vadd.f32 %v3802, %v3842
      %v3883 = vadd.f32 %v3803, %v3844
      %v3884 = vadd.f32 %v3804, %v3846
      %v3885 = vadd.f32 %v3805, %v3848
      %v3886 = vadd.f32 %v3806, %v3850
      %v3887 = vadd.f32 %v3807, %v3852
      %v3888 = vadd.f32 %v3808, %v3854
      %v3889 = vadd.f32 %v3809, %v3856
      %v3890 = vadd.f32 %v3810, %v3858
      %v3891 = vmul.f32 %v3747, %v3779
      %v3892 = vmul.f32 %v3748, %v3780
      %v3893 = vmul.f32 %v3749, %v3781
      %v3894 = vmul.f32 %v3750, %v3782
      %v3895 = vmul.f32 %v3751, %v3783
      %v3896 = vmul.f32 %v3752, %v3784
      %v3897 = vmul.f32 %v3753, %v3785
      %v3898 = vmul.f32 %v3754, %v3786
      %v3899 = vmul.f32 %v3755, %v3787
      %v3900 = vmul.f32 %v3756, %v3788
      %v3901 = vmul.f32 %v3757, %v3789
      %v3902 = vmul.f32 %v3758, %v3790
      %v3903 = vmul.f32 %v3759, %v3791
      %v3904 = vmul.f32 %v3760, %v3792
      %v3905 = vmul.f32 %v3761, %v3793
      %v3906 = vmul.f32 %v3762, %v3794
      %3907 = vrot.lane.b32.xlu0 %v3676, 94
      %v3908 = vpop.permute.xlu0 %3907
      %3909 = vrot.lane.b32.xlu0 %v3678, 94
      %v3910 = vpop.permute.xlu0 %3909
      %3911 = vrot.lane.b32.xlu0 %v3681, 94
      %v3912 = vpop.permute.xlu0 %3911
      %3913 = vrot.lane.b32.xlu0 %v3683, 94
      %v3914 = vpop.permute.xlu0 %3913
      %3915 = vrot.lane.b32.xlu0 %v3686, 94
      %v3916 = vpop.permute.xlu0 %3915
      %3917 = vrot.lane.b32.xlu0 %v3688, 94
      %v3918 = vpop.permute.xlu0 %3917
      %3919 = vrot.lane.b32.xlu0 %v3691, 94
      %v3920 = vpop.permute.xlu0 %3919
      %3921 = vrot.lane.b32.xlu0 %v3693, 94
      %v3922 = vpop.permute.xlu0 %3921
      %3923 = vrot.lane.b32.xlu0 %v3696, 94
      %v3924 = vpop.permute.xlu0 %3923
      %3925 = vrot.lane.b32.xlu0 %v3698, 94
      %v3926 = vpop.permute.xlu0 %3925
      %3927 = vrot.lane.b32.xlu0 %v3701, 94
      %v3928 = vpop.permute.xlu0 %3927
      %3929 = vrot.lane.b32.xlu0 %v3703, 94
      %v3930 = vpop.permute.xlu0 %3929
      %3931 = vrot.lane.b32.xlu0 %v3706, 94
      %v3932 = vpop.permute.xlu0 %3931
      %3933 = vrot.lane.b32.xlu0 %v3708, 94
      %v3934 = vpop.permute.xlu0 %3933
      %3935 = vrot.lane.b32.xlu0 %v3711, 94
      %v3936 = vpop.permute.xlu0 %3935
      %3937 = vrot.lane.b32.xlu0 %v3713, 94
      %v3938 = vpop.permute.xlu0 %3937
      %v3955 = vadd.f32 %v3891, %v3908
      %v3956 = vadd.f32 %v3892, %v3910
      %v3957 = vadd.f32 %v3893, %v3912
      %v3958 = vadd.f32 %v3894, %v3914
      %v3959 = vadd.f32 %v3895, %v3916
      %v3960 = vadd.f32 %v3896, %v3918
      %v3961 = vadd.f32 %v3897, %v3920
      %v3962 = vadd.f32 %v3898, %v3922
      %v3963 = vadd.f32 %v3899, %v3924
      %v3964 = vadd.f32 %v3900, %v3926
      %v3965 = vadd.f32 %v3901, %v3928
      %v3966 = vadd.f32 %v3902, %v3930
      %v3967 = vadd.f32 %v3903, %v3932
      %v3968 = vadd.f32 %v3904, %v3934
      %v3969 = vadd.f32 %v3905, %v3936
      %v3970 = vadd.f32 %v3906, %v3938
      %v3971 = vmul.f32 %v3875, %v3875
      %v3972 = vmul.f32 %v3876, %v3876
      %v3973 = vmul.f32 %v3877, %v3877
      %v3974 = vmul.f32 %v3878, %v3878
      %v3975 = vmul.f32 %v3879, %v3879
      %v3976 = vmul.f32 %v3880, %v3880
      %v3977 = vmul.f32 %v3881, %v3881
      %v3978 = vmul.f32 %v3882, %v3882
      %v3979 = vmul.f32 %v3883, %v3883
      %v3980 = vmul.f32 %v3884, %v3884
      %v3981 = vmul.f32 %v3885, %v3885
      %v3982 = vmul.f32 %v3886, %v3886
      %v3983 = vmul.f32 %v3887, %v3887
      %v3984 = vmul.f32 %v3888, %v3888
      %v3985 = vmul.f32 %v3889, %v3889
      %v3986 = vmul.f32 %v3890, %v3890
      %v3987 = vmul.f32 %v3955, %v3955
      %v3988 = vmul.f32 %v3956, %v3956
      %v3989 = vmul.f32 %v3957, %v3957
      %v3990 = vmul.f32 %v3958, %v3958
      %v3991 = vmul.f32 %v3959, %v3959
      %v3992 = vmul.f32 %v3960, %v3960
      %v3993 = vmul.f32 %v3961, %v3961
      %v3994 = vmul.f32 %v3962, %v3962
      %v3995 = vmul.f32 %v3963, %v3963
      %v3996 = vmul.f32 %v3964, %v3964
      %v3997 = vmul.f32 %v3965, %v3965
      %v3998 = vmul.f32 %v3966, %v3966
      %v3999 = vmul.f32 %v3967, %v3967
      %v4000 = vmul.f32 %v3968, %v3968
      %v4001 = vmul.f32 %v3969, %v3969
      %v4002 = vmul.f32 %v3970, %v3970
      %v4003 = vadd.f32 %v3971, %v3987
      %v4004 = vadd.f32 %v3972, %v3988
      %v4005 = vadd.f32 %v3973, %v3989
      %v4006 = vadd.f32 %v3974, %v3990
      %v4007 = vadd.f32 %v3975, %v3991
      %v4008 = vadd.f32 %v3976, %v3992
      %v4009 = vadd.f32 %v3977, %v3993
      %v4010 = vadd.f32 %v3978, %v3994
      %v4011 = vadd.f32 %v3979, %v3995
      %v4012 = vadd.f32 %v3980, %v3996
      %v4013 = vadd.f32 %v3981, %v3997
      %v4014 = vadd.f32 %v3982, %v3998
      %v4015 = vadd.f32 %v3983, %v3999
      %v4016 = vadd.f32 %v3984, %v4000
      %v4017 = vadd.f32 %v3985, %v4001
      %v4018 = vadd.f32 %v3986, %v4002
      %v4019 = vadd.f32 %v4003, 1e-12
      %v4020 = vadd.f32 %v4004, 1e-12
      %v4021 = vadd.f32 %v4005, 1e-12
      %v4022 = vadd.f32 %v4006, 1e-12
      %v4023 = vadd.f32 %v4007, 1e-12
      %v4024 = vadd.f32 %v4008, 1e-12
      %v4025 = vadd.f32 %v4009, 1e-12
      %v4026 = vadd.f32 %v4010, 1e-12
      %v4027 = vadd.f32 %v4011, 1e-12
      %v4028 = vadd.f32 %v4012, 1e-12
      %v4029 = vadd.f32 %v4013, 1e-12
      %v4030 = vadd.f32 %v4014, 1e-12
      %v4031 = vadd.f32 %v4015, 1e-12
      %v4032 = vadd.f32 %v4016, 1e-12
      %v4033 = vadd.f32 %v4017, 1e-12
      %v4034 = vadd.f32 %v4018, 1e-12
      %v4035 = vlog2.pop %v4019
      %v4036 = vmul.f32 %v4035, 0.6931472
      %v4037 = vlog2.pop %v4020
      %v4038 = vmul.f32 %v4037, 0.6931472
      %v4039 = vlog2.pop %v4021
      %v4040 = vmul.f32 %v4039, 0.6931472
      %v4041 = vlog2.pop %v4022
      %v4042 = vmul.f32 %v4041, 0.6931472
      %v4043 = vlog2.pop %v4023
      %v4044 = vmul.f32 %v4043, 0.6931472
      %v4045 = vlog2.pop %v4024
      %v4046 = vmul.f32 %v4045, 0.6931472
      %v4047 = vlog2.pop %v4025
      %v4048 = vmul.f32 %v4047, 0.6931472
      %v4049 = vlog2.pop %v4026
      %v4050 = vmul.f32 %v4049, 0.6931472
      %v4051 = vlog2.pop %v4027
      %v4052 = vmul.f32 %v4051, 0.6931472
      %v4053 = vlog2.pop %v4028
      %v4054 = vmul.f32 %v4053, 0.6931472
      %v4055 = vlog2.pop %v4029
      %v4056 = vmul.f32 %v4055, 0.6931472
      %v4057 = vlog2.pop %v4030
      %v4058 = vmul.f32 %v4057, 0.6931472
      %v4059 = vlog2.pop %v4031
      %v4060 = vmul.f32 %v4059, 0.6931472
      %v4061 = vlog2.pop %v4032
      %v4062 = vmul.f32 %v4061, 0.6931472
      %v4063 = vlog2.pop %v4033
      %v4064 = vmul.f32 %v4063, 0.6931472
      %v4065 = vlog2.pop %v4034
      %v4066 = vmul.f32 %v4065, 0.6931472
      %v4067 = vmul.f32 %v4036, 1.1666666
      %v4068 = vmul.f32 %v4038, 1.1666666
      %v4069 = vmul.f32 %v4040, 1.1666666
      %v4070 = vmul.f32 %v4042, 1.1666666
      %v4071 = vmul.f32 %v4044, 1.1666666
      %v4072 = vmul.f32 %v4046, 1.1666666
      %v4073 = vmul.f32 %v4048, 1.1666666
      %v4074 = vmul.f32 %v4050, 1.1666666
      %v4075 = vmul.f32 %v4052, 1.1666666
      %v4076 = vmul.f32 %v4054, 1.1666666
      %v4077 = vmul.f32 %v4056, 1.1666666
      %v4078 = vmul.f32 %v4058, 1.1666666
      %v4079 = vmul.f32 %v4060, 1.1666666
      %v4080 = vmul.f32 %v4062, 1.1666666
      %v4081 = vmul.f32 %v4064, 1.1666666
      %v4082 = vmul.f32 %v4066, 1.1666666
      %v4083 = vmul.f32 %v4067, 1.442695
      %v4084 = vpow.pop %v4083
      %v4085 = vmul.f32 %v4068, 1.442695
      %v4086 = vpow.pop %v4085
      %v4087 = vmul.f32 %v4069, 1.442695
      %v4088 = vpow.pop %v4087
      %v4089 = vmul.f32 %v4070, 1.442695
      %v4090 = vpow.pop %v4089
      %v4091 = vmul.f32 %v4071, 1.442695
      %v4092 = vpow.pop %v4091
      %v4093 = vmul.f32 %v4072, 1.442695
      %v4094 = vpow.pop %v4093
      %v4095 = vmul.f32 %v4073, 1.442695
      %v4096 = vpow.pop %v4095
      %v4097 = vmul.f32 %v4074, 1.442695
      %v4098 = vpow.pop %v4097
      %v4099 = vmul.f32 %v4075, 1.442695
      %v4100 = vpow.pop %v4099
      %v4101 = vmul.f32 %v4076, 1.442695
      %v4102 = vpow.pop %v4101
      %v4103 = vmul.f32 %v4077, 1.442695
      %v4104 = vpow.pop %v4103
      %v4105 = vmul.f32 %v4078, 1.442695
      %v4106 = vpow.pop %v4105
      %v4107 = vmul.f32 %v4079, 1.442695
      %v4108 = vpow.pop %v4107
      %v4109 = vmul.f32 %v4080, 1.442695
      %v4110 = vpow.pop %v4109
      %v4111 = vmul.f32 %v4081, 1.442695
      %v4112 = vpow.pop %v4111
      %v4113 = vmul.f32 %v4082, 1.442695
      %v4114 = vpow.pop %v4113
      %v4115 = vmul.f32 %v3875, %v4084
      %v4116 = vmul.f32 %v3876, %v4086
      %v4117 = vmul.f32 %v3877, %v4088
      %v4118 = vmul.f32 %v3878, %v4090
      %v4119 = vmul.f32 %v3879, %v4092
      %v4120 = vmul.f32 %v3880, %v4094
      %v4121 = vmul.f32 %v3881, %v4096
      %v4122 = vmul.f32 %v3882, %v4098
      %v4123 = vmul.f32 %v3883, %v4100
      %v4124 = vmul.f32 %v3884, %v4102
      %v4125 = vmul.f32 %v3885, %v4104
      %v4126 = vmul.f32 %v3886, %v4106
      %v4127 = vmul.f32 %v3887, %v4108
      %v4128 = vmul.f32 %v3888, %v4110
      %v4129 = vmul.f32 %v3889, %v4112
      %v4130 = vmul.f32 %v3890, %v4114
      %v4131 = vmul.f32 %v3955, %v4084
      %v4132 = vmul.f32 %v3956, %v4086
      %v4133 = vmul.f32 %v3957, %v4088
      %v4134 = vmul.f32 %v3958, %v4090
      %v4135 = vmul.f32 %v3959, %v4092
      %v4136 = vmul.f32 %v3960, %v4094
      %v4137 = vmul.f32 %v3961, %v4096
      %v4138 = vmul.f32 %v3962, %v4098
      %v4139 = vmul.f32 %v3963, %v4100
      %v4140 = vmul.f32 %v3964, %v4102
      %v4141 = vmul.f32 %v3965, %v4104
      %v4142 = vmul.f32 %v3966, %v4106
      %v4143 = vmul.f32 %v3967, %v4108
      %v4144 = vmul.f32 %v3968, %v4110
      %v4145 = vmul.f32 %v3969, %v4112
      %v4146 = vmul.f32 %v3970, %v4114
      %4163 = vrot.lane.b32.xlu0 %v4131, 17
      %v4164 = vpop.permute.xlu0 %4163
      %4165 = vrot.lane.b32.xlu0 %v4132, 17
      %v4166 = vpop.permute.xlu0 %4165
      %4167 = vrot.lane.b32.xlu0 %v4133, 17
      %v4168 = vpop.permute.xlu0 %4167
      %4169 = vrot.lane.b32.xlu0 %v4134, 17
      %v4170 = vpop.permute.xlu0 %4169
      %4171 = vrot.lane.b32.xlu0 %v4135, 17
      %v4172 = vpop.permute.xlu0 %4171
      %4173 = vrot.lane.b32.xlu0 %v4136, 17
      %v4174 = vpop.permute.xlu0 %4173
      %4175 = vrot.lane.b32.xlu0 %v4137, 17
      %v4176 = vpop.permute.xlu0 %4175
      %4177 = vrot.lane.b32.xlu0 %v4138, 17
      %v4178 = vpop.permute.xlu0 %4177
      %4179 = vrot.lane.b32.xlu0 %v4139, 17
      %v4180 = vpop.permute.xlu0 %4179
      %4181 = vrot.lane.b32.xlu0 %v4140, 17
      %v4182 = vpop.permute.xlu0 %4181
      %4183 = vrot.lane.b32.xlu0 %v4141, 17
      %v4184 = vpop.permute.xlu0 %4183
      %4185 = vrot.lane.b32.xlu0 %v4142, 17
      %v4186 = vpop.permute.xlu0 %4185
      %4187 = vrot.lane.b32.xlu0 %v4143, 17
      %v4188 = vpop.permute.xlu0 %4187
      %4189 = vrot.lane.b32.xlu0 %v4144, 17
      %v4190 = vpop.permute.xlu0 %4189
      %4191 = vrot.lane.b32.xlu0 %v4145, 17
      %v4192 = vpop.permute.xlu0 %4191
      %4193 = vrot.lane.b32.xlu0 %v4146, 17
      %v4194 = vpop.permute.xlu0 %4193
      %v4211 = vsel %vm925, %v4115, %v4164
      %v4212 = vsel %vm925, %v4116, %v4166
      %v4213 = vsel %vm925, %v4117, %v4168
      %v4214 = vsel %vm925, %v4118, %v4170
      %v4215 = vsel %vm925, %v4119, %v4172
      %v4216 = vsel %vm925, %v4120, %v4174
      %v4217 = vsel %vm925, %v4121, %v4176
      %v4218 = vsel %vm925, %v4122, %v4178
      %v4219 = vsel %vm925, %v4123, %v4180
      %v4220 = vsel %vm925, %v4124, %v4182
      %v4221 = vsel %vm925, %v4125, %v4184
      %v4222 = vsel %vm925, %v4126, %v4186
      %v4223 = vsel %vm925, %v4127, %v4188
      %v4224 = vsel %vm925, %v4128, %v4190
      %v4225 = vsel %vm925, %v4129, %v4192
      %v4226 = vsel %vm925, %v4130, %v4194
      %v4227 = vpack.c.bf16 %v4212, %v4211
      %v4228 = vpack.c.bf16 %v4214, %v4213
      %v4229 = vpack.c.bf16 %v4216, %v4215
      %v4230 = vpack.c.bf16 %v4218, %v4217
      %v4231 = vpack.c.bf16 %v4220, %v4219
      %v4232 = vpack.c.bf16 %v4222, %v4221
      %v4233 = vpack.c.bf16 %v4224, %v4223
      %v4234 = vpack.c.bf16 %v4226, %v4225
      %v4235 = vld [vmem:[%s6] sm:$0xf]
      %v4236 = vld [vmem:[%s6 + $0x4] sm:$0xf]
      %v4237 = vld [vmem:[%s6 + $0x8] sm:$0xf]
      %v4238 = vld [vmem:[%s6 + $0xc] sm:$0xf]
      %v4239 = vld [vmem:[%s6 + $0x10] sm:$0x1]
      %v4245 = vunpack.c.l.b16 %v4235
      %v4246 = vunpack.c.l.b16 %v4236
      %v4247 = vunpack.c.l.b16 %v4237
      %v4248 = vunpack.c.l.b16 %v4238
      %v4249 = vunpack.c.l.b16 %v4239
      %v4250 = vpack.c.b16 %v4246, %v4245
      %v4251 = vpack.c.b16 %v4248, %v4247
      %v4252 = vpack.c.b16 %v4249, %v4249
      %v4256 = vsel %vm1150, %v4227, 0
      %v4259 = vsel %vm1150, %v4228, 0
      %v4262 = vsel %vm1150, %v4229, 0
      %v4265 = vsel %vm1150, %v4230, 0
      %v4268 = vsel %vm1150, %v4231, 0
      %v4271 = vsel %vm1150, %v4232, 0
      %v4274 = vsel %vm1150, %v4233, 0
      %v4277 = vsel %vm1150, %v4234, 0
      %v4280 = vsel %vm1232, %v4252, 0
      %4282 = vmatpush.bf16.msra.mxu0 0
      %4283 = vmatpush.bf16.msra.mxu0 0
      %4284 = vmatpush.bf16.msra.mxu0 0
      %4285 = vmatpush.bf16.msra.mxu0 0
      %4286 = vmatpush.bf16.msra.mxu0 0
      %4287 = vmatpush.bf16.msra.mxu0 %v4280
      %4288 = vmatpush.bf16.msra.mxu0 %v4251
      %4289 = vmatpush.bf16.msra.mxu0 %v4250
      %4290 = vmatmul.bf16.gmra.mxu0 %v4256
      %v4291 = vpop.f32.mrf.mxu0
      %v4292 = vadd.f32 0.0, %v4291
      %v4293 = vpop.f32.mrf.mxu0
      %v4294 = vadd.f32 0.0, %v4293
      %4295 = vmatmul.bf16.gmra.mxu0 %v4259
      %v4296 = vpop.f32.mrf.mxu0
      %v4297 = vadd.f32 0.0, %v4296
      %v4298 = vpop.f32.mrf.mxu0
      %v4299 = vadd.f32 0.0, %v4298
      %4300 = vmatmul.bf16.gmra.mxu0 %v4262
      %v4301 = vpop.f32.mrf.mxu0
      %v4302 = vadd.f32 0.0, %v4301
      %v4303 = vpop.f32.mrf.mxu0
      %v4304 = vadd.f32 0.0, %v4303
      %4305 = vmatmul.bf16.gmra.mxu0 %v4265
      %v4306 = vpop.f32.mrf.mxu0
      %v4307 = vadd.f32 0.0, %v4306
      %v4308 = vpop.f32.mrf.mxu0
      %v4309 = vadd.f32 0.0, %v4308
      %4310 = vmatmul.bf16.gmra.mxu0 %v4268
      %v4311 = vpop.f32.mrf.mxu0
      %v4312 = vadd.f32 0.0, %v4311
      %v4313 = vpop.f32.mrf.mxu0
      %v4314 = vadd.f32 0.0, %v4313
      %4315 = vmatmul.bf16.gmra.mxu0 %v4271
      %v4316 = vpop.f32.mrf.mxu0
      %v4317 = vadd.f32 0.0, %v4316
      %v4318 = vpop.f32.mrf.mxu0
      %v4319 = vadd.f32 0.0, %v4318
      %4320 = vmatmul.bf16.gmra.mxu0 %v4274
      %v4321 = vpop.f32.mrf.mxu0
      %v4322 = vadd.f32 0.0, %v4321
      %v4323 = vpop.f32.mrf.mxu0
      %v4324 = vadd.f32 0.0, %v4323
      %4325 = vmatmul.bf16.gmra.mxu0 %v4277
      %v4326 = vpop.f32.mrf.mxu0
      %v4327 = vadd.f32 0.0, %v4326
      %v4328 = vpop.f32.mrf.mxu0
      %v4329 = vadd.f32 0.0, %v4328
      %4330 = vdwg.mxu0
      %v4331 = vrot.slane %v4292, 1
      %v4332 = vrot.slane %v4294, 1
      %v4333 = vrot.slane %v4297, 1
      %v4334 = vrot.slane %v4299, 1
      %v4335 = vrot.slane %v4302, 1
      %v4336 = vrot.slane %v4304, 1
      %v4337 = vrot.slane %v4307, 1
      %v4338 = vrot.slane %v4309, 1
      %v4339 = vrot.slane %v4312, 1
      %v4340 = vrot.slane %v4314, 1
      %v4341 = vrot.slane %v4317, 1
      %v4342 = vrot.slane %v4319, 1
      %v4343 = vrot.slane %v4322, 1
      %v4344 = vrot.slane %v4324, 1
      %v4345 = vrot.slane %v4327, 1
      %v4346 = vrot.slane %v4329, 1
      %v4347 = vlaneseq
      %v4348 = vshrl.u32 %v4347, 7
      %vm4349 = vcmp.lt.s32.totalorder %v4348, 7
      %v4350 = vsel %vm4349, %v4345, %v4346
      %v4351 = vsel %vm4349, %v4344, %v4345
      %v4352 = vsel %vm4349, %v4343, %v4344
      %v4353 = vsel %vm4349, %v4342, %v4343
      %v4354 = vsel %vm4349, %v4341, %v4342
      %v4355 = vsel %vm4349, %v4340, %v4341
      %v4356 = vsel %vm4349, %v4339, %v4340
      %v4357 = vsel %vm4349, %v4338, %v4339
      %v4358 = vsel %vm4349, %v4337, %v4338
      %v4359 = vsel %vm4349, %v4336, %v4337
      %v4360 = vsel %vm4349, %v4335, %v4336
      %v4361 = vsel %vm4349, %v4334, %v4335
      %v4362 = vsel %vm4349, %v4333, %v4334
      %v4363 = vsel %vm4349, %v4332, %v4333
      %v4364 = vsel %vm4349, %v4331, %v4332
      %v4365 = vsel %vm4349, %v4346, %v4331
      %4382 = vrot.lane.b32.xlu0 %v4292, 112
      %v4383 = vpop.permute.xlu0 %4382
      %4384 = vrot.lane.b32.xlu0 %v4294, 112
      %v4385 = vpop.permute.xlu0 %4384
      %4386 = vrot.lane.b32.xlu0 %v4297, 112
      %v4387 = vpop.permute.xlu0 %4386
      %4388 = vrot.lane.b32.xlu0 %v4299, 112
      %v4389 = vpop.permute.xlu0 %4388
      %4390 = vrot.lane.b32.xlu0 %v4302, 112
      %v4391 = vpop.permute.xlu0 %4390
      %4392 = vrot.lane.b32.xlu0 %v4304, 112
      %v4393 = vpop.permute.xlu0 %4392
      %4394 = vrot.lane.b32.xlu0 %v4307, 112
      %v4395 = vpop.permute.xlu0 %4394
      %4396 = vrot.lane.b32.xlu0 %v4309, 112
      %v4397 = vpop.permute.xlu0 %4396
      %4398 = vrot.lane.b32.xlu0 %v4312, 112
      %v4399 = vpop.permute.xlu0 %4398
      %4400 = vrot.lane.b32.xlu0 %v4314, 112
      %v4401 = vpop.permute.xlu0 %4400
      %4402 = vrot.lane.b32.xlu0 %v4317, 112
      %v4403 = vpop.permute.xlu0 %4402
      %4404 = vrot.lane.b32.xlu0 %v4319, 112
      %v4405 = vpop.permute.xlu0 %4404
      %4406 = vrot.lane.b32.xlu0 %v4322, 112
      %v4407 = vpop.permute.xlu0 %4406
      %4408 = vrot.lane.b32.xlu0 %v4324, 112
      %v4409 = vpop.permute.xlu0 %4408
      %4410 = vrot.lane.b32.xlu0 %v4327, 112
      %v4411 = vpop.permute.xlu0 %4410
      %4412 = vrot.lane.b32.xlu0 %v4329, 112
      %v4413 = vpop.permute.xlu0 %4412
      %v4430 = vadd.f32 %v4364, %v4383
      %v4431 = vadd.f32 %v4363, %v4385
      %v4432 = vadd.f32 %v4362, %v4387
      %v4433 = vadd.f32 %v4361, %v4389
      %v4434 = vadd.f32 %v4360, %v4391
      %v4435 = vadd.f32 %v4359, %v4393
      %v4436 = vadd.f32 %v4358, %v4395
      %v4437 = vadd.f32 %v4357, %v4397
      %v4438 = vadd.f32 %v4356, %v4399
      %v4439 = vadd.f32 %v4355, %v4401
      %v4440 = vadd.f32 %v4354, %v4403
      %v4441 = vadd.f32 %v4353, %v4405
      %v4442 = vadd.f32 %v4352, %v4407
      %v4443 = vadd.f32 %v4351, %v4409
      %v4444 = vadd.f32 %v4350, %v4411
      %v4445 = vadd.f32 %v4365, %v4413
      %v4446 = vld [vmem:[%s8] sm:$0xff]
      %v4447 = vld [vmem:[%s8 + $0x8] sm:$0xff]
      %v4448 = vld [vmem:[%s8 + $0x10] sm:$0xff]
      %v4449 = vld [vmem:[%s8 + $0x18] sm:$0xff]
      %v4450 = vld [vmem:[%s8 + $0x20] sm:$0xff]
      %v4451 = vld [vmem:[%s8 + $0x28] sm:$0xff]
      %v4452 = vld [vmem:[%s8 + $0x30] sm:$0xff]
      %v4453 = vld [vmem:[%s8 + $0x38] sm:$0xff]
      %v4454 = vld [vmem:[%s8 + $0x40] sm:$0xff]
      %v4455 = vld [vmem:[%s8 + $0x48] sm:$0xff]
      %v4456 = vld [vmem:[%s8 + $0x50] sm:$0xff]
      %v4457 = vld [vmem:[%s8 + $0x58] sm:$0xff]
      %v4458 = vld [vmem:[%s8 + $0x60] sm:$0xff]
      %v4459 = vld [vmem:[%s8 + $0x68] sm:$0xff]
      %v4460 = vld [vmem:[%s8 + $0x70] sm:$0xff]
      %v4461 = vld [vmem:[%s8 + $0x78] sm:$0xff]
      %v4462 = vmul.f32 %v4430, %v4446
      %v4463 = vmul.f32 %v4431, %v4447
      %v4464 = vmul.f32 %v4432, %v4448
      %v4465 = vmul.f32 %v4433, %v4449
      %v4466 = vmul.f32 %v4434, %v4450
      %v4467 = vmul.f32 %v4435, %v4451
      %v4468 = vmul.f32 %v4436, %v4452
      %v4469 = vmul.f32 %v4437, %v4453
      %v4470 = vmul.f32 %v4438, %v4454
      %v4471 = vmul.f32 %v4439, %v4455
      %v4472 = vmul.f32 %v4440, %v4456
      %v4473 = vmul.f32 %v4441, %v4457
      %v4474 = vmul.f32 %v4442, %v4458
      %v4475 = vmul.f32 %v4443, %v4459
      %v4476 = vmul.f32 %v4444, %v4460
      %v4477 = vmul.f32 %v4445, %v4461
      %v4478 = vmul.f32 %v4462, %v465
      %v4479 = vmul.f32 %v4463, %v465
      %v4480 = vmul.f32 %v4464, %v465
      %v4481 = vmul.f32 %v4465, %v465
      %v4482 = vmul.f32 %v4466, %v465
      %v4483 = vmul.f32 %v4467, %v465
      %v4484 = vmul.f32 %v4468, %v465
      %v4485 = vmul.f32 %v4469, %v465
      %v4486 = vmul.f32 %v4470, %v465
      %v4487 = vmul.f32 %v4471, %v465
      %v4488 = vmul.f32 %v4472, %v465
      %v4489 = vmul.f32 %v4473, %v465
      %v4490 = vmul.f32 %v4474, %v465
      %v4491 = vmul.f32 %v4475, %v465
      %v4492 = vmul.f32 %v4476, %v465
      %v4493 = vmul.f32 %v4477, %v465
      %v4494 = vmax.f32 %v4478, -1.0
      %v4495 = vmax.f32 %v4479, -1.0
      %v4496 = vmax.f32 %v4480, -1.0
      %v4497 = vmax.f32 %v4481, -1.0
      %v4498 = vmax.f32 %v4482, -1.0
      %v4499 = vmax.f32 %v4483, -1.0
      %v4500 = vmax.f32 %v4484, -1.0
      %v4501 = vmax.f32 %v4485, -1.0
      %v4502 = vmax.f32 %v4486, -1.0
      %v4503 = vmax.f32 %v4487, -1.0
      %v4504 = vmax.f32 %v4488, -1.0
      %v4505 = vmax.f32 %v4489, -1.0
      %v4506 = vmax.f32 %v4490, -1.0
      %v4507 = vmax.f32 %v4491, -1.0
      %v4508 = vmax.f32 %v4492, -1.0
      %v4509 = vmax.f32 %v4493, -1.0
      %v4510 = vmin.f32 %v4494, 1.0
      %v4511 = vmin.f32 %v4495, 1.0
      %v4512 = vmin.f32 %v4496, 1.0
      %v4513 = vmin.f32 %v4497, 1.0
      %v4514 = vmin.f32 %v4498, 1.0
      %v4515 = vmin.f32 %v4499, 1.0
      %v4516 = vmin.f32 %v4500, 1.0
      %v4517 = vmin.f32 %v4501, 1.0
      %v4518 = vmin.f32 %v4502, 1.0
      %v4519 = vmin.f32 %v4503, 1.0
      %v4520 = vmin.f32 %v4504, 1.0
      %v4521 = vmin.f32 %v4505, 1.0
      %v4522 = vmin.f32 %v4506, 1.0
      %v4523 = vmin.f32 %v4507, 1.0
      %v4524 = vmin.f32 %v4508, 1.0
      %v4525 = vmin.f32 %v4509, 1.0
      %v4526 = vmul.f32 %v4510, 32767.0
      %v4527 = vmul.f32 %v4511, 32767.0
      %v4528 = vmul.f32 %v4512, 32767.0
      %v4529 = vmul.f32 %v4513, 32767.0
      %v4530 = vmul.f32 %v4514, 32767.0
      %v4531 = vmul.f32 %v4515, 32767.0
      %v4532 = vmul.f32 %v4516, 32767.0
      %v4533 = vmul.f32 %v4517, 32767.0
      %v4534 = vmul.f32 %v4518, 32767.0
      %v4535 = vmul.f32 %v4519, 32767.0
      %v4536 = vmul.f32 %v4520, 32767.0
      %v4537 = vmul.f32 %v4521, 32767.0
      %v4538 = vmul.f32 %v4522, 32767.0
      %v4539 = vmul.f32 %v4523, 32767.0
      %v4540 = vmul.f32 %v4524, 32767.0
      %v4541 = vmul.f32 %v4525, 32767.0
      %vm4542 = vcmask 130048
      %4543 = vst.msk [vmem:[%s332] sm:$0xff] %vm4542, %v4526
      %4544 = vst.msk [vmem:[%s332 + $0x8] sm:$0xff] %vm4542, %v4527
      %4545 = vst.msk [vmem:[%s332 + $0x10] sm:$0xff] %vm4542, %v4528
      %4546 = vst.msk [vmem:[%s332 + $0x18] sm:$0xff] %vm4542, %v4529
      %4547 = vst.msk [vmem:[%s332 + $0x20] sm:$0xff] %vm4542, %v4530
      %4548 = vst.msk [vmem:[%s332 + $0x28] sm:$0xff] %vm4542, %v4531
      %4549 = vst.msk [vmem:[%s332 + $0x30] sm:$0xff] %vm4542, %v4532
      %4550 = vst.msk [vmem:[%s332 + $0x38] sm:$0xff] %vm4542, %v4533
      %4551 = vst.msk [vmem:[%s332 + $0x40] sm:$0xff] %vm4542, %v4534
      %4552 = vst.msk [vmem:[%s332 + $0x48] sm:$0xff] %vm4542, %v4535
      %4553 = vst.msk [vmem:[%s332 + $0x50] sm:$0xff] %vm4542, %v4536
      %4554 = vst.msk [vmem:[%s332 + $0x58] sm:$0xff] %vm4542, %v4537
      %4555 = vst.msk [vmem:[%s332 + $0x60] sm:$0xff] %vm4542, %v4538
      %4556 = vst.msk [vmem:[%s332 + $0x68] sm:$0xff] %vm4542, %v4539
      %4557 = vst.msk [vmem:[%s332 + $0x70] sm:$0xff] %vm4542, %v4540
      %4558 = vst.msk [vmem:[%s332 + $0x78] sm:$0xff] %vm4542, %v4541
      %p4559 = scmp.lt.s32.totalorder %s20, 3
      %s4560 = scalar_select %p4559, %s20, 3
      %s4561 = smul.addr %s4560, 16
      %s4562 = smul.addr %s4561, 8
      %s4563 = scalar_lea.vmem %s9, %s4562
      // Predicated region
      $region57: #{mossformer_se_forward.1} parent=55 // pred_check
        %p4564 = pneg %p232
      $region58: #{mossformer_se_forward.1} parent=55 // pred_check_branch
        %4566 = sbr.rel (%p4564) target = $region60
      $region59: #{mossformer_se_forward.1} parent=55 // pred_region
        _
      $region60: #{mossformer_se_forward.1} parent=55 // pred_fallthru
        _
    $region56: #{mossformer_se_forward.1} parent=5 // pred_fallthru
      _
    %p4567 = scmp.le.s32.totalorder 2, %s15
    // Predicated region
    $region61: #{mossformer_se_forward.1} parent=5 // pred_check
      %p4568 = pneg %p4567
    $region62: #{mossformer_se_forward.1} parent=5 // pred_check_branch
      %4570 = sbr.rel (%p4568) target = $region64
    $region63: #{mossformer_se_forward.1} parent=5 // pred_region
      %s4571 = ssub.s32 %s15, 2
      // Predicated region
      $region65: #{mossformer_se_forward.1} parent=63 // pred_check
        %p4572 = pneg %p238
      $region66: #{mossformer_se_forward.1} parent=63 // pred_check_branch
        %4574 = sbr.rel (%p4572) target = $region68
      $region67: #{mossformer_se_forward.1} parent=63 // pred_region
        %p4575 = scmp.lt.s32.totalorder %s21, 3
        %s4576 = scalar_select %p4575, %s21, 3
        %s4577 = smul.addr %s4576, 16
        %s4578 = smul.addr %s4577, 8
        %s4579 = scalar_lea.vmem %s9, %s4578
      $region68: #{mossformer_se_forward.1} parent=63 // pred_fallthru
        _
    $region64: #{mossformer_se_forward.1} parent=5 // pred_fallthru
      _
  $region6: #{mossformer_se_forward.1} parent=0 // loop_footer
    %s19 = sadd.s32 1, %s15
  $region7: #{mossformer_se_forward.1} parent=0 // loop_footer_branch
    %14 = sbr.rel target = $region3
  $region8: #{mossformer_se_forward.1} parent=0 // loop_exit
    _

</llo_original>
